<compile_context>
chip_gen: v6e
topology: v6e:2x2x1
jax: 0.10.0
libtpu: 0.0.40
codegen_flags: <defaults>
</compile_context>

<pallas_src>
import jax
import jax.numpy as jnp
from jax.experimental import pallas as pl
from jax.experimental.pallas import tpu as pltpu


def mlp_kernel(x_ref, w1_ref, b1_ref, w2_ref, b2_ref, w3_ref, b3_ref,
               w4_ref, b4_ref, o_ref):
    """One batch tile: [tb, F] -> lane-dense [1, tb] output row."""
    # Layer 1: bf16 x bf16 MXU matmul, f32 accumulation; bias + ReLU in f32.
    # (If the caller already delivers bf16 x, the astype is a no-op.)
    h = jnp.dot(x_ref[...].astype(jnp.bfloat16), w1_ref[...],
                preferred_element_type=jnp.float32)
    h = jnp.maximum(h + b1_ref[...], 0.0)
    # TODO(synk): Dropout(p1)/Dropout(p2) are identity in eval mode; training
    # would need pltpu.prng_seed / pltpu.prng_random_bits based masking.

    # Layer 2.
    h = jnp.dot(h.astype(jnp.bfloat16), w2_ref[...],
                preferred_element_type=jnp.float32)
    h = jnp.maximum(h + b2_ref[...], 0.0)

    # Layer 3.
    h = jnp.dot(h.astype(jnp.bfloat16), w3_ref[...],
                preferred_element_type=jnp.float32)
    h = jnp.maximum(h + b3_ref[...], 0.0)

    # Layer 4: Linear(h3 -> 1).  N=1 on the MXU wastes 255/256 result lanes,
    # so do a VPU multiply + XLU cross-lane reduce instead.
    z = jnp.sum(h * w4_ref[...], axis=-1, keepdims=True) + b4_ref[...]

    # Sigmoid: exp and reciprocal both on the EUP slot.
    s = pl.reciprocal(1.0 + jnp.exp(-z), approx=True)

    # Lane-dense store: write the (tb, 1) column as a (1, tb) row so the
    # output store is an unmasked vst for large tiles.
    o_ref[...] = s.reshape(1, -1)


def _pick_tile(bp):
    """Batch-tile heuristic (per-generation, per the perf review)."""
    try:
        kind = jax.devices()[0].device_kind.lower()
    except Exception:
        kind = ""
    # v5e: keep 2x double-buffered x tiles + resident weights under the
    # 16 MiB default scoped-VMEM limit -> tb <= 512 (512*2048*4 = 4 MiB/buf).
    # v6e / v7x: tb = 1024 fits the 32 MiB default scoped limit comfortably.
    tb_max = 512 if "v5" in kind else 1024
    tb = min(bp, tb_max)
    # v7x has 2 TensorCores: give the "parallel" batch axis >= 2 tiles when we
    # can still keep lane-aligned (multiple-of-128) tiles.
    if "v7" in kind and tb == bp and bp >= 256 and bp % 256 == 0:
        tb = bp // 2
    return tb


def network_forward(x, params, *, tb=None):
    """Fused MLP forward.  x: [B, input_size] (f32 or bf16) -> [B, 1] f32."""
    w1, b1, w2, b2, w3, b3, w4, b4 = params
    B, F = x.shape
    h1, h2, h3 = w1.shape[1], w2.shape[1], w3.shape[1]

    bp = ((B + 7) // 8) * 8                 # sublane-align the batch
    if tb is None:
        tb = _pick_tile(bp)
    bp = ((bp + tb - 1) // tb) * tb         # pad batch to a whole number of tiles
    if bp != B:
        x = jnp.pad(x, ((0, bp - B), (0, 0)))
    grid = (bp // tb,)

    # Advisory cost for the XLA scheduler (memory-bound -> accurate bytes matter).
    cost = pl.CostEstimate(
        flops=2 * bp * (F * h1 + h1 * h2 + h2 * h3 + h3),
        transcendentals=2 * bp,             # exp + reciprocal per output element
        bytes_accessed=(bp * F * x.dtype.itemsize
                        + sum(p.size * p.dtype.itemsize for p in params)
                        + bp * 4),
    )

    def run(single_buffer_weights):
        def resident(a):
            # Constant index map -> weight stays VMEM-resident across all batch
            # tiles (DMA'd once).  Single-buffer it: multi-buffering a constant
            # block buys nothing and wastes VMEM headroom.
            if single_buffer_weights:
                return pl.BlockSpec(a.shape, lambda i: (0, 0),
                                    pipeline_mode=pl.Buffered(1))
            return pl.BlockSpec(a.shape, lambda i: (0, 0))

        return pl.pallas_call(
            mlp_kernel,
            out_shape=jax.ShapeDtypeStruct((1, bp), jnp.float32),
            grid_spec=pltpu.PrefetchScalarGridSpec(
                num_scalar_prefetch=0,
                grid=grid,
                in_specs=[pl.BlockSpec((tb, F), lambda i: (i, 0)),
                          resident(w1), resident(b1),
                          resident(w2), resident(b2),
                          resident(w3), resident(b3),
                          resident(w4), resident(b4)],
                out_specs=pl.BlockSpec((1, tb), lambda i: (0, i)),
            ),
            compiler_params=pltpu.CompilerParams(
                dimension_semantics=("parallel",)),
            cost_estimate=cost,
        )(x, w1, b1, w2, b2, w3, b3, w4, b4)

    try:
        out = run(True)
    except Exception:
        # pipeline_mode / pl.Buffered(1) unsupported in this JAX build: fall
        # back to default double-buffered resident weights (same numerics).
        out = run(False)

    return out.reshape(-1, 1)[:B]


def init_params(key, input_size, h1, h2, h3):
    """PyTorch-style uniform(-1/sqrt(fan_in), 1/sqrt(fan_in)) init.

    w1/w2/w3 are stored as bf16 ([in, out]) to halve the dominant HBM traffic;
    w4 is a tiny f32 row vector [1, h3]; biases are f32 [1, out].
    """
    dims = [(input_size, h1), (h1, h2), (h2, h3), (h3, 1)]
    keys = jax.random.split(key, 2 * len(dims))
    params = []
    for i, (fin, fout) in enumerate(dims):
        bound = 1.0 / jnp.sqrt(fin)
        w = jax.random.uniform(keys[2 * i], (fin, fout), jnp.float32, -bound, bound)
        b = jax.random.uniform(keys[2 * i + 1], (1, fout), jnp.float32, -bound, bound)
        if i < 3:
            w = w.astype(jnp.bfloat16)          # big weights in bf16
        else:
            w = w.reshape(1, fin)               # final layer as f32 row vector
        params += [w, b]
    return tuple(params)


if __name__ == "__main__":
    # Shapes consistent with the module: input_size=2048 (default),
    # hidden_dim1=128, hidden_dim2=64, hidden_dim3=32; small batch=16.
    input_size, h1, h2, h3 = 2048, 128, 64, 32
    batch = 16

    key = jax.random.PRNGKey(0)
    kx, kp = jax.random.split(key)
    x = jax.random.normal(kx, (batch, input_size), dtype=jnp.float32)
    params = init_params(kp, input_size, h1, h2, h3)

    out = network_forward(x, params)
    jax.block_until_ready(out)

    # Plain-JAX reference of the same forward pass (same bf16 weights,
    # same bf16 MXU inputs, f32 accumulation, exact sigmoid).
    w1, b1, w2, b2, w3, b3, w4, b4 = params
    h = jnp.dot(x.astype(jnp.bfloat16), w1, preferred_element_type=jnp.float32)
    h = jnp.maximum(h + b1, 0.0)
    h = jnp.dot(h.astype(jnp.bfloat16), w2, preferred_element_type=jnp.float32)
    h = jnp.maximum(h + b2, 0.0)
    h = jnp.dot(h.astype(jnp.bfloat16), w3, preferred_element_type=jnp.float32)
    h = jnp.maximum(h + b3, 0.0)
    z = jnp.sum(h * w4, axis=-1, keepdims=True) + b4
    ref = jax.nn.sigmoid(z)

    assert out.shape == (batch, 1)
    assert jnp.allclose(out, ref, atol=2e-3, rtol=2e-3), (
        float(jnp.max(jnp.abs(out - ref))))

    print("KERNEL_OK")
</pallas_src>

<mosaic_0001>
module attributes {stable_mosaic.version = 11 : i64} {
  func.func @mlp_kernel(%arg0: i32, %arg1: memref<16x2048xf32, #tpu.memory_space<vmem>>, %arg2: memref<2048x128xbf16, #tpu.memory_space<vmem>>, %arg3: memref<1x128xf32, #tpu.memory_space<vmem>>, %arg4: memref<128x64xbf16, #tpu.memory_space<vmem>>, %arg5: memref<1x64xf32, #tpu.memory_space<vmem>>, %arg6: memref<64x32xbf16, #tpu.memory_space<vmem>>, %arg7: memref<1x32xf32, #tpu.memory_space<vmem>>, %arg8: memref<1x32xf32, #tpu.memory_space<vmem>>, %arg9: memref<1x1xf32, #tpu.memory_space<vmem>>, %arg10: memref<1x16xf32, #tpu.memory_space<vmem>>) attributes {dimension_semantics = [#tpu.dimension_semantics<parallel>], iteration_bounds = array<i64: 1>, scalar_prefetch = 0 : i64, scratch_operands = 0 : i64, tpu.core_type = #tpu.core_type<tc>, window_params = [{transform_indices = @transform_0, window_bounds = array<i64: 16, 2048>}, {pipeline_mode = #tpu.pipeline_mode<synchronous>, transform_indices = @transform_1, window_bounds = array<i64: 2048, 128>}, {pipeline_mode = #tpu.pipeline_mode<synchronous>, transform_indices = @transform_2, window_bounds = array<i64: 1, 128>}, {pipeline_mode = #tpu.pipeline_mode<synchronous>, transform_indices = @transform_3, window_bounds = array<i64: 128, 64>}, {pipeline_mode = #tpu.pipeline_mode<synchronous>, transform_indices = @transform_4, window_bounds = array<i64: 1, 64>}, {pipeline_mode = #tpu.pipeline_mode<synchronous>, transform_indices = @transform_5, window_bounds = array<i64: 64, 32>}, {pipeline_mode = #tpu.pipeline_mode<synchronous>, transform_indices = @transform_6, window_bounds = array<i64: 1, 32>}, {pipeline_mode = #tpu.pipeline_mode<synchronous>, transform_indices = @transform_7, window_bounds = array<i64: 1, 32>}, {pipeline_mode = #tpu.pipeline_mode<synchronous>, transform_indices = @transform_8, window_bounds = array<i64: 1, 1>}, {transform_indices = @transform_9, window_bounds = array<i64: 1, 16>}]} {
    %c0 = arith.constant 0 : index
    %c0_0 = arith.constant 0 : index
    %0 = vector.load %arg1[%c0, %c0_0] : memref<16x2048xf32, #tpu.memory_space<vmem>>, vector<16x2048xf32>
    %1 = arith.truncf %0 : vector<16x2048xf32> to vector<16x2048xbf16>
    %c0_1 = arith.constant 0 : index
    %c0_2 = arith.constant 0 : index
    %2 = vector.load %arg2[%c0_1, %c0_2] : memref<2048x128xbf16, #tpu.memory_space<vmem>>, vector<2048x128xbf16>
    %cst = arith.constant dense<0.000000e+00> : vector<16x128xf32>
    %3 = tpu.matmul %1, %2, %cst {dimension_numbers = #tpu.dot_dimension_numbers<[1], [0], [0], [1], [0, 0, 1, 1], [], []>} : vector<16x2048xbf16>, vector<2048x128xbf16>, vector<16x128xf32> -> vector<16x128xf32>
    %c0_3 = arith.constant 0 : index
    %c0_4 = arith.constant 0 : index
    %4 = vector.load %arg3[%c0_3, %c0_4] : memref<1x128xf32, #tpu.memory_space<vmem>>, vector<1x128xf32>
    %5 = vector.broadcast %4 : vector<1x128xf32> to vector<16x128xf32>
    %6 = arith.addf %3, %5 : vector<16x128xf32>
    %cst_5 = arith.constant 0.000000e+00 : f32
    %7 = vector.broadcast %cst_5 : f32 to vector<16x128xf32>
    %8 = arith.maximumf %6, %7 : vector<16x128xf32>
    %9 = arith.truncf %8 : vector<16x128xf32> to vector<16x128xbf16>
    %c0_6 = arith.constant 0 : index
    %c0_7 = arith.constant 0 : index
    %10 = vector.load %arg4[%c0_6, %c0_7] : memref<128x64xbf16, #tpu.memory_space<vmem>>, vector<128x64xbf16>
    %cst_8 = arith.constant dense<0.000000e+00> : vector<16x64xf32>
    %11 = tpu.matmul %9, %10, %cst_8 {dimension_numbers = #tpu.dot_dimension_numbers<[1], [0], [0], [1], [0, 0, 1, 1], [], []>} : vector<16x128xbf16>, vector<128x64xbf16>, vector<16x64xf32> -> vector<16x64xf32>
    %c0_9 = arith.constant 0 : index
    %c0_10 = arith.constant 0 : index
    %12 = vector.load %arg5[%c0_9, %c0_10] : memref<1x64xf32, #tpu.memory_space<vmem>>, vector<1x64xf32>
    %13 = vector.broadcast %12 : vector<1x64xf32> to vector<16x64xf32>
    %14 = arith.addf %11, %13 : vector<16x64xf32>
    %cst_11 = arith.constant 0.000000e+00 : f32
    %15 = vector.broadcast %cst_11 : f32 to vector<16x64xf32>
    %16 = arith.maximumf %14, %15 : vector<16x64xf32>
    %17 = arith.truncf %16 : vector<16x64xf32> to vector<16x64xbf16>
    %c0_12 = arith.constant 0 : index
    %c0_13 = arith.constant 0 : index
    %18 = vector.load %arg6[%c0_12, %c0_13] : memref<64x32xbf16, #tpu.memory_space<vmem>>, vector<64x32xbf16>
    %cst_14 = arith.constant dense<0.000000e+00> : vector<16x32xf32>
    %19 = tpu.matmul %17, %18, %cst_14 {dimension_numbers = #tpu.dot_dimension_numbers<[1], [0], [0], [1], [0, 0, 1, 1], [], []>} : vector<16x64xbf16>, vector<64x32xbf16>, vector<16x32xf32> -> vector<16x32xf32>
    %c0_15 = arith.constant 0 : index
    %c0_16 = arith.constant 0 : index
    %20 = vector.load %arg7[%c0_15, %c0_16] : memref<1x32xf32, #tpu.memory_space<vmem>>, vector<1x32xf32>
    %21 = vector.broadcast %20 : vector<1x32xf32> to vector<16x32xf32>
    %22 = arith.addf %19, %21 : vector<16x32xf32>
    %cst_17 = arith.constant 0.000000e+00 : f32
    %23 = vector.broadcast %cst_17 : f32 to vector<16x32xf32>
    %24 = arith.maximumf %22, %23 : vector<16x32xf32>
    %c0_18 = arith.constant 0 : index
    %c0_19 = arith.constant 0 : index
    %25 = vector.load %arg8[%c0_18, %c0_19] : memref<1x32xf32, #tpu.memory_space<vmem>>, vector<1x32xf32>
    %26 = vector.broadcast %25 : vector<1x32xf32> to vector<16x32xf32>
    %27 = arith.mulf %24, %26 : vector<16x32xf32>
    %cst_20 = arith.constant dense<0.000000e+00> : vector<16xf32>
    %28 = vector.multi_reduction <add>, %27, %cst_20 [1] : vector<16x32xf32> to vector<16xf32>
    %29 = vector.shape_cast %28 : vector<16xf32> to vector<16x1xf32>
    %c0_21 = arith.constant 0 : index
    %c0_22 = arith.constant 0 : index
    %30 = vector.load %arg9[%c0_21, %c0_22] : memref<1x1xf32, #tpu.memory_space<vmem>>, vector<1x1xf32>
    %31 = vector.broadcast %30 : vector<1x1xf32> to vector<16x1xf32>
    %32 = arith.addf %29, %31 : vector<16x1xf32>
    %cst_23 = arith.constant 0.000000e+00 : f32
    %33 = vector.broadcast %cst_23 : f32 to vector<16x1xf32>
    %34 = arith.subf %33, %32 : vector<16x1xf32>
    %35 = math.exp %34 : vector<16x1xf32>
    %cst_24 = arith.constant 1.000000e+00 : f32
    %36 = vector.broadcast %cst_24 : f32 to vector<16x1xf32>
    %37 = arith.addf %36, %35 : vector<16x1xf32>
    %38 = tpu.reciprocal %37 {approx = true} : vector<16x1xf32> -> vector<16x1xf32>
    %39 = vector.shape_cast %38 : vector<16x1xf32> to vector<1x16xf32>
    %c0_25 = arith.constant 0 : index
    %c0_26 = arith.constant 0 : index
    %40 = vector.load %arg10[%c0_25, %c0_26] : memref<1x16xf32, #tpu.memory_space<vmem>>, vector<1x16xf32>
    tpu.vector_store %arg10[%c0_25, %c0_26], %39 {strides = array<i32>} : memref<1x16xf32, #tpu.memory_space<vmem>>, vector<1x16xf32>,
    return
  }
  func.func @transform_0(%arg0: i32) -> (i32, i32) {
    %c0_i32 = arith.constant 0 : i32
    %c0_i32_0 = arith.constant 0 : i32
    return %arg0, %c0_i32 : i32, i32
  }
  func.func @transform_1(%arg0: i32) -> (i32, i32) {
    %c0_i32 = arith.constant 0 : i32
    %c0_i32_0 = arith.constant 0 : i32
    %c0_i32_1 = arith.constant 0 : i32
    return %c0_i32, %c0_i32_0 : i32, i32
  }
  func.func @transform_2(%arg0: i32) -> (i32, i32) {
    %c0_i32 = arith.constant 0 : i32
    %c0_i32_0 = arith.constant 0 : i32
    %c0_i32_1 = arith.constant 0 : i32
    return %c0_i32, %c0_i32_0 : i32, i32
  }
  func.func @transform_3(%arg0: i32) -> (i32, i32) {
    %c0_i32 = arith.constant 0 : i32
    %c0_i32_0 = arith.constant 0 : i32
    %c0_i32_1 = arith.constant 0 : i32
    return %c0_i32, %c0_i32_0 : i32, i32
  }
  func.func @transform_4(%arg0: i32) -> (i32, i32) {
    %c0_i32 = arith.constant 0 : i32
    %c0_i32_0 = arith.constant 0 : i32
    %c0_i32_1 = arith.constant 0 : i32
    return %c0_i32, %c0_i32_0 : i32, i32
  }
  func.func @transform_5(%arg0: i32) -> (i32, i32) {
    %c0_i32 = arith.constant 0 : i32
    %c0_i32_0 = arith.constant 0 : i32
    %c0_i32_1 = arith.constant 0 : i32
    return %c0_i32, %c0_i32_0 : i32, i32
  }
  func.func @transform_6(%arg0: i32) -> (i32, i32) {
    %c0_i32 = arith.constant 0 : i32
    %c0_i32_0 = arith.constant 0 : i32
    %c0_i32_1 = arith.constant 0 : i32
    return %c0_i32, %c0_i32_0 : i32, i32
  }
  func.func @transform_7(%arg0: i32) -> (i32, i32) {
    %c0_i32 = arith.constant 0 : i32
    %c0_i32_0 = arith.constant 0 : i32
    %c0_i32_1 = arith.constant 0 : i32
    return %c0_i32, %c0_i32_0 : i32, i32
  }
  func.func @transform_8(%arg0: i32) -> (i32, i32) {
    %c0_i32 = arith.constant 0 : i32
    %c0_i32_0 = arith.constant 0 : i32
    %c0_i32_1 = arith.constant 0 : i32
    return %c0_i32, %c0_i32_0 : i32, i32
  }
  func.func @transform_9(%arg0: i32) -> (i32, i32) {
    %c0_i32 = arith.constant 0 : i32
    %c0_i32_0 = arith.constant 0 : i32
    return %c0_i32, %arg0 : i32, i32
  }
}

module attributes {stable_mosaic.version = 11 : i64} {
  func.func @mlp_kernel(%arg0: i32, %arg1: memref<16x2048xf32, #tpu.memory_space<vmem>>, %arg2: memref<2048x128xbf16, #tpu.memory_space<vmem>>, %arg3: memref<1x128xf32, #tpu.memory_space<vmem>>, %arg4: memref<128x64xbf16, #tpu.memory_space<vmem>>, %arg5: memref<1x64xf32, #tpu.memory_space<vmem>>, %arg6: memref<64x32xbf16, #tpu.memory_space<vmem>>, %arg7: memref<1x32xf32, #tpu.memory_space<vmem>>, %arg8: memref<1x32xf32, #tpu.memory_space<vmem>>, %arg9: memref<1x1xf32, #tpu.memory_space<vmem>>, %arg10: memref<1x16xf32, #tpu.memory_space<vmem>>) attributes {dimension_semantics = [#tpu.dimension_semantics<parallel>], iteration_bounds = array<i64: 1>, scalar_prefetch = 0 : i64, scratch_operands = 0 : i64, tpu.core_type = #tpu.core_type<tc>, window_params = [{transform_indices = @transform_0, window_bounds = array<i64: 16, 2048>}, {pipeline_mode = #tpu.pipeline_mode<synchronous>, transform_indices = @transform_1, window_bounds = array<i64: 2048, 128>}, {pipeline_mode = #tpu.pipeline_mode<synchronous>, transform_indices = @transform_2, window_bounds = array<i64: 1, 128>}, {pipeline_mode = #tpu.pipeline_mode<synchronous>, transform_indices = @transform_3, window_bounds = array<i64: 128, 64>}, {pipeline_mode = #tpu.pipeline_mode<synchronous>, transform_indices = @transform_4, window_bounds = array<i64: 1, 64>}, {pipeline_mode = #tpu.pipeline_mode<synchronous>, transform_indices = @transform_5, window_bounds = array<i64: 64, 32>}, {pipeline_mode = #tpu.pipeline_mode<synchronous>, transform_indices = @transform_6, window_bounds = array<i64: 1, 32>}, {pipeline_mode = #tpu.pipeline_mode<synchronous>, transform_indices = @transform_7, window_bounds = array<i64: 1, 32>}, {pipeline_mode = #tpu.pipeline_mode<synchronous>, transform_indices = @transform_8, window_bounds = array<i64: 1, 1>}, {transform_indices = @transform_9, window_bounds = array<i64: 1, 16>}]} {
    %c0 = arith.constant 0 : index
    %c0_0 = arith.constant 0 : index
    %0 = vector.load %arg1[%c0, %c0_0] : memref<16x2048xf32, #tpu.memory_space<vmem>>, vector<16x2048xf32>
    %1 = arith.truncf %0 : vector<16x2048xf32> to vector<16x2048xbf16>
    %c0_1 = arith.constant 0 : index
    %c0_2 = arith.constant 0 : index
    %2 = vector.load %arg2[%c0_1, %c0_2] : memref<2048x128xbf16, #tpu.memory_space<vmem>>, vector<2048x128xbf16>
    %cst = arith.constant dense<0.000000e+00> : vector<16x128xf32>
    %3 = tpu.matmul %1, %2, %cst {dimension_numbers = #tpu.dot_dimension_numbers<[1], [0], [0], [1], [0, 0, 1, 1], [], []>} : vector<16x2048xbf16>, vector<2048x128xbf16>, vector<16x128xf32> -> vector<16x128xf32>
    %c0_3 = arith.constant 0 : index
    %c0_4 = arith.constant 0 : index
    %4 = vector.load %arg3[%c0_3, %c0_4] : memref<1x128xf32, #tpu.memory_space<vmem>>, vector<1x128xf32>
    %5 = vector.broadcast %4 : vector<1x128xf32> to vector<16x128xf32>
    %6 = arith.addf %3, %5 : vector<16x128xf32>
    %cst_5 = arith.constant 0.000000e+00 : f32
    %7 = vector.broadcast %cst_5 : f32 to vector<16x128xf32>
    %8 = arith.maximumf %6, %7 : vector<16x128xf32>
    %9 = arith.truncf %8 : vector<16x128xf32> to vector<16x128xbf16>
    %c0_6 = arith.constant 0 : index
    %c0_7 = arith.constant 0 : index
    %10 = vector.load %arg4[%c0_6, %c0_7] : memref<128x64xbf16, #tpu.memory_space<vmem>>, vector<128x64xbf16>
    %cst_8 = arith.constant dense<0.000000e+00> : vector<16x64xf32>
    %11 = tpu.matmul %9, %10, %cst_8 {dimension_numbers = #tpu.dot_dimension_numbers<[1], [0], [0], [1], [0, 0, 1, 1], [], []>} : vector<16x128xbf16>, vector<128x64xbf16>, vector<16x64xf32> -> vector<16x64xf32>
    %c0_9 = arith.constant 0 : index
    %c0_10 = arith.constant 0 : index
    %12 = vector.load %arg5[%c0_9, %c0_10] : memref<1x64xf32, #tpu.memory_space<vmem>>, vector<1x64xf32>
    %13 = vector.broadcast %12 : vector<1x64xf32> to vector<16x64xf32>
    %14 = arith.addf %11, %13 : vector<16x64xf32>
    %cst_11 = arith.constant 0.000000e+00 : f32
    %15 = vector.broadcast %cst_11 : f32 to vector<16x64xf32>
    %16 = arith.maximumf %14, %15 : vector<16x64xf32>
    %17 = arith.truncf %16 : vector<16x64xf32> to vector<16x64xbf16>
    %c0_12 = arith.constant 0 : index
    %c0_13 = arith.constant 0 : index
    %18 = vector.load %arg6[%c0_12, %c0_13] : memref<64x32xbf16, #tpu.memory_space<vmem>>, vector<64x32xbf16>
    %cst_14 = arith.constant dense<0.000000e+00> : vector<16x32xf32>
    %19 = tpu.matmul %17, %18, %cst_14 {dimension_numbers = #tpu.dot_dimension_numbers<[1], [0], [0], [1], [0, 0, 1, 1], [], []>} : vector<16x64xbf16>, vector<64x32xbf16>, vector<16x32xf32> -> vector<16x32xf32>
    %c0_15 = arith.constant 0 : index
    %c0_16 = arith.constant 0 : index
    %20 = vector.load %arg7[%c0_15, %c0_16] : memref<1x32xf32, #tpu.memory_space<vmem>>, vector<1x32xf32>
    %21 = vector.broadcast %20 : vector<1x32xf32> to vector<16x32xf32>
    %22 = arith.addf %19, %21 : vector<16x32xf32>
    %cst_17 = arith.constant 0.000000e+00 : f32
    %23 = vector.broadcast %cst_17 : f32 to vector<16x32xf32>
    %24 = arith.maximumf %22, %23 : vector<16x32xf32>
    %c0_18 = arith.constant 0 : index
    %c0_19 = arith.constant 0 : index
    %25 = vector.load %arg8[%c0_18, %c0_19] : memref<1x32xf32, #tpu.memory_space<vmem>>, vector<1x32xf32>
    %26 = vector.broadcast %25 : vector<1x32xf32> to vector<16x32xf32>
    %27 = arith.mulf %24, %26 : vector<16x32xf32>
    %cst_20 = arith.constant dense<0.000000e+00> : vector<16xf32>
    %28 = vector.multi_reduction <add>, %27, %cst_20 [1] : vector<16x32xf32> to vector<16xf32>
    %29 = vector.shape_cast %28 : vector<16xf32> to vector<16x1xf32>
    %c0_21 = arith.constant 0 : index
    %c0_22 = arith.constant 0 : index
    %30 = vector.load %arg9[%c0_21, %c0_22] : memref<1x1xf32, #tpu.memory_space<vmem>>, vector<1x1xf32>
    %31 = vector.broadcast %30 : vector<1x1xf32> to vector<16x1xf32>
    %32 = arith.addf %29, %31 : vector<16x1xf32>
    %cst_23 = arith.constant 0.000000e+00 : f32
    %33 = vector.broadcast %cst_23 : f32 to vector<16x1xf32>
    %34 = arith.subf %33, %32 : vector<16x1xf32>
    %35 = math.exp %34 : vector<16x1xf32>
    %cst_24 = arith.constant 1.000000e+00 : f32
    %36 = vector.broadcast %cst_24 : f32 to vector<16x1xf32>
    %37 = arith.addf %36, %35 : vector<16x1xf32>
    %38 = tpu.reciprocal %37 {approx = true} : vector<16x1xf32> -> vector<16x1xf32>
    %39 = vector.shape_cast %38 : vector<16x1xf32> to vector<1x16xf32>
    %c0_25 = arith.constant 0 : index
    %c0_26 = arith.constant 0 : index
    %40 = vector.load %arg10[%c0_25, %c0_26] : memref<1x16xf32, #tpu.memory_space<vmem>>, vector<1x16xf32>
    tpu.vector_store %arg10[%c0_25, %c0_26], %39 {strides = array<i32>} : memref<1x16xf32, #tpu.memory_space<vmem>>, vector<1x16xf32>,
    return
  }
  func.func @transform_0(%arg0: i32) -> (i32, i32) {
    %c0_i32 = arith.constant 0 : i32
    %c0_i32_0 = arith.constant 0 : i32
    return %arg0, %c0_i32 : i32, i32
  }
  func.func @transform_1(%arg0: i32) -> (i32, i32) {
    %c0_i32 = arith.constant 0 : i32
    %c0_i32_0 = arith.constant 0 : i32
    %c0_i32_1 = arith.constant 0 : i32
    return %c0_i32, %c0_i32_0 : i32, i32
  }
  func.func @transform_2(%arg0: i32) -> (i32, i32) {
    %c0_i32 = arith.constant 0 : i32
    %c0_i32_0 = arith.constant 0 : i32
    %c0_i32_1 = arith.constant 0 : i32
    return %c0_i32, %c0_i32_0 : i32, i32
  }
  func.func @transform_3(%arg0: i32) -> (i32, i32) {
    %c0_i32 = arith.constant 0 : i32
    %c0_i32_0 = arith.constant 0 : i32
    %c0_i32_1 = arith.constant 0 : i32
    return %c0_i32, %c0_i32_0 : i32, i32
  }
  func.func @transform_4(%arg0: i32) -> (i32, i32) {
    %c0_i32 = arith.constant 0 : i32
    %c0_i32_0 = arith.constant 0 : i32
    %c0_i32_1 = arith.constant 0 : i32
    return %c0_i32, %c0_i32_0 : i32, i32
  }
  func.func @transform_5(%arg0: i32) -> (i32, i32) {
    %c0_i32 = arith.constant 0 : i32
    %c0_i32_0 = arith.constant 0 : i32
    %c0_i32_1 = arith.constant 0 : i32
    return %c0_i32, %c0_i32_0 : i32, i32
  }
  func.func @transform_6(%arg0: i32) -> (i32, i32) {
    %c0_i32 = arith.constant 0 : i32
    %c0_i32_0 = arith.constant 0 : i32
    %c0_i32_1 = arith.constant 0 : i32
    return %c0_i32, %c0_i32_0 : i32, i32
  }
  func.func @transform_7(%arg0: i32) -> (i32, i32) {
    %c0_i32 = arith.constant 0 : i32
    %c0_i32_0 = arith.constant 0 : i32
    %c0_i32_1 = arith.constant 0 : i32
    return %c0_i32, %c0_i32_0 : i32, i32
  }
  func.func @transform_8(%arg0: i32) -> (i32, i32) {
    %c0_i32 = arith.constant 0 : i32
    %c0_i32_0 = arith.constant 0 : i32
    %c0_i32_1 = arith.constant 0 : i32
    return %c0_i32, %c0_i32_0 : i32, i32
  }
  func.func @transform_9(%arg0: i32) -> (i32, i32) {
    %c0_i32 = arith.constant 0 : i32
    %c0_i32_0 = arith.constant 0 : i32
    return %c0_i32, %arg0 : i32, i32
  }
}

</mosaic_0001>

<llo_original>
// kernel: tpu_custom_call.1
$region0: #{tpu_custom_call.1}
  #allocation0 [shape = 'u32[]', space=smem, size = 0x4, offset = 0x4, fixed_abs, tag = 'smem constant byte address 0x4 - core index']
  #allocation1 [shape = 'u32[144,128]{1,0:T(1,128)}', space=vmem, size = 0x12000, scoped, tag = 'internal scratch']
  #allocation2 [shape = 'f32[1,1]{1,0:T(1,128)S(1)}', space=vmem, size = 0x200, scoped, tag = 'scoped memory for tpu_custom_call.1']
  %s0 = inlined_call_operand.hbm [shape: f32[16,2048], index: 0, kind: input, shape index: {}]
  %s1 = inlined_call_operand.hbm [shape: bf16[2048,128], index: 1, kind: input, shape index: {}]
  %s2 = inlined_call_operand.vmem [shape: f32[1,128], index: 2, kind: input, shape index: {}]
  %s3 = inlined_call_operand.vmem [shape: bf16[128,64], index: 3, kind: input, shape index: {}]
  %s4 = inlined_call_operand.vmem [shape: f32[1,64], index: 4, kind: input, shape index: {}]
  %s5 = inlined_call_operand.vmem [shape: bf16[64,32], index: 5, kind: input, shape index: {}]
  %s6 = inlined_call_operand.vmem [shape: f32[1,32], index: 6, kind: input, shape index: {}]
  %s7 = inlined_call_operand.vmem [shape: f32[1,32], index: 7, kind: input, shape index: {}]
  %s8 = inlined_call_operand.<no memory space> [shape: f32[1,1], index: 8, kind: input, shape index: {}]
  %s9 = inlined_call_operand.hbm [shape: f32[1,16], index: 9, kind: output, shape index: {}]
  %s10 = sld [smem:[#allocation0]]
  $region54: #{tpu_custom_call.1} parent=0
    _
  %s12 = ssub.s32 1, %s10
  %s13 = scalar_select 0, %s12, %s10
  %v14 = vstv %s8
  %15 = vst [vmem:[#allocation2] sm:$0x1] %v14
  $region1: #{tpu_custom_call.1} parent=0
    #allocation3 [shape = 'u8[131072]{0}', space=vmem, size = 0x20000, scoped, tag = 'input window, operand 0, single buffered']
    #allocation4 [shape = 's32[1]{0}', space=sflag, size = 0x4, scoped, tag = 'scoped memory for tpu_custom_call.1']
    #allocation5 [shape = 's32[1]{0}', space=sflag, size = 0x4, scoped, tag = 'scoped memory for tpu_custom_call.1']
    #allocation6 [shape = 'u8[524288]{0}', space=vmem, size = 0x80000, scoped, tag = 'input window, operand 1, single buffered']
    #allocation7 [shape = 's32[1]{0}', space=sflag, size = 0x4, scoped, tag = 'scoped memory for tpu_custom_call.1']
    #allocation8 [shape = 'u8[512]{0}', space=vmem, size = 0x400, scoped, tag = 'output window, operand 0, single buffered']
    %16 = vsyncpa [#allocation4], 0
    %17 = vsyncpa [#allocation7], 0
    %18 = vsyncpa [#allocation5], 0
    // Predicated region
    $region2: #{tpu_custom_call.1} parent=1 // pred_check
      _
    $region3: #{tpu_custom_call.1} parent=1 // pred_check_branch
      %20 = sbr.rel (0) target = $region5
    $region4: #{tpu_custom_call.1} parent=1 // pred_region
      %s22 = ssub.s32 4096, 4096
      %23 = vsyncadd [#allocation4], %s22
      %s24 = sshll.u32 [#allocation3], 4
      %s25 = int_to_ptr.vmem [resolvable:$true] %s24
      %30 = dma.hbm_to_vmem [thread:$0]  %s0, 4096, %s25, [#allocation4], 2048, 2048, 128
    $region5: #{tpu_custom_call.1} parent=1 // pred_fallthru
      _
    // Predicated region
    $region6: #{tpu_custom_call.1} parent=1 // pred_check
      _
    $region7: #{tpu_custom_call.1} parent=1 // pred_check_branch
      %32 = sbr.rel (0) target = $region9
    $region8: #{tpu_custom_call.1} parent=1 // pred_region
      %s34 = ssub.s32 16384, 16384
      %35 = vsyncadd [#allocation7], %s34
      %s36 = sshll.u32 [#allocation6], 4
      %s37 = int_to_ptr.vmem [resolvable:$true] %s36
      %42 = dma.hbm_to_vmem [thread:$0]  %s1, 16384, %s37, [#allocation7], 64, 64, 4
    $region9: #{tpu_custom_call.1} parent=1 // pred_fallthru
      _
    // Predicated region
    $region10: #{tpu_custom_call.1} parent=1 // pred_check
      _
    $region11: #{tpu_custom_call.1} parent=1 // pred_check_branch
      %44 = sbr.rel (0) target = $region13
    $region12: #{tpu_custom_call.1} parent=1 // pred_region
      _
    $region13: #{tpu_custom_call.1} parent=1 // pred_fallthru
      _
    // Predicated region
    $region14: #{tpu_custom_call.1} parent=1 // pred_check
      _
    $region15: #{tpu_custom_call.1} parent=1 // pred_check_branch
      %46 = sbr.rel (0) target = $region17
    $region16: #{tpu_custom_call.1} parent=1 // pred_region
      _
    $region17: #{tpu_custom_call.1} parent=1 // pred_fallthru
      _
    // Predicated region
    $region18: #{tpu_custom_call.1} parent=1 // pred_check
      _
    $region19: #{tpu_custom_call.1} parent=1 // pred_check_branch
      %48 = sbr.rel (0) target = $region21
    $region20: #{tpu_custom_call.1} parent=1 // pred_region
      _
    $region21: #{tpu_custom_call.1} parent=1 // pred_fallthru
      _
    // Predicated region
    $region22: #{tpu_custom_call.1} parent=1 // pred_check
      _
    $region23: #{tpu_custom_call.1} parent=1 // pred_check_branch
      %50 = sbr.rel (0) target = $region25
    $region24: #{tpu_custom_call.1} parent=1 // pred_region
      _
    $region25: #{tpu_custom_call.1} parent=1 // pred_fallthru
      _
    // Predicated region
    $region26: #{tpu_custom_call.1} parent=1 // pred_check
      _
    $region27: #{tpu_custom_call.1} parent=1 // pred_check_branch
      %52 = sbr.rel (0) target = $region29
    $region28: #{tpu_custom_call.1} parent=1 // pred_region
      _
    $region29: #{tpu_custom_call.1} parent=1 // pred_fallthru
      _
    // Predicated region
    $region30: #{tpu_custom_call.1} parent=1 // pred_check
      _
    $region31: #{tpu_custom_call.1} parent=1 // pred_check_branch
      %54 = sbr.rel (0) target = $region33
    $region32: #{tpu_custom_call.1} parent=1 // pred_region
      _
    $region33: #{tpu_custom_call.1} parent=1 // pred_fallthru
      _
    // Predicated region
    $region34: #{tpu_custom_call.1} parent=1 // pred_check
      _
    $region35: #{tpu_custom_call.1} parent=1 // pred_check_branch
      %56 = sbr.rel (0) target = $region37
    $region36: #{tpu_custom_call.1} parent=1 // pred_region
      _
    $region37: #{tpu_custom_call.1} parent=1 // pred_fallthru
      _
    // Predicated region
    $region38: #{tpu_custom_call.1} parent=1 // pred_check
      _
    $region39: #{tpu_custom_call.1} parent=1 // pred_check_branch
      %58 = sbr.rel (0) target = $region41
    $region40: #{tpu_custom_call.1} parent=1 // pred_region
      %59 = dma.done [#allocation4], 4096
    $region41: #{tpu_custom_call.1} parent=1 // pred_fallthru
      _
    // Predicated region
    $region42: #{tpu_custom_call.1} parent=1 // pred_check
      _
    $region43: #{tpu_custom_call.1} parent=1 // pred_check_branch
      %61 = sbr.rel (0) target = $region45
    $region44: #{tpu_custom_call.1} parent=1 // pred_region
      %62 = dma.done [#allocation7], 16384
    $region45: #{tpu_custom_call.1} parent=1 // pred_fallthru
      _
    %v64 = vld [vmem:[#allocation3] sm:$0xff]
    %v65 = vld [vmem:[#allocation3 + $0x8] sm:$0xff]
    %v66 = vld [vmem:[#allocation3 + $0x10] sm:$0xff]
    %v67 = vld [vmem:[#allocation3 + $0x18] sm:$0xff]
    %v68 = vld [vmem:[#allocation3 + $0x20] sm:$0xff]
    %v69 = vld [vmem:[#allocation3 + $0x28] sm:$0xff]
    %v70 = vld [vmem:[#allocation3 + $0x30] sm:$0xff]
    %v71 = vld [vmem:[#allocation3 + $0x38] sm:$0xff]
    %v72 = vld [vmem:[#allocation3 + $0x40] sm:$0xff]
    %v73 = vld [vmem:[#allocation3 + $0x48] sm:$0xff]
    %v74 = vld [vmem:[#allocation3 + $0x50] sm:$0xff]
    %v75 = vld [vmem:[#allocation3 + $0x58] sm:$0xff]
    %v76 = vld [vmem:[#allocation3 + $0x60] sm:$0xff]
    %v77 = vld [vmem:[#allocation3 + $0x68] sm:$0xff]
    %v78 = vld [vmem:[#allocation3 + $0x70] sm:$0xff]
    %v79 = vld [vmem:[#allocation3 + $0x78] sm:$0xff]
    %v80 = vld [vmem:[#allocation3 + $0x80] sm:$0xff]
    %v81 = vld [vmem:[#allocation3 + $0x88] sm:$0xff]
    %v82 = vld [vmem:[#allocation3 + $0x90] sm:$0xff]
    %v83 = vld [vmem:[#allocation3 + $0x98] sm:$0xff]
    %v84 = vld [vmem:[#allocation3 + $0xa0] sm:$0xff]
    %v85 = vld [vmem:[#allocation3 + $0xa8] sm:$0xff]
    %v86 = vld [vmem:[#allocation3 + $0xb0] sm:$0xff]
    %v87 = vld [vmem:[#allocation3 + $0xb8] sm:$0xff]
    %v88 = vld [vmem:[#allocation3 + $0xc0] sm:$0xff]
    %v89 = vld [vmem:[#allocation3 + $0xc8] sm:$0xff]
    %v90 = vld [vmem:[#allocation3 + $0xd0] sm:$0xff]
    %v91 = vld [vmem:[#allocation3 + $0xd8] sm:$0xff]
    %v92 = vld [vmem:[#allocation3 + $0xe0] sm:$0xff]
    %v93 = vld [vmem:[#allocation3 + $0xe8] sm:$0xff]
    %v94 = vld [vmem:[#allocation3 + $0xf0] sm:$0xff]
    %v95 = vld [vmem:[#allocation3 + $0xf8] sm:$0xff]
    %v96 = vpack.c.bf16 %v80, %v64
    %v97 = vpack.c.bf16 %v81, %v65
    %v98 = vpack.c.bf16 %v82, %v66
    %v99 = vpack.c.bf16 %v83, %v67
    %v100 = vpack.c.bf16 %v84, %v68
    %v101 = vpack.c.bf16 %v85, %v69
    %v102 = vpack.c.bf16 %v86, %v70
    %v103 = vpack.c.bf16 %v87, %v71
    %v104 = vpack.c.bf16 %v88, %v72
    %v105 = vpack.c.bf16 %v89, %v73
    %v106 = vpack.c.bf16 %v90, %v74
    %v107 = vpack.c.bf16 %v91, %v75
    %v108 = vpack.c.bf16 %v92, %v76
    %v109 = vpack.c.bf16 %v93, %v77
    %v110 = vpack.c.bf16 %v94, %v78
    %v111 = vpack.c.bf16 %v95, %v79
    %v112 = vld [vmem:[#allocation6] sm:$0xf]
    %v113 = vld [vmem:[#allocation6 + $0x4] sm:$0xf]
    %v114 = vld [vmem:[#allocation6 + $0x8] sm:$0xf]
    %v115 = vld [vmem:[#allocation6 + $0xc] sm:$0xf]
    %v116 = vld [vmem:[#allocation6 + $0x10] sm:$0xf]
    %v117 = vld [vmem:[#allocation6 + $0x14] sm:$0xf]
    %v118 = vld [vmem:[#allocation6 + $0x18] sm:$0xf]
    %v119 = vld [vmem:[#allocation6 + $0x1c] sm:$0xf]
    %v120 = vld [vmem:[#allocation6 + $0x20] sm:$0xf]
    %v121 = vld [vmem:[#allocation6 + $0x24] sm:$0xf]
    %v122 = vld [vmem:[#allocation6 + $0x28] sm:$0xf]
    %v123 = vld [vmem:[#allocation6 + $0x2c] sm:$0xf]
    %v124 = vld [vmem:[#allocation6 + $0x30] sm:$0xf]
    %v125 = vld [vmem:[#allocation6 + $0x34] sm:$0xf]
    %v126 = vld [vmem:[#allocation6 + $0x38] sm:$0xf]
    %v127 = vld [vmem:[#allocation6 + $0x3c] sm:$0xf]
    %v128 = vld [vmem:[#allocation6 + $0x40] sm:$0xf]
    %v129 = vld [vmem:[#allocation6 + $0x44] sm:$0xf]
    %v130 = vld [vmem:[#allocation6 + $0x48] sm:$0xf]
    %v131 = vld [vmem:[#allocation6 + $0x4c] sm:$0xf]
    %v132 = vld [vmem:[#allocation6 + $0x50] sm:$0xf]
    %v133 = vld [vmem:[#allocation6 + $0x54] sm:$0xf]
    %v134 = vld [vmem:[#allocation6 + $0x58] sm:$0xf]
    %v135 = vld [vmem:[#allocation6 + $0x5c] sm:$0xf]
    %v136 = vld [vmem:[#allocation6 + $0x60] sm:$0xf]
    %v137 = vld [vmem:[#allocation6 + $0x64] sm:$0xf]
    %v138 = vld [vmem:[#allocation6 + $0x68] sm:$0xf]
    %v139 = vld [vmem:[#allocation6 + $0x6c] sm:$0xf]
    %v140 = vld [vmem:[#allocation6 + $0x70] sm:$0xf]
    %v141 = vld [vmem:[#allocation6 + $0x74] sm:$0xf]
    %v142 = vld [vmem:[#allocation6 + $0x78] sm:$0xf]
    %v143 = vld [vmem:[#allocation6 + $0x7c] sm:$0xf]
    %v144 = vld [vmem:[#allocation6 + $0x80] sm:$0xf]
    %v145 = vld [vmem:[#allocation6 + $0x84] sm:$0xf]
    %v146 = vld [vmem:[#allocation6 + $0x88] sm:$0xf]
    %v147 = vld [vmem:[#allocation6 + $0x8c] sm:$0xf]
    %v148 = vld [vmem:[#allocation6 + $0x90] sm:$0xf]
    %v149 = vld [vmem:[#allocation6 + $0x94] sm:$0xf]
    %v150 = vld [vmem:[#allocation6 + $0x98] sm:$0xf]
    %v151 = vld [vmem:[#allocation6 + $0x9c] sm:$0xf]
    %v152 = vld [vmem:[#allocation6 + $0xa0] sm:$0xf]
    %v153 = vld [vmem:[#allocation6 + $0xa4] sm:$0xf]
    %v154 = vld [vmem:[#allocation6 + $0xa8] sm:$0xf]
    %v155 = vld [vmem:[#allocation6 + $0xac] sm:$0xf]
    %v156 = vld [vmem:[#allocation6 + $0xb0] sm:$0xf]
    %v157 = vld [vmem:[#allocation6 + $0xb4] sm:$0xf]
    %v158 = vld [vmem:[#allocation6 + $0xb8] sm:$0xf]
    %v159 = vld [vmem:[#allocation6 + $0xbc] sm:$0xf]
    %v160 = vld [vmem:[#allocation6 + $0xc0] sm:$0xf]
    %v161 = vld [vmem:[#allocation6 + $0xc4] sm:$0xf]
    %v162 = vld [vmem:[#allocation6 + $0xc8] sm:$0xf]
    %v163 = vld [vmem:[#allocation6 + $0xcc] sm:$0xf]
    %v164 = vld [vmem:[#allocation6 + $0xd0] sm:$0xf]
    %v165 = vld [vmem:[#allocation6 + $0xd4] sm:$0xf]
    %v166 = vld [vmem:[#allocation6 + $0xd8] sm:$0xf]
    %v167 = vld [vmem:[#allocation6 + $0xdc] sm:$0xf]
    %v168 = vld [vmem:[#allocation6 + $0xe0] sm:$0xf]
    %v169 = vld [vmem:[#allocation6 + $0xe4] sm:$0xf]
    %v170 = vld [vmem:[#allocation6 + $0xe8] sm:$0xf]
    %v171 = vld [vmem:[#allocation6 + $0xec] sm:$0xf]
    %v172 = vld [vmem:[#allocation6 + $0xf0] sm:$0xf]
    %v173 = vld [vmem:[#allocation6 + $0xf4] sm:$0xf]
    %v174 = vld [vmem:[#allocation6 + $0xf8] sm:$0xf]
    %v175 = vld [vmem:[#allocation6 + $0xfc] sm:$0xf]
    %v176 = vld [vmem:[#allocation6 + $0x100] sm:$0xf]
    %v177 = vld [vmem:[#allocation6 + $0x104] sm:$0xf]
    %v178 = vld [vmem:[#allocation6 + $0x108] sm:$0xf]
    %v179 = vld [vmem:[#allocation6 + $0x10c] sm:$0xf]
    %v180 = vld [vmem:[#allocation6 + $0x110] sm:$0xf]
    %v181 = vld [vmem:[#allocation6 + $0x114] sm:$0xf]
    %v182 = vld [vmem:[#allocation6 + $0x118] sm:$0xf]
    %v183 = vld [vmem:[#allocation6 + $0x11c] sm:$0xf]
    %v184 = vld [vmem:[#allocation6 + $0x120] sm:$0xf]
    %v185 = vld [vmem:[#allocation6 + $0x124] sm:$0xf]
    %v186 = vld [vmem:[#allocation6 + $0x128] sm:$0xf]
    %v187 = vld [vmem:[#allocation6 + $0x12c] sm:$0xf]
    %v188 = vld [vmem:[#allocation6 + $0x130] sm:$0xf]
    %v189 = vld [vmem:[#allocation6 + $0x134] sm:$0xf]
    %v190 = vld [vmem:[#allocation6 + $0x138] sm:$0xf]
    %v191 = vld [vmem:[#allocation6 + $0x13c] sm:$0xf]
    %v192 = vld [vmem:[#allocation6 + $0x140] sm:$0xf]
    %v193 = vld [vmem:[#allocation6 + $0x144] sm:$0xf]
    %v194 = vld [vmem:[#allocation6 + $0x148] sm:$0xf]
    %v195 = vld [vmem:[#allocation6 + $0x14c] sm:$0xf]
    %v196 = vld [vmem:[#allocation6 + $0x150] sm:$0xf]
    %v197 = vld [vmem:[#allocation6 + $0x154] sm:$0xf]
    %v198 = vld [vmem:[#allocation6 + $0x158] sm:$0xf]
    %v199 = vld [vmem:[#allocation6 + $0x15c] sm:$0xf]
    %v200 = vld [vmem:[#allocation6 + $0x160] sm:$0xf]
    %v201 = vld [vmem:[#allocation6 + $0x164] sm:$0xf]
    %v202 = vld [vmem:[#allocation6 + $0x168] sm:$0xf]
    %v203 = vld [vmem:[#allocation6 + $0x16c] sm:$0xf]
    %v204 = vld [vmem:[#allocation6 + $0x170] sm:$0xf]
    %v205 = vld [vmem:[#allocation6 + $0x174] sm:$0xf]
    %v206 = vld [vmem:[#allocation6 + $0x178] sm:$0xf]
    %v207 = vld [vmem:[#allocation6 + $0x17c] sm:$0xf]
    %v208 = vld [vmem:[#allocation6 + $0x180] sm:$0xf]
    %v209 = vld [vmem:[#allocation6 + $0x184] sm:$0xf]
    %v210 = vld [vmem:[#allocation6 + $0x188] sm:$0xf]
    %v211 = vld [vmem:[#allocation6 + $0x18c] sm:$0xf]
    %v212 = vld [vmem:[#allocation6 + $0x190] sm:$0xf]
    %v213 = vld [vmem:[#allocation6 + $0x194] sm:$0xf]
    %v214 = vld [vmem:[#allocation6 + $0x198] sm:$0xf]
    %v215 = vld [vmem:[#allocation6 + $0x19c] sm:$0xf]
    %v216 = vld [vmem:[#allocation6 + $0x1a0] sm:$0xf]
    %v217 = vld [vmem:[#allocation6 + $0x1a4] sm:$0xf]
    %v218 = vld [vmem:[#allocation6 + $0x1a8] sm:$0xf]
    %v219 = vld [vmem:[#allocation6 + $0x1ac] sm:$0xf]
    %v220 = vld [vmem:[#allocation6 + $0x1b0] sm:$0xf]
    %v221 = vld [vmem:[#allocation6 + $0x1b4] sm:$0xf]
    %v222 = vld [vmem:[#allocation6 + $0x1b8] sm:$0xf]
    %v223 = vld [vmem:[#allocation6 + $0x1bc] sm:$0xf]
    %v224 = vld [vmem:[#allocation6 + $0x1c0] sm:$0xf]
    %v225 = vld [vmem:[#allocation6 + $0x1c4] sm:$0xf]
    %v226 = vld [vmem:[#allocation6 + $0x1c8] sm:$0xf]
    %v227 = vld [vmem:[#allocation6 + $0x1cc] sm:$0xf]
    %v228 = vld [vmem:[#allocation6 + $0x1d0] sm:$0xf]
    %v229 = vld [vmem:[#allocation6 + $0x1d4] sm:$0xf]
    %v230 = vld [vmem:[#allocation6 + $0x1d8] sm:$0xf]
    %v231 = vld [vmem:[#allocation6 + $0x1dc] sm:$0xf]
    %v232 = vld [vmem:[#allocation6 + $0x1e0] sm:$0xf]
    %v233 = vld [vmem:[#allocation6 + $0x1e4] sm:$0xf]
    %v234 = vld [vmem:[#allocation6 + $0x1e8] sm:$0xf]
    %v235 = vld [vmem:[#allocation6 + $0x1ec] sm:$0xf]
    %v236 = vld [vmem:[#allocation6 + $0x1f0] sm:$0xf]
    %v237 = vld [vmem:[#allocation6 + $0x1f4] sm:$0xf]
    %v238 = vld [vmem:[#allocation6 + $0x1f8] sm:$0xf]
    %v239 = vld [vmem:[#allocation6 + $0x1fc] sm:$0xf]
    %v240 = vld [vmem:[#allocation6 + $0x200] sm:$0xf]
    %v241 = vld [vmem:[#allocation6 + $0x204] sm:$0xf]
    %v242 = vld [vmem:[#allocation6 + $0x208] sm:$0xf]
    %v243 = vld [vmem:[#allocation6 + $0x20c] sm:$0xf]
    %v244 = vld [vmem:[#allocation6 + $0x210] sm:$0xf]
    %v245 = vld [vmem:[#allocation6 + $0x214] sm:$0xf]
    %v246 = vld [vmem:[#allocation6 + $0x218] sm:$0xf]
    %v247 = vld [vmem:[#allocation6 + $0x21c] sm:$0xf]
    %v248 = vld [vmem:[#allocation6 + $0x220] sm:$0xf]
    %v249 = vld [vmem:[#allocation6 + $0x224] sm:$0xf]
    %v250 = vld [vmem:[#allocation6 + $0x228] sm:$0xf]
    %v251 = vld [vmem:[#allocation6 + $0x22c] sm:$0xf]
    %v252 = vld [vmem:[#allocation6 + $0x230] sm:$0xf]
    %v253 = vld [vmem:[#allocation6 + $0x234] sm:$0xf]
    %v254 = vld [vmem:[#allocation6 + $0x238] sm:$0xf]
    %v255 = vld [vmem:[#allocation6 + $0x23c] sm:$0xf]
    %v256 = vld [vmem:[#allocation6 + $0x240] sm:$0xf]
    %v257 = vld [vmem:[#allocation6 + $0x244] sm:$0xf]
    %v258 = vld [vmem:[#allocation6 + $0x248] sm:$0xf]
    %v259 = vld [vmem:[#allocation6 + $0x24c] sm:$0xf]
    %v260 = vld [vmem:[#allocation6 + $0x250] sm:$0xf]
    %v261 = vld [vmem:[#allocation6 + $0x254] sm:$0xf]
    %v262 = vld [vmem:[#allocation6 + $0x258] sm:$0xf]
    %v263 = vld [vmem:[#allocation6 + $0x25c] sm:$0xf]
    %v264 = vld [vmem:[#allocation6 + $0x260] sm:$0xf]
    %v265 = vld [vmem:[#allocation6 + $0x264] sm:$0xf]
    %v266 = vld [vmem:[#allocation6 + $0x268] sm:$0xf]
    %v267 = vld [vmem:[#allocation6 + $0x26c] sm:$0xf]
    %v268 = vld [vmem:[#allocation6 + $0x270] sm:$0xf]
    %v269 = vld [vmem:[#allocation6 + $0x274] sm:$0xf]
    %v270 = vld [vmem:[#allocation6 + $0x278] sm:$0xf]
    %v271 = vld [vmem:[#allocation6 + $0x27c] sm:$0xf]
    %v272 = vld [vmem:[#allocation6 + $0x280] sm:$0xf]
    %v273 = vld [vmem:[#allocation6 + $0x284] sm:$0xf]
    %v274 = vld [vmem:[#allocation6 + $0x288] sm:$0xf]
    %v275 = vld [vmem:[#allocation6 + $0x28c] sm:$0xf]
    %v276 = vld [vmem:[#allocation6 + $0x290] sm:$0xf]
    %v277 = vld [vmem:[#allocation6 + $0x294] sm:$0xf]
    %v278 = vld [vmem:[#allocation6 + $0x298] sm:$0xf]
    %v279 = vld [vmem:[#allocation6 + $0x29c] sm:$0xf]
    %v280 = vld [vmem:[#allocation6 + $0x2a0] sm:$0xf]
    %v281 = vld [vmem:[#allocation6 + $0x2a4] sm:$0xf]
    %v282 = vld [vmem:[#allocation6 + $0x2a8] sm:$0xf]
    %v283 = vld [vmem:[#allocation6 + $0x2ac] sm:$0xf]
    %v284 = vld [vmem:[#allocation6 + $0x2b0] sm:$0xf]
    %v285 = vld [vmem:[#allocation6 + $0x2b4] sm:$0xf]
    %v286 = vld [vmem:[#allocation6 + $0x2b8] sm:$0xf]
    %v287 = vld [vmem:[#allocation6 + $0x2bc] sm:$0xf]
    %v288 = vld [vmem:[#allocation6 + $0x2c0] sm:$0xf]
    %v289 = vld [vmem:[#allocation6 + $0x2c4] sm:$0xf]
    %v290 = vld [vmem:[#allocation6 + $0x2c8] sm:$0xf]
    %v291 = vld [vmem:[#allocation6 + $0x2cc] sm:$0xf]
    %v292 = vld [vmem:[#allocation6 + $0x2d0] sm:$0xf]
    %v293 = vld [vmem:[#allocation6 + $0x2d4] sm:$0xf]
    %v294 = vld [vmem:[#allocation6 + $0x2d8] sm:$0xf]
    %v295 = vld [vmem:[#allocation6 + $0x2dc] sm:$0xf]
    %v296 = vld [vmem:[#allocation6 + $0x2e0] sm:$0xf]
    %v297 = vld [vmem:[#allocation6 + $0x2e4] sm:$0xf]
    %v298 = vld [vmem:[#allocation6 + $0x2e8] sm:$0xf]
    %v299 = vld [vmem:[#allocation6 + $0x2ec] sm:$0xf]
    %v300 = vld [vmem:[#allocation6 + $0x2f0] sm:$0xf]
    %v301 = vld [vmem:[#allocation6 + $0x2f4] sm:$0xf]
    %v302 = vld [vmem:[#allocation6 + $0x2f8] sm:$0xf]
    %v303 = vld [vmem:[#allocation6 + $0x2fc] sm:$0xf]
    %v304 = vld [vmem:[#allocation6 + $0x300] sm:$0xf]
    %v305 = vld [vmem:[#allocation6 + $0x304] sm:$0xf]
    %v306 = vld [vmem:[#allocation6 + $0x308] sm:$0xf]
    %v307 = vld [vmem:[#allocation6 + $0x30c] sm:$0xf]
    %v308 = vld [vmem:[#allocation6 + $0x310] sm:$0xf]
    %v309 = vld [vmem:[#allocation6 + $0x314] sm:$0xf]
    %v310 = vld [vmem:[#allocation6 + $0x318] sm:$0xf]
    %v311 = vld [vmem:[#allocation6 + $0x31c] sm:$0xf]
    %v312 = vld [vmem:[#allocation6 + $0x320] sm:$0xf]
    %v313 = vld [vmem:[#allocation6 + $0x324] sm:$0xf]
    %v314 = vld [vmem:[#allocation6 + $0x328] sm:$0xf]
    %v315 = vld [vmem:[#allocation6 + $0x32c] sm:$0xf]
    %v316 = vld [vmem:[#allocation6 + $0x330] sm:$0xf]
    %v317 = vld [vmem:[#allocation6 + $0x334] sm:$0xf]
    %v318 = vld [vmem:[#allocation6 + $0x338] sm:$0xf]
    %v319 = vld [vmem:[#allocation6 + $0x33c] sm:$0xf]
    %v320 = vld [vmem:[#allocation6 + $0x340] sm:$0xf]
    %v321 = vld [vmem:[#allocation6 + $0x344] sm:$0xf]
    %v322 = vld [vmem:[#allocation6 + $0x348] sm:$0xf]
    %v323 = vld [vmem:[#allocation6 + $0x34c] sm:$0xf]
    %v324 = vld [vmem:[#allocation6 + $0x350] sm:$0xf]
    %v325 = vld [vmem:[#allocation6 + $0x354] sm:$0xf]
    %v326 = vld [vmem:[#allocation6 + $0x358] sm:$0xf]
    %v327 = vld [vmem:[#allocation6 + $0x35c] sm:$0xf]
    %v328 = vld [vmem:[#allocation6 + $0x360] sm:$0xf]
    %v329 = vld [vmem:[#allocation6 + $0x364] sm:$0xf]
    %v330 = vld [vmem:[#allocation6 + $0x368] sm:$0xf]
    %v331 = vld [vmem:[#allocation6 + $0x36c] sm:$0xf]
    %v332 = vld [vmem:[#allocation6 + $0x370] sm:$0xf]
    %v333 = vld [vmem:[#allocation6 + $0x374] sm:$0xf]
    %v334 = vld [vmem:[#allocation6 + $0x378] sm:$0xf]
    %v335 = vld [vmem:[#allocation6 + $0x37c] sm:$0xf]
    %v336 = vld [vmem:[#allocation6 + $0x380] sm:$0xf]
    %v337 = vld [vmem:[#allocation6 + $0x384] sm:$0xf]
    %v338 = vld [vmem:[#allocation6 + $0x388] sm:$0xf]
    %v339 = vld [vmem:[#allocation6 + $0x38c] sm:$0xf]
    %v340 = vld [vmem:[#allocation6 + $0x390] sm:$0xf]
    %v341 = vld [vmem:[#allocation6 + $0x394] sm:$0xf]
    %v342 = vld [vmem:[#allocation6 + $0x398] sm:$0xf]
    %v343 = vld [vmem:[#allocation6 + $0x39c] sm:$0xf]
    %v344 = vld [vmem:[#allocation6 + $0x3a0] sm:$0xf]
    %v345 = vld [vmem:[#allocation6 + $0x3a4] sm:$0xf]
    %v346 = vld [vmem:[#allocation6 + $0x3a8] sm:$0xf]
    %v347 = vld [vmem:[#allocation6 + $0x3ac] sm:$0xf]
    %v348 = vld [vmem:[#allocation6 + $0x3b0] sm:$0xf]
    %v349 = vld [vmem:[#allocation6 + $0x3b4] sm:$0xf]
    %v350 = vld [vmem:[#allocation6 + $0x3b8] sm:$0xf]
    %v351 = vld [vmem:[#allocation6 + $0x3bc] sm:$0xf]
    %v352 = vld [vmem:[#allocation6 + $0x3c0] sm:$0xf]
    %v353 = vld [vmem:[#allocation6 + $0x3c4] sm:$0xf]
    %v354 = vld [vmem:[#allocation6 + $0x3c8] sm:$0xf]
    %v355 = vld [vmem:[#allocation6 + $0x3cc] sm:$0xf]
    %v356 = vld [vmem:[#allocation6 + $0x3d0] sm:$0xf]
    %v357 = vld [vmem:[#allocation6 + $0x3d4] sm:$0xf]
    %v358 = vld [vmem:[#allocation6 + $0x3d8] sm:$0xf]
    %v359 = vld [vmem:[#allocation6 + $0x3dc] sm:$0xf]
    %v360 = vld [vmem:[#allocation6 + $0x3e0] sm:$0xf]
    %v361 = vld [vmem:[#allocation6 + $0x3e4] sm:$0xf]
    %v362 = vld [vmem:[#allocation6 + $0x3e8] sm:$0xf]
    %v363 = vld [vmem:[#allocation6 + $0x3ec] sm:$0xf]
    %v364 = vld [vmem:[#allocation6 + $0x3f0] sm:$0xf]
    %v365 = vld [vmem:[#allocation6 + $0x3f4] sm:$0xf]
    %v366 = vld [vmem:[#allocation6 + $0x3f8] sm:$0xf]
    %v367 = vld [vmem:[#allocation6 + $0x3fc] sm:$0xf]
    %v368 = vld [vmem:[%s2] sm:$0x1]
    %v370 = vlaneseq
    %v371 = vshrl.u32 %v370, 7
    %v372 = vsub.s32 0, %v371
    %v373 = vrot.slane %v368, %v372
    %v631 = vunpack.c.l.b16 %v112
    %v632 = vunpack.c.l.b16 %v113
    %v633 = vunpack.c.l.b16 %v114
    %v634 = vunpack.c.l.b16 %v115
    %v635 = vunpack.c.l.b16 %v116
    %v636 = vunpack.c.l.b16 %v117
    %v637 = vunpack.c.l.b16 %v118
    %v638 = vunpack.c.l.b16 %v119
    %v639 = vunpack.c.l.b16 %v120
    %v640 = vunpack.c.l.b16 %v121
    %v641 = vunpack.c.l.b16 %v122
    %v642 = vunpack.c.l.b16 %v123
    %v643 = vunpack.c.l.b16 %v124
    %v644 = vunpack.c.l.b16 %v125
    %v645 = vunpack.c.l.b16 %v126
    %v646 = vunpack.c.l.b16 %v127
    %v647 = vunpack.c.l.b16 %v128
    %v648 = vunpack.c.l.b16 %v129
    %v649 = vunpack.c.l.b16 %v130
    %v650 = vunpack.c.l.b16 %v131
    %v651 = vunpack.c.l.b16 %v132
    %v652 = vunpack.c.l.b16 %v133
    %v653 = vunpack.c.l.b16 %v134
    %v654 = vunpack.c.l.b16 %v135
    %v655 = vunpack.c.l.b16 %v136
    %v656 = vunpack.c.l.b16 %v137
    %v657 = vunpack.c.l.b16 %v138
    %v658 = vunpack.c.l.b16 %v139
    %v659 = vunpack.c.l.b16 %v140
    %v660 = vunpack.c.l.b16 %v141
    %v661 = vunpack.c.l.b16 %v142
    %v662 = vunpack.c.l.b16 %v143
    %v663 = vunpack.c.l.b16 %v144
    %v664 = vunpack.c.l.b16 %v145
    %v665 = vunpack.c.l.b16 %v146
    %v666 = vunpack.c.l.b16 %v147
    %v667 = vunpack.c.l.b16 %v148
    %v668 = vunpack.c.l.b16 %v149
    %v669 = vunpack.c.l.b16 %v150
    %v670 = vunpack.c.l.b16 %v151
    %v671 = vunpack.c.l.b16 %v152
    %v672 = vunpack.c.l.b16 %v153
    %v673 = vunpack.c.l.b16 %v154
    %v674 = vunpack.c.l.b16 %v155
    %v675 = vunpack.c.l.b16 %v156
    %v676 = vunpack.c.l.b16 %v157
    %v677 = vunpack.c.l.b16 %v158
    %v678 = vunpack.c.l.b16 %v159
    %v679 = vunpack.c.l.b16 %v160
    %v680 = vunpack.c.l.b16 %v161
    %v681 = vunpack.c.l.b16 %v162
    %v682 = vunpack.c.l.b16 %v163
    %v683 = vunpack.c.l.b16 %v164
    %v684 = vunpack.c.l.b16 %v165
    %v685 = vunpack.c.l.b16 %v166
    %v686 = vunpack.c.l.b16 %v167
    %v687 = vunpack.c.l.b16 %v168
    %v688 = vunpack.c.l.b16 %v169
    %v689 = vunpack.c.l.b16 %v170
    %v690 = vunpack.c.l.b16 %v171
    %v691 = vunpack.c.l.b16 %v172
    %v692 = vunpack.c.l.b16 %v173
    %v693 = vunpack.c.l.b16 %v174
    %v694 = vunpack.c.l.b16 %v175
    %v695 = vunpack.c.l.b16 %v176
    %v696 = vunpack.c.l.b16 %v177
    %v697 = vunpack.c.l.b16 %v178
    %v698 = vunpack.c.l.b16 %v179
    %v699 = vunpack.c.l.b16 %v180
    %v700 = vunpack.c.l.b16 %v181
    %v701 = vunpack.c.l.b16 %v182
    %v702 = vunpack.c.l.b16 %v183
    %v703 = vunpack.c.l.b16 %v184
    %v704 = vunpack.c.l.b16 %v185
    %v705 = vunpack.c.l.b16 %v186
    %v706 = vunpack.c.l.b16 %v187
    %v707 = vunpack.c.l.b16 %v188
    %v708 = vunpack.c.l.b16 %v189
    %v709 = vunpack.c.l.b16 %v190
    %v710 = vunpack.c.l.b16 %v191
    %v711 = vunpack.c.l.b16 %v192
    %v712 = vunpack.c.l.b16 %v193
    %v713 = vunpack.c.l.b16 %v194
    %v714 = vunpack.c.l.b16 %v195
    %v715 = vunpack.c.l.b16 %v196
    %v716 = vunpack.c.l.b16 %v197
    %v717 = vunpack.c.l.b16 %v198
    %v718 = vunpack.c.l.b16 %v199
    %v719 = vunpack.c.l.b16 %v200
    %v720 = vunpack.c.l.b16 %v201
    %v721 = vunpack.c.l.b16 %v202
    %v722 = vunpack.c.l.b16 %v203
    %v723 = vunpack.c.l.b16 %v204
    %v724 = vunpack.c.l.b16 %v205
    %v725 = vunpack.c.l.b16 %v206
    %v726 = vunpack.c.l.b16 %v207
    %v727 = vunpack.c.l.b16 %v208
    %v728 = vunpack.c.l.b16 %v209
    %v729 = vunpack.c.l.b16 %v210
    %v730 = vunpack.c.l.b16 %v211
    %v731 = vunpack.c.l.b16 %v212
    %v732 = vunpack.c.l.b16 %v213
    %v733 = vunpack.c.l.b16 %v214
    %v734 = vunpack.c.l.b16 %v215
    %v735 = vunpack.c.l.b16 %v216
    %v736 = vunpack.c.l.b16 %v217
    %v737 = vunpack.c.l.b16 %v218
    %v738 = vunpack.c.l.b16 %v219
    %v739 = vunpack.c.l.b16 %v220
    %v740 = vunpack.c.l.b16 %v221
    %v741 = vunpack.c.l.b16 %v222
    %v742 = vunpack.c.l.b16 %v223
    %v743 = vunpack.c.l.b16 %v224
    %v744 = vunpack.c.l.b16 %v225
    %v745 = vunpack.c.l.b16 %v226
    %v746 = vunpack.c.l.b16 %v227
    %v747 = vunpack.c.l.b16 %v228
    %v748 = vunpack.c.l.b16 %v229
    %v749 = vunpack.c.l.b16 %v230
    %v750 = vunpack.c.l.b16 %v231
    %v751 = vunpack.c.l.b16 %v232
    %v752 = vunpack.c.l.b16 %v233
    %v753 = vunpack.c.l.b16 %v234
    %v754 = vunpack.c.l.b16 %v235
    %v755 = vunpack.c.l.b16 %v236
    %v756 = vunpack.c.l.b16 %v237
    %v757 = vunpack.c.l.b16 %v238
    %v758 = vunpack.c.l.b16 %v239
    %v759 = vunpack.c.l.b16 %v240
    %v760 = vunpack.c.l.b16 %v241
    %v761 = vunpack.c.l.b16 %v242
    %v762 = vunpack.c.l.b16 %v243
    %v763 = vunpack.c.l.b16 %v244
    %v764 = vunpack.c.l.b16 %v245
    %v765 = vunpack.c.l.b16 %v246
    %v766 = vunpack.c.l.b16 %v247
    %v767 = vunpack.c.l.b16 %v248
    %v768 = vunpack.c.l.b16 %v249
    %v769 = vunpack.c.l.b16 %v250
    %v770 = vunpack.c.l.b16 %v251
    %v771 = vunpack.c.l.b16 %v252
    %v772 = vunpack.c.l.b16 %v253
    %v773 = vunpack.c.l.b16 %v254
    %v774 = vunpack.c.l.b16 %v255
    %v775 = vunpack.c.l.b16 %v256
    %v776 = vunpack.c.l.b16 %v257
    %v777 = vunpack.c.l.b16 %v258
    %v778 = vunpack.c.l.b16 %v259
    %v779 = vunpack.c.l.b16 %v260
    %v780 = vunpack.c.l.b16 %v261
    %v781 = vunpack.c.l.b16 %v262
    %v782 = vunpack.c.l.b16 %v263
    %v783 = vunpack.c.l.b16 %v264
    %v784 = vunpack.c.l.b16 %v265
    %v785 = vunpack.c.l.b16 %v266
    %v786 = vunpack.c.l.b16 %v267
    %v787 = vunpack.c.l.b16 %v268
    %v788 = vunpack.c.l.b16 %v269
    %v789 = vunpack.c.l.b16 %v270
    %v790 = vunpack.c.l.b16 %v271
    %v791 = vunpack.c.l.b16 %v272
    %v792 = vunpack.c.l.b16 %v273
    %v793 = vunpack.c.l.b16 %v274
    %v794 = vunpack.c.l.b16 %v275
    %v795 = vunpack.c.l.b16 %v276
    %v796 = vunpack.c.l.b16 %v277
    %v797 = vunpack.c.l.b16 %v278
    %v798 = vunpack.c.l.b16 %v279
    %v799 = vunpack.c.l.b16 %v280
    %v800 = vunpack.c.l.b16 %v281
    %v801 = vunpack.c.l.b16 %v282
    %v802 = vunpack.c.l.b16 %v283
    %v803 = vunpack.c.l.b16 %v284
    %v804 = vunpack.c.l.b16 %v285
    %v805 = vunpack.c.l.b16 %v286
    %v806 = vunpack.c.l.b16 %v287
    %v807 = vunpack.c.l.b16 %v288
    %v808 = vunpack.c.l.b16 %v289
    %v809 = vunpack.c.l.b16 %v290
    %v810 = vunpack.c.l.b16 %v291
    %v811 = vunpack.c.l.b16 %v292
    %v812 = vunpack.c.l.b16 %v293
    %v813 = vunpack.c.l.b16 %v294
    %v814 = vunpack.c.l.b16 %v295
    %v815 = vunpack.c.l.b16 %v296
    %v816 = vunpack.c.l.b16 %v297
    %v817 = vunpack.c.l.b16 %v298
    %v818 = vunpack.c.l.b16 %v299
    %v819 = vunpack.c.l.b16 %v300
    %v820 = vunpack.c.l.b16 %v301
    %v821 = vunpack.c.l.b16 %v302
    %v822 = vunpack.c.l.b16 %v303
    %v823 = vunpack.c.l.b16 %v304
    %v824 = vunpack.c.l.b16 %v305
    %v825 = vunpack.c.l.b16 %v306
    %v826 = vunpack.c.l.b16 %v307
    %v827 = vunpack.c.l.b16 %v308
    %v828 = vunpack.c.l.b16 %v309
    %v829 = vunpack.c.l.b16 %v310
    %v830 = vunpack.c.l.b16 %v311
    %v831 = vunpack.c.l.b16 %v312
    %v832 = vunpack.c.l.b16 %v313
    %v833 = vunpack.c.l.b16 %v314
    %v834 = vunpack.c.l.b16 %v315
    %v835 = vunpack.c.l.b16 %v316
    %v836 = vunpack.c.l.b16 %v317
    %v837 = vunpack.c.l.b16 %v318
    %v838 = vunpack.c.l.b16 %v319
    %v839 = vunpack.c.l.b16 %v320
    %v840 = vunpack.c.l.b16 %v321
    %v841 = vunpack.c.l.b16 %v322
    %v842 = vunpack.c.l.b16 %v323
    %v843 = vunpack.c.l.b16 %v324
    %v844 = vunpack.c.l.b16 %v325
    %v845 = vunpack.c.l.b16 %v326
    %v846 = vunpack.c.l.b16 %v327
    %v847 = vunpack.c.l.b16 %v328
    %v848 = vunpack.c.l.b16 %v329
    %v849 = vunpack.c.l.b16 %v330
    %v850 = vunpack.c.l.b16 %v331
    %v851 = vunpack.c.l.b16 %v332
    %v852 = vunpack.c.l.b16 %v333
    %v853 = vunpack.c.l.b16 %v334
    %v854 = vunpack.c.l.b16 %v335
    %v855 = vunpack.c.l.b16 %v336
    %v856 = vunpack.c.l.b16 %v337
    %v857 = vunpack.c.l.b16 %v338
    %v858 = vunpack.c.l.b16 %v339
    %v859 = vunpack.c.l.b16 %v340
    %v860 = vunpack.c.l.b16 %v341
    %v861 = vunpack.c.l.b16 %v342
    %v862 = vunpack.c.l.b16 %v343
    %v863 = vunpack.c.l.b16 %v344
    %v864 = vunpack.c.l.b16 %v345
    %v865 = vunpack.c.l.b16 %v346
    %v866 = vunpack.c.l.b16 %v347
    %v867 = vunpack.c.l.b16 %v348
    %v868 = vunpack.c.l.b16 %v349
    %v869 = vunpack.c.l.b16 %v350
    %v870 = vunpack.c.l.b16 %v351
    %v871 = vunpack.c.l.b16 %v352
    %v872 = vunpack.c.l.b16 %v353
    %v873 = vunpack.c.l.b16 %v354
    %v874 = vunpack.c.l.b16 %v355
    %v875 = vunpack.c.l.b16 %v356
    %v876 = vunpack.c.l.b16 %v357
    %v877 = vunpack.c.l.b16 %v358
    %v878 = vunpack.c.l.b16 %v359
    %v879 = vunpack.c.l.b16 %v360
    %v880 = vunpack.c.l.b16 %v361
    %v881 = vunpack.c.l.b16 %v362
    %v882 = vunpack.c.l.b16 %v363
    %v883 = vunpack.c.l.b16 %v364
    %v884 = vunpack.c.l.b16 %v365
    %v885 = vunpack.c.l.b16 %v366
    %v886 = vunpack.c.l.b16 %v367
    %v887 = vpack.c.b16 %v632, %v631
    %v888 = vpack.c.b16 %v634, %v633
    %v889 = vpack.c.b16 %v636, %v635
    %v890 = vpack.c.b16 %v638, %v637
    %v891 = vpack.c.b16 %v640, %v639
    %v892 = vpack.c.b16 %v642, %v641
    %v893 = vpack.c.b16 %v644, %v643
    %v894 = vpack.c.b16 %v646, %v645
    %v895 = vpack.c.b16 %v648, %v647
    %v896 = vpack.c.b16 %v650, %v649
    %v897 = vpack.c.b16 %v652, %v651
    %v898 = vpack.c.b16 %v654, %v653
    %v899 = vpack.c.b16 %v656, %v655
    %v900 = vpack.c.b16 %v658, %v657
    %v901 = vpack.c.b16 %v660, %v659
    %v902 = vpack.c.b16 %v662, %v661
    %v903 = vpack.c.b16 %v664, %v663
    %v904 = vpack.c.b16 %v666, %v665
    %v905 = vpack.c.b16 %v668, %v667
    %v906 = vpack.c.b16 %v670, %v669
    %v907 = vpack.c.b16 %v672, %v671
    %v908 = vpack.c.b16 %v674, %v673
    %v909 = vpack.c.b16 %v676, %v675
    %v910 = vpack.c.b16 %v678, %v677
    %v911 = vpack.c.b16 %v680, %v679
    %v912 = vpack.c.b16 %v682, %v681
    %v913 = vpack.c.b16 %v684, %v683
    %v914 = vpack.c.b16 %v686, %v685
    %v915 = vpack.c.b16 %v688, %v687
    %v916 = vpack.c.b16 %v690, %v689
    %v917 = vpack.c.b16 %v692, %v691
    %v918 = vpack.c.b16 %v694, %v693
    %v919 = vpack.c.b16 %v696, %v695
    %v920 = vpack.c.b16 %v698, %v697
    %v921 = vpack.c.b16 %v700, %v699
    %v922 = vpack.c.b16 %v702, %v701
    %v923 = vpack.c.b16 %v704, %v703
    %v924 = vpack.c.b16 %v706, %v705
    %v925 = vpack.c.b16 %v708, %v707
    %v926 = vpack.c.b16 %v710, %v709
    %v927 = vpack.c.b16 %v712, %v711
    %v928 = vpack.c.b16 %v714, %v713
    %v929 = vpack.c.b16 %v716, %v715
    %v930 = vpack.c.b16 %v718, %v717
    %v931 = vpack.c.b16 %v720, %v719
    %v932 = vpack.c.b16 %v722, %v721
    %v933 = vpack.c.b16 %v724, %v723
    %v934 = vpack.c.b16 %v726, %v725
    %v935 = vpack.c.b16 %v728, %v727
    %v936 = vpack.c.b16 %v730, %v729
    %v937 = vpack.c.b16 %v732, %v731
    %v938 = vpack.c.b16 %v734, %v733
    %v939 = vpack.c.b16 %v736, %v735
    %v940 = vpack.c.b16 %v738, %v737
    %v941 = vpack.c.b16 %v740, %v739
    %v942 = vpack.c.b16 %v742, %v741
    %v943 = vpack.c.b16 %v744, %v743
    %v944 = vpack.c.b16 %v746, %v745
    %v945 = vpack.c.b16 %v748, %v747
    %v946 = vpack.c.b16 %v750, %v749
    %v947 = vpack.c.b16 %v752, %v751
    %v948 = vpack.c.b16 %v754, %v753
    %v949 = vpack.c.b16 %v756, %v755
    %v950 = vpack.c.b16 %v758, %v757
    %v951 = vpack.c.b16 %v760, %v759
    %v952 = vpack.c.b16 %v762, %v761
    %v953 = vpack.c.b16 %v764, %v763
    %v954 = vpack.c.b16 %v766, %v765
    %v955 = vpack.c.b16 %v768, %v767
    %v956 = vpack.c.b16 %v770, %v769
    %v957 = vpack.c.b16 %v772, %v771
    %v958 = vpack.c.b16 %v774, %v773
    %v959 = vpack.c.b16 %v776, %v775
    %v960 = vpack.c.b16 %v778, %v777
    %v961 = vpack.c.b16 %v780, %v779
    %v962 = vpack.c.b16 %v782, %v781
    %v963 = vpack.c.b16 %v784, %v783
    %v964 = vpack.c.b16 %v786, %v785
    %v965 = vpack.c.b16 %v788, %v787
    %v966 = vpack.c.b16 %v790, %v789
    %v967 = vpack.c.b16 %v792, %v791
    %v968 = vpack.c.b16 %v794, %v793
    %v969 = vpack.c.b16 %v796, %v795
    %v970 = vpack.c.b16 %v798, %v797
    %v971 = vpack.c.b16 %v800, %v799
    %v972 = vpack.c.b16 %v802, %v801
    %v973 = vpack.c.b16 %v804, %v803
    %v974 = vpack.c.b16 %v806, %v805
    %v975 = vpack.c.b16 %v808, %v807
    %v976 = vpack.c.b16 %v810, %v809
    %v977 = vpack.c.b16 %v812, %v811
    %v978 = vpack.c.b16 %v814, %v813
    %v979 = vpack.c.b16 %v816, %v815
    %v980 = vpack.c.b16 %v818, %v817
    %v981 = vpack.c.b16 %v820, %v819
    %v982 = vpack.c.b16 %v822, %v821
    %v983 = vpack.c.b16 %v824, %v823
    %v984 = vpack.c.b16 %v826, %v825
    %v985 = vpack.c.b16 %v828, %v827
    %v986 = vpack.c.b16 %v830, %v829
    %v987 = vpack.c.b16 %v832, %v831
    %v988 = vpack.c.b16 %v834, %v833
    %v989 = vpack.c.b16 %v836, %v835
    %v990 = vpack.c.b16 %v838, %v837
    %v991 = vpack.c.b16 %v840, %v839
    %v992 = vpack.c.b16 %v842, %v841
    %v993 = vpack.c.b16 %v844, %v843
    %v994 = vpack.c.b16 %v846, %v845
    %v995 = vpack.c.b16 %v848, %v847
    %v996 = vpack.c.b16 %v850, %v849
    %v997 = vpack.c.b16 %v852, %v851
    %v998 = vpack.c.b16 %v854, %v853
    %v999 = vpack.c.b16 %v856, %v855
    %v1000 = vpack.c.b16 %v858, %v857
    %v1001 = vpack.c.b16 %v860, %v859
    %v1002 = vpack.c.b16 %v862, %v861
    %v1003 = vpack.c.b16 %v864, %v863
    %v1004 = vpack.c.b16 %v866, %v865
    %v1005 = vpack.c.b16 %v868, %v867
    %v1006 = vpack.c.b16 %v870, %v869
    %v1007 = vpack.c.b16 %v872, %v871
    %v1008 = vpack.c.b16 %v874, %v873
    %v1009 = vpack.c.b16 %v876, %v875
    %v1010 = vpack.c.b16 %v878, %v877
    %v1011 = vpack.c.b16 %v880, %v879
    %v1012 = vpack.c.b16 %v882, %v881
    %v1013 = vpack.c.b16 %v884, %v883
    %v1014 = vpack.c.b16 %v886, %v885
    %1143 = vmatprep.subr.bf16.mxu0 0
    %1144 = vmatpush1.bf16.msra.mxu0 %v894
    %1145 = vmatprep.subr.bf16.mxu0 0
    %1146 = vmatpush1.bf16.msra.mxu0 %v893
    %1147 = vmatprep.subr.bf16.mxu0 0
    %1148 = vmatpush1.bf16.msra.mxu0 %v892
    %1149 = vmatprep.subr.bf16.mxu0 0
    %1150 = vmatpush1.bf16.msra.mxu0 %v891
    %1151 = vmatprep.subr.bf16.mxu0 0
    %1152 = vmatpush1.bf16.msra.mxu0 %v890
    %1153 = vmatprep.subr.bf16.mxu0 0
    %1154 = vmatpush1.bf16.msra.mxu0 %v889
    %1155 = vmatprep.subr.bf16.mxu0 0
    %1156 = vmatpush1.bf16.msra.mxu0 %v888
    %1157 = vmatprep.subr.bf16.mxu0 0
    %1158 = vmatpush1.bf16.msra.mxu0 %v887
    %1159 = vmatprep.subr.bf16.mxu0 0
    %1160 = vmatpush2.bf16.msra.mxu0 %v902
    %1161 = vmatprep.subr.bf16.mxu0 0
    %1162 = vmatpush2.bf16.msra.mxu0 %v901
    %1163 = vmatprep.subr.bf16.mxu0 0
    %1164 = vmatpush2.bf16.msra.mxu0 %v900
    %1165 = vmatprep.subr.bf16.mxu0 0
    %1166 = vmatpush2.bf16.msra.mxu0 %v899
    %1167 = vmatprep.subr.bf16.mxu0 0
    %1168 = vmatpush2.bf16.msra.mxu0 %v898
    %1169 = vmatprep.subr.bf16.mxu0 0
    %1170 = vmatpush2.bf16.msra.mxu0 %v897
    %1171 = vmatprep.subr.bf16.mxu0 0
    %1172 = vmatpush2.bf16.msra.mxu0 %v896
    %1173 = vmatprep.subr.bf16.mxu0 0
    %1174 = vmatpush2.bf16.msra.mxu0 %v895
    %1175 = vmatprep.mubr.bf16.mxu0 %v97
    %1176 = vmatmul.mubr.bf16.gmra.mxu0 %v96
    %v1177 = vpop.f32.mrf.mxu0
    %v1178 = vadd.f32 %v373, %v1177
    %v1179 = vpop.f32.mrf.mxu0
    %v1180 = vpop.f32.mrf.mxu0
    %v1181 = vadd.f32 %v373, %v1180
    %v1182 = vpop.f32.mrf.mxu0
    %1183 = vdwg.mxu0
    %1184 = vmatprep.subr.bf16.mxu0 0
    %1185 = vmatpush1.bf16.msra.mxu0 %v910
    %1186 = vmatprep.subr.bf16.mxu0 0
    %1187 = vmatpush1.bf16.msra.mxu0 %v909
    %1188 = vmatprep.subr.bf16.mxu0 0
    %1189 = vmatpush1.bf16.msra.mxu0 %v908
    %1190 = vmatprep.subr.bf16.mxu0 0
    %1191 = vmatpush1.bf16.msra.mxu0 %v907
    %1192 = vmatprep.subr.bf16.mxu0 0
    %1193 = vmatpush1.bf16.msra.mxu0 %v906
    %1194 = vmatprep.subr.bf16.mxu0 0
    %1195 = vmatpush1.bf16.msra.mxu0 %v905
    %1196 = vmatprep.subr.bf16.mxu0 0
    %1197 = vmatpush1.bf16.msra.mxu0 %v904
    %1198 = vmatprep.subr.bf16.mxu0 0
    %1199 = vmatpush1.bf16.msra.mxu0 %v903
    %1200 = vmatprep.subr.bf16.mxu0 0
    %1201 = vmatpush2.bf16.msra.mxu0 %v918
    %1202 = vmatprep.subr.bf16.mxu0 0
    %1203 = vmatpush2.bf16.msra.mxu0 %v917
    %1204 = vmatprep.subr.bf16.mxu0 0
    %1205 = vmatpush2.bf16.msra.mxu0 %v916
    %1206 = vmatprep.subr.bf16.mxu0 0
    %1207 = vmatpush2.bf16.msra.mxu0 %v915
    %1208 = vmatprep.subr.bf16.mxu0 0
    %1209 = vmatpush2.bf16.msra.mxu0 %v914
    %1210 = vmatprep.subr.bf16.mxu0 0
    %1211 = vmatpush2.bf16.msra.mxu0 %v913
    %1212 = vmatprep.subr.bf16.mxu0 0
    %1213 = vmatpush2.bf16.msra.mxu0 %v912
    %1214 = vmatprep.subr.bf16.mxu0 0
    %1215 = vmatpush2.bf16.msra.mxu0 %v911
    %1216 = vmatprep.mubr.bf16.mxu0 %v99
    %1217 = vmatmul.mubr.bf16.gmra.mxu0 %v98
    %v1218 = vpop.f32.mrf.mxu0
    %v1219 = vadd.f32 %v1178, %v1218
    %v1220 = vpop.f32.mrf.mxu0
    %v1221 = vpop.f32.mrf.mxu0
    %v1222 = vadd.f32 %v1181, %v1221
    %v1223 = vpop.f32.mrf.mxu0
    %1224 = vdwg.mxu0
    %1225 = vmatprep.subr.bf16.mxu0 0
    %1226 = vmatpush1.bf16.msra.mxu0 %v926
    %1227 = vmatprep.subr.bf16.mxu0 0
    %1228 = vmatpush1.bf16.msra.mxu0 %v925
    %1229 = vmatprep.subr.bf16.mxu0 0
    %1230 = vmatpush1.bf16.msra.mxu0 %v924
    %1231 = vmatprep.subr.bf16.mxu0 0
    %1232 = vmatpush1.bf16.msra.mxu0 %v923
    %1233 = vmatprep.subr.bf16.mxu0 0
    %1234 = vmatpush1.bf16.msra.mxu0 %v922
    %1235 = vmatprep.subr.bf16.mxu0 0
    %1236 = vmatpush1.bf16.msra.mxu0 %v921
    %1237 = vmatprep.subr.bf16.mxu0 0
    %1238 = vmatpush1.bf16.msra.mxu0 %v920
    %1239 = vmatprep.subr.bf16.mxu0 0
    %1240 = vmatpush1.bf16.msra.mxu0 %v919
    %1241 = vmatprep.subr.bf16.mxu0 0
    %1242 = vmatpush2.bf16.msra.mxu0 %v934
    %1243 = vmatprep.subr.bf16.mxu0 0
    %1244 = vmatpush2.bf16.msra.mxu0 %v933
    %1245 = vmatprep.subr.bf16.mxu0 0
    %1246 = vmatpush2.bf16.msra.mxu0 %v932
    %1247 = vmatprep.subr.bf16.mxu0 0
    %1248 = vmatpush2.bf16.msra.mxu0 %v931
    %1249 = vmatprep.subr.bf16.mxu0 0
    %1250 = vmatpush2.bf16.msra.mxu0 %v930
    %1251 = vmatprep.subr.bf16.mxu0 0
    %1252 = vmatpush2.bf16.msra.mxu0 %v929
    %1253 = vmatprep.subr.bf16.mxu0 0
    %1254 = vmatpush2.bf16.msra.mxu0 %v928
    %1255 = vmatprep.subr.bf16.mxu0 0
    %1256 = vmatpush2.bf16.msra.mxu0 %v927
    %1257 = vmatprep.mubr.bf16.mxu0 %v101
    %1258 = vmatmul.mubr.bf16.gmra.mxu0 %v100
    %v1259 = vpop.f32.mrf.mxu0
    %v1260 = vadd.f32 %v1219, %v1259
    %v1261 = vpop.f32.mrf.mxu0
    %v1262 = vpop.f32.mrf.mxu0
    %v1263 = vadd.f32 %v1222, %v1262
    %v1264 = vpop.f32.mrf.mxu0
    %1265 = vdwg.mxu0
    %1266 = vmatprep.subr.bf16.mxu0 0
    %1267 = vmatpush1.bf16.msra.mxu0 %v942
    %1268 = vmatprep.subr.bf16.mxu0 0
    %1269 = vmatpush1.bf16.msra.mxu0 %v941
    %1270 = vmatprep.subr.bf16.mxu0 0
    %1271 = vmatpush1.bf16.msra.mxu0 %v940
    %1272 = vmatprep.subr.bf16.mxu0 0
    %1273 = vmatpush1.bf16.msra.mxu0 %v939
    %1274 = vmatprep.subr.bf16.mxu0 0
    %1275 = vmatpush1.bf16.msra.mxu0 %v938
    %1276 = vmatprep.subr.bf16.mxu0 0
    %1277 = vmatpush1.bf16.msra.mxu0 %v937
    %1278 = vmatprep.subr.bf16.mxu0 0
    %1279 = vmatpush1.bf16.msra.mxu0 %v936
    %1280 = vmatprep.subr.bf16.mxu0 0
    %1281 = vmatpush1.bf16.msra.mxu0 %v935
    %1282 = vmatprep.subr.bf16.mxu0 0
    %1283 = vmatpush2.bf16.msra.mxu0 %v950
    %1284 = vmatprep.subr.bf16.mxu0 0
    %1285 = vmatpush2.bf16.msra.mxu0 %v949
    %1286 = vmatprep.subr.bf16.mxu0 0
    %1287 = vmatpush2.bf16.msra.mxu0 %v948
    %1288 = vmatprep.subr.bf16.mxu0 0
    %1289 = vmatpush2.bf16.msra.mxu0 %v947
    %1290 = vmatprep.subr.bf16.mxu0 0
    %1291 = vmatpush2.bf16.msra.mxu0 %v946
    %1292 = vmatprep.subr.bf16.mxu0 0
    %1293 = vmatpush2.bf16.msra.mxu0 %v945
    %1294 = vmatprep.subr.bf16.mxu0 0
    %1295 = vmatpush2.bf16.msra.mxu0 %v944
    %1296 = vmatprep.subr.bf16.mxu0 0
    %1297 = vmatpush2.bf16.msra.mxu0 %v943
    %1298 = vmatprep.mubr.bf16.mxu0 %v103
    %1299 = vmatmul.mubr.bf16.gmra.mxu0 %v102
    %v1300 = vpop.f32.mrf.mxu0
    %v1301 = vadd.f32 %v1260, %v1300
    %v1302 = vpop.f32.mrf.mxu0
    %v1303 = vpop.f32.mrf.mxu0
    %v1304 = vadd.f32 %v1263, %v1303
    %v1305 = vpop.f32.mrf.mxu0
    %1306 = vdwg.mxu0
    %1307 = vmatprep.subr.bf16.mxu0 0
    %1308 = vmatpush1.bf16.msra.mxu0 %v958
    %1309 = vmatprep.subr.bf16.mxu0 0
    %1310 = vmatpush1.bf16.msra.mxu0 %v957
    %1311 = vmatprep.subr.bf16.mxu0 0
    %1312 = vmatpush1.bf16.msra.mxu0 %v956
    %1313 = vmatprep.subr.bf16.mxu0 0
    %1314 = vmatpush1.bf16.msra.mxu0 %v955
    %1315 = vmatprep.subr.bf16.mxu0 0
    %1316 = vmatpush1.bf16.msra.mxu0 %v954
    %1317 = vmatprep.subr.bf16.mxu0 0
    %1318 = vmatpush1.bf16.msra.mxu0 %v953
    %1319 = vmatprep.subr.bf16.mxu0 0
    %1320 = vmatpush1.bf16.msra.mxu0 %v952
    %1321 = vmatprep.subr.bf16.mxu0 0
    %1322 = vmatpush1.bf16.msra.mxu0 %v951
    %1323 = vmatprep.subr.bf16.mxu0 0
    %1324 = vmatpush2.bf16.msra.mxu0 %v966
    %1325 = vmatprep.subr.bf16.mxu0 0
    %1326 = vmatpush2.bf16.msra.mxu0 %v965
    %1327 = vmatprep.subr.bf16.mxu0 0
    %1328 = vmatpush2.bf16.msra.mxu0 %v964
    %1329 = vmatprep.subr.bf16.mxu0 0
    %1330 = vmatpush2.bf16.msra.mxu0 %v963
    %1331 = vmatprep.subr.bf16.mxu0 0
    %1332 = vmatpush2.bf16.msra.mxu0 %v962
    %1333 = vmatprep.subr.bf16.mxu0 0
    %1334 = vmatpush2.bf16.msra.mxu0 %v961
    %1335 = vmatprep.subr.bf16.mxu0 0
    %1336 = vmatpush2.bf16.msra.mxu0 %v960
    %1337 = vmatprep.subr.bf16.mxu0 0
    %1338 = vmatpush2.bf16.msra.mxu0 %v959
    %1339 = vmatprep.mubr.bf16.mxu0 %v105
    %1340 = vmatmul.mubr.bf16.gmra.mxu0 %v104
    %v1341 = vpop.f32.mrf.mxu0
    %v1342 = vadd.f32 %v1301, %v1341
    %v1343 = vpop.f32.mrf.mxu0
    %v1344 = vpop.f32.mrf.mxu0
    %v1345 = vadd.f32 %v1304, %v1344
    %v1346 = vpop.f32.mrf.mxu0
    %1347 = vdwg.mxu0
    %1348 = vmatprep.subr.bf16.mxu0 0
    %1349 = vmatpush1.bf16.msra.mxu0 %v974
    %1350 = vmatprep.subr.bf16.mxu0 0
    %1351 = vmatpush1.bf16.msra.mxu0 %v973
    %1352 = vmatprep.subr.bf16.mxu0 0
    %1353 = vmatpush1.bf16.msra.mxu0 %v972
    %1354 = vmatprep.subr.bf16.mxu0 0
    %1355 = vmatpush1.bf16.msra.mxu0 %v971
    %1356 = vmatprep.subr.bf16.mxu0 0
    %1357 = vmatpush1.bf16.msra.mxu0 %v970
    %1358 = vmatprep.subr.bf16.mxu0 0
    %1359 = vmatpush1.bf16.msra.mxu0 %v969
    %1360 = vmatprep.subr.bf16.mxu0 0
    %1361 = vmatpush1.bf16.msra.mxu0 %v968
    %1362 = vmatprep.subr.bf16.mxu0 0
    %1363 = vmatpush1.bf16.msra.mxu0 %v967
    %1364 = vmatprep.subr.bf16.mxu0 0
    %1365 = vmatpush2.bf16.msra.mxu0 %v982
    %1366 = vmatprep.subr.bf16.mxu0 0
    %1367 = vmatpush2.bf16.msra.mxu0 %v981
    %1368 = vmatprep.subr.bf16.mxu0 0
    %1369 = vmatpush2.bf16.msra.mxu0 %v980
    %1370 = vmatprep.subr.bf16.mxu0 0
    %1371 = vmatpush2.bf16.msra.mxu0 %v979
    %1372 = vmatprep.subr.bf16.mxu0 0
    %1373 = vmatpush2.bf16.msra.mxu0 %v978
    %1374 = vmatprep.subr.bf16.mxu0 0
    %1375 = vmatpush2.bf16.msra.mxu0 %v977
    %1376 = vmatprep.subr.bf16.mxu0 0
    %1377 = vmatpush2.bf16.msra.mxu0 %v976
    %1378 = vmatprep.subr.bf16.mxu0 0
    %1379 = vmatpush2.bf16.msra.mxu0 %v975
    %1380 = vmatprep.mubr.bf16.mxu0 %v107
    %1381 = vmatmul.mubr.bf16.gmra.mxu0 %v106
    %v1382 = vpop.f32.mrf.mxu0
    %v1383 = vadd.f32 %v1342, %v1382
    %v1384 = vpop.f32.mrf.mxu0
    %v1385 = vpop.f32.mrf.mxu0
    %v1386 = vadd.f32 %v1345, %v1385
    %v1387 = vpop.f32.mrf.mxu0
    %1388 = vdwg.mxu0
    %1389 = vmatprep.subr.bf16.mxu0 0
    %1390 = vmatpush1.bf16.msra.mxu0 %v990
    %1391 = vmatprep.subr.bf16.mxu0 0
    %1392 = vmatpush1.bf16.msra.mxu0 %v989
    %1393 = vmatprep.subr.bf16.mxu0 0
    %1394 = vmatpush1.bf16.msra.mxu0 %v988
    %1395 = vmatprep.subr.bf16.mxu0 0
    %1396 = vmatpush1.bf16.msra.mxu0 %v987
    %1397 = vmatprep.subr.bf16.mxu0 0
    %1398 = vmatpush1.bf16.msra.mxu0 %v986
    %1399 = vmatprep.subr.bf16.mxu0 0
    %1400 = vmatpush1.bf16.msra.mxu0 %v985
    %1401 = vmatprep.subr.bf16.mxu0 0
    %1402 = vmatpush1.bf16.msra.mxu0 %v984
    %1403 = vmatprep.subr.bf16.mxu0 0
    %1404 = vmatpush1.bf16.msra.mxu0 %v983
    %1405 = vmatprep.subr.bf16.mxu0 0
    %1406 = vmatpush2.bf16.msra.mxu0 %v998
    %1407 = vmatprep.subr.bf16.mxu0 0
    %1408 = vmatpush2.bf16.msra.mxu0 %v997
    %1409 = vmatprep.subr.bf16.mxu0 0
    %1410 = vmatpush2.bf16.msra.mxu0 %v996
    %1411 = vmatprep.subr.bf16.mxu0 0
    %1412 = vmatpush2.bf16.msra.mxu0 %v995
    %1413 = vmatprep.subr.bf16.mxu0 0
    %1414 = vmatpush2.bf16.msra.mxu0 %v994
    %1415 = vmatprep.subr.bf16.mxu0 0
    %1416 = vmatpush2.bf16.msra.mxu0 %v993
    %1417 = vmatprep.subr.bf16.mxu0 0
    %1418 = vmatpush2.bf16.msra.mxu0 %v992
    %1419 = vmatprep.subr.bf16.mxu0 0
    %1420 = vmatpush2.bf16.msra.mxu0 %v991
    %1421 = vmatprep.mubr.bf16.mxu0 %v109
    %1422 = vmatmul.mubr.bf16.gmra.mxu0 %v108
    %v1423 = vpop.f32.mrf.mxu0
    %v1424 = vadd.f32 %v1383, %v1423
    %v1425 = vpop.f32.mrf.mxu0
    %v1426 = vpop.f32.mrf.mxu0
    %v1427 = vadd.f32 %v1386, %v1426
    %v1428 = vpop.f32.mrf.mxu0
    %1429 = vdwg.mxu0
    %1430 = vmatprep.subr.bf16.mxu0 0
    %1431 = vmatpush1.bf16.msra.mxu0 %v1006
    %1432 = vmatprep.subr.bf16.mxu0 0
    %1433 = vmatpush1.bf16.msra.mxu0 %v1005
    %1434 = vmatprep.subr.bf16.mxu0 0
    %1435 = vmatpush1.bf16.msra.mxu0 %v1004
    %1436 = vmatprep.subr.bf16.mxu0 0
    %1437 = vmatpush1.bf16.msra.mxu0 %v1003
    %1438 = vmatprep.subr.bf16.mxu0 0
    %1439 = vmatpush1.bf16.msra.mxu0 %v1002
    %1440 = vmatprep.subr.bf16.mxu0 0
    %1441 = vmatpush1.bf16.msra.mxu0 %v1001
    %1442 = vmatprep.subr.bf16.mxu0 0
    %1443 = vmatpush1.bf16.msra.mxu0 %v1000
    %1444 = vmatprep.subr.bf16.mxu0 0
    %1445 = vmatpush1.bf16.msra.mxu0 %v999
    %1446 = vmatprep.subr.bf16.mxu0 0
    %1447 = vmatpush2.bf16.msra.mxu0 %v1014
    %1448 = vmatprep.subr.bf16.mxu0 0
    %1449 = vmatpush2.bf16.msra.mxu0 %v1013
    %1450 = vmatprep.subr.bf16.mxu0 0
    %1451 = vmatpush2.bf16.msra.mxu0 %v1012
    %1452 = vmatprep.subr.bf16.mxu0 0
    %1453 = vmatpush2.bf16.msra.mxu0 %v1011
    %1454 = vmatprep.subr.bf16.mxu0 0
    %1455 = vmatpush2.bf16.msra.mxu0 %v1010
    %1456 = vmatprep.subr.bf16.mxu0 0
    %1457 = vmatpush2.bf16.msra.mxu0 %v1009
    %1458 = vmatprep.subr.bf16.mxu0 0
    %1459 = vmatpush2.bf16.msra.mxu0 %v1008
    %1460 = vmatprep.subr.bf16.mxu0 0
    %1461 = vmatpush2.bf16.msra.mxu0 %v1007
    %1462 = vmatprep.mubr.bf16.mxu0 %v111
    %1463 = vmatmul.mubr.bf16.gmra.mxu0 %v110
    %v1464 = vpop.f32.mrf.mxu0
    %v1465 = vadd.f32 %v1424, %v1464
    %v1466 = vpop.f32.mrf.mxu0
    %v1467 = vpop.f32.mrf.mxu0
    %v1468 = vadd.f32 %v1427, %v1467
    %v1469 = vpop.f32.mrf.mxu0
    %1470 = vdwg.mxu0
    %v1471 = vmax.f32 %v1465, 0.0
    %v1472 = vmax.f32 %v1468, 0.0
    %v1473 = vpack.c.bf16 %v1472, %v1471
    %v1474 = vld [vmem:[%s3] sm:$0xf]
    %v1475 = vld [vmem:[%s3 + $0x4] sm:$0xf]
    %v1476 = vld [vmem:[%s3 + $0x8] sm:$0xf]
    %v1477 = vld [vmem:[%s3 + $0xc] sm:$0xf]
    %v1478 = vld [vmem:[%s3 + $0x10] sm:$0xf]
    %v1479 = vld [vmem:[%s3 + $0x14] sm:$0xf]
    %v1480 = vld [vmem:[%s3 + $0x18] sm:$0xf]
    %v1481 = vld [vmem:[%s3 + $0x1c] sm:$0xf]
    %v1482 = vld [vmem:[%s3 + $0x20] sm:$0xf]
    %v1483 = vld [vmem:[%s3 + $0x24] sm:$0xf]
    %v1484 = vld [vmem:[%s3 + $0x28] sm:$0xf]
    %v1485 = vld [vmem:[%s3 + $0x2c] sm:$0xf]
    %v1486 = vld [vmem:[%s3 + $0x30] sm:$0xf]
    %v1487 = vld [vmem:[%s3 + $0x34] sm:$0xf]
    %v1488 = vld [vmem:[%s3 + $0x38] sm:$0xf]
    %v1489 = vld [vmem:[%s3 + $0x3c] sm:$0xf]
    %v1490 = vld [vmem:[%s4] sm:$0x1]
    %v1492 = vlaneseq
    %v1493 = vshrl.u32 %v1492, 7
    %v1494 = vsub.s32 0, %v1493
    %v1495 = vrot.slane %v1490, %v1494
    %v1513 = vunpack.c.l.b16 %v1474
    %v1514 = vunpack.c.l.b16 %v1475
    %v1515 = vunpack.c.l.b16 %v1476
    %v1516 = vunpack.c.l.b16 %v1477
    %v1517 = vunpack.c.l.b16 %v1478
    %v1518 = vunpack.c.l.b16 %v1479
    %v1519 = vunpack.c.l.b16 %v1480
    %v1520 = vunpack.c.l.b16 %v1481
    %v1521 = vunpack.c.l.b16 %v1482
    %v1522 = vunpack.c.l.b16 %v1483
    %v1523 = vunpack.c.l.b16 %v1484
    %v1524 = vunpack.c.l.b16 %v1485
    %v1525 = vunpack.c.l.b16 %v1486
    %v1526 = vunpack.c.l.b16 %v1487
    %v1527 = vunpack.c.l.b16 %v1488
    %v1528 = vunpack.c.l.b16 %v1489
    %v1529 = vpack.c.b16 %v1514, %v1513
    %v1530 = vpack.c.b16 %v1516, %v1515
    %v1531 = vpack.c.b16 %v1518, %v1517
    %v1532 = vpack.c.b16 %v1520, %v1519
    %v1533 = vpack.c.b16 %v1522, %v1521
    %v1534 = vpack.c.b16 %v1524, %v1523
    %v1535 = vpack.c.b16 %v1526, %v1525
    %v1536 = vpack.c.b16 %v1528, %v1527
    %1545 = vmatprep.subr.bf16.mxu0 0
    %1546 = vmatpush1.bf16.msra.mxu0 %v1536
    %1547 = vmatprep.subr.bf16.mxu0 0
    %1548 = vmatpush1.bf16.msra.mxu0 %v1535
    %1549 = vmatprep.subr.bf16.mxu0 0
    %1550 = vmatpush1.bf16.msra.mxu0 %v1534
    %1551 = vmatprep.subr.bf16.mxu0 0
    %1552 = vmatpush1.bf16.msra.mxu0 %v1533
    %1553 = vmatprep.subr.bf16.mxu0 0
    %1554 = vmatpush1.bf16.msra.mxu0 %v1532
    %1555 = vmatprep.subr.bf16.mxu0 0
    %1556 = vmatpush1.bf16.msra.mxu0 %v1531
    %1557 = vmatprep.subr.bf16.mxu0 0
    %1558 = vmatpush1.bf16.msra.mxu0 %v1530
    %1559 = vmatprep.subr.bf16.mxu0 0
    %1560 = vmatpush1.bf16.msra.mxu0 %v1529
    %1561 = vmatprep.subr.bf16.mxu0 0
    %1562 = vmatpush2.bf16.msra.mxu0 0
    %1563 = vmatprep.subr.bf16.mxu0 0
    %1564 = vmatpush2.bf16.msra.mxu0 0
    %1565 = vmatprep.subr.bf16.mxu0 0
    %1566 = vmatpush2.bf16.msra.mxu0 0
    %1567 = vmatprep.subr.bf16.mxu0 0
    %1568 = vmatpush2.bf16.msra.mxu0 0
    %1569 = vmatprep.subr.bf16.mxu0 0
    %1570 = vmatpush2.bf16.msra.mxu0 0
    %1571 = vmatprep.subr.bf16.mxu0 0
    %1572 = vmatpush2.bf16.msra.mxu0 0
    %1573 = vmatprep.subr.bf16.mxu0 0
    %1574 = vmatpush2.bf16.msra.mxu0 0
    %1575 = vmatprep.subr.bf16.mxu0 0
    %1576 = vmatpush2.bf16.msra.mxu0 0
    %1577 = vmatprep.mubr.bf16.mxu0 0
    %1578 = vmatmul.mubr.bf16.gmra.mxu0 %v1473
    %v1579 = vpop.f32.mrf.mxu0
    %v1580 = vadd.f32 %v1495, %v1579
    %v1581 = vpop.f32.mrf.mxu0
    %v1582 = vpop.f32.mrf.mxu0
    %v1583 = vadd.f32 %v1495, %v1582
    %v1584 = vpop.f32.mrf.mxu0
    %1585 = vdwg.mxu0
    %v1586 = vmax.f32 %v1580, 0.0
    %v1587 = vmax.f32 %v1583, 0.0
    %v1588 = vpack.c.bf16 %v1587, %v1586
    %v1589 = vld [vmem:[%s5] sm:$0xf]
    %v1590 = vld [vmem:[%s5 + $0x4] sm:$0xf]
    %v1591 = vld [vmem:[%s5 + $0x8] sm:$0xf]
    %v1592 = vld [vmem:[%s5 + $0xc] sm:$0xf]
    %v1593 = vld [vmem:[%s5 + $0x10] sm:$0xf]
    %v1594 = vld [vmem:[%s5 + $0x14] sm:$0xf]
    %v1595 = vld [vmem:[%s5 + $0x18] sm:$0xf]
    %v1596 = vld [vmem:[%s5 + $0x1c] sm:$0xf]
    %v1597 = vld [vmem:[%s6] sm:$0x1]
    %v1599 = vlaneseq
    %v1600 = vshrl.u32 %v1599, 7
    %v1601 = vsub.s32 0, %v1600
    %v1602 = vrot.slane %v1597, %v1601
    %v1612 = vunpack.c.l.b16 %v1589
    %v1613 = vunpack.c.l.b16 %v1590
    %v1614 = vunpack.c.l.b16 %v1591
    %v1615 = vunpack.c.l.b16 %v1592
    %v1616 = vunpack.c.l.b16 %v1593
    %v1617 = vunpack.c.l.b16 %v1594
    %v1618 = vunpack.c.l.b16 %v1595
    %v1619 = vunpack.c.l.b16 %v1596
    %v1620 = vpack.c.b16 %v1613, %v1612
    %v1621 = vpack.c.b16 %v1615, %v1614
    %v1622 = vpack.c.b16 %v1617, %v1616
    %v1623 = vpack.c.b16 %v1619, %v1618
    %vm1628 = vcmask 523264
    %v1630 = vsel %vm1628, %v1588, 0
    %1632 = vmatprep.subr.bf16.mxu0 0
    %1633 = vmatpush1.bf16.msra.mxu0 0
    %1634 = vmatprep.subr.bf16.mxu0 0
    %1635 = vmatpush1.bf16.msra.mxu0 0
    %1636 = vmatprep.subr.bf16.mxu0 0
    %1637 = vmatpush1.bf16.msra.mxu0 0
    %1638 = vmatprep.subr.bf16.mxu0 0
    %1639 = vmatpush1.bf16.msra.mxu0 0
    %1640 = vmatprep.subr.bf16.mxu0 0
    %1641 = vmatpush1.bf16.msra.mxu0 %v1623
    %1642 = vmatprep.subr.bf16.mxu0 0
    %1643 = vmatpush1.bf16.msra.mxu0 %v1622
    %1644 = vmatprep.subr.bf16.mxu0 0
    %1645 = vmatpush1.bf16.msra.mxu0 %v1621
    %1646 = vmatprep.subr.bf16.mxu0 0
    %1647 = vmatpush1.bf16.msra.mxu0 %v1620
    %1648 = vmatprep.subr.bf16.mxu0 0
    %1649 = vmatpush2.bf16.msra.mxu0 0
    %1650 = vmatprep.subr.bf16.mxu0 0
    %1651 = vmatpush2.bf16.msra.mxu0 0
    %1652 = vmatprep.subr.bf16.mxu0 0
    %1653 = vmatpush2.bf16.msra.mxu0 0
    %1654 = vmatprep.subr.bf16.mxu0 0
    %1655 = vmatpush2.bf16.msra.mxu0 0
    %1656 = vmatprep.subr.bf16.mxu0 0
    %1657 = vmatpush2.bf16.msra.mxu0 0
    %1658 = vmatprep.subr.bf16.mxu0 0
    %1659 = vmatpush2.bf16.msra.mxu0 0
    %1660 = vmatprep.subr.bf16.mxu0 0
    %1661 = vmatpush2.bf16.msra.mxu0 0
    %1662 = vmatprep.subr.bf16.mxu0 0
    %1663 = vmatpush2.bf16.msra.mxu0 0
    %1664 = vmatprep.mubr.bf16.mxu0 0
    %1665 = vmatmul.mubr.bf16.gmra.mxu0 %v1630
    %v1666 = vpop.f32.mrf.mxu0
    %v1667 = vadd.f32 %v1602, %v1666
    %v1668 = vpop.f32.mrf.mxu0
    %v1669 = vpop.f32.mrf.mxu0
    %v1670 = vadd.f32 %v1602, %v1669
    %v1671 = vpop.f32.mrf.mxu0
    %1672 = vdwg.mxu0
    %v1673 = vmax.f32 %v1667, 0.0
    %v1674 = vmax.f32 %v1670, 0.0
    %v1675 = vld [vmem:[%s7] sm:$0x1]
    %v1677 = vlaneseq
    %v1678 = vshrl.u32 %v1677, 7
    %v1679 = vsub.s32 0, %v1678
    %v1680 = vrot.slane %v1675, %v1679
    %v1682 = vmul.f32 %v1673, %v1680
    %v1683 = vmul.f32 %v1674, %v1680
    %vm1684 = vcmask 261120
    %v1685 = vsel %vm1684, %v1682, 0.0
    %1686 = vadd.xlane.f32.xlu0 %v1685
    %v1687 = vpop.xlane.xlu0 %1686
    %v1688 = vsel %vm1684, %v1683, 0.0
    %1689 = vadd.xlane.f32.xlu0 %v1688
    %v1690 = vpop.xlane.xlu0 %1689
    %v1691 = vld [vmem:[#allocation2] sm:$0x1]
    %v1693 = vlaneseq
    %v1694 = vshrl.u32 %v1693, 7
    %v1695 = vsub.s32 0, %v1694
    %v1696 = vrot.slane %v1691, %v1695
    %v1698 = vadd.f32 %v1687, %v1696
    %v1699 = vadd.f32 %v1690, %v1696
    %v1700 = vsub.f32 0.0, %v1698
    %v1701 = vsub.f32 0.0, %v1699
    %v1702 = vmul.f32 %v1700, 1.442695
    %v1703 = vpow.pop %v1702
    %v1704 = vmul.f32 %v1701, 1.442695
    %v1705 = vpow.pop %v1704
    %v1706 = vadd.f32 %v1703, 1.0
    %v1707 = vadd.f32 %v1705, 1.0
    %v1708 = vrcp.pop %v1706
    %v1709 = vrcp.pop %v1707
    %1712 = vset.pattern.permute.xlu0 0
    %1713 = vperm.xlu0 %1712, %v1708
    %v1714 = vpop.permute.xlu0 %1713
    %1715 = vset.pattern.permute.xlu0 0
    %1716 = vperm.xlu0 %1715, %v1709
    %v1717 = vpop.permute.xlu0 %1716
    %v1718 = vlaneseq
    %v1719 = vand.u32 %v1718, 127
    %v1720 = vlaneseq
    %v1721 = vshrl.u32 %v1720, 7
    %v1722 = vsub.s32 %v1719, %v1721
    %v1723 = vrot.slane %v1714, %v1722
    %v1724 = vadd.s32 %v1719, 4294967288
    %v1725 = vlaneseq
    %v1726 = vshrl.u32 %v1725, 7
    %v1727 = vsub.s32 %v1724, %v1726
    %v1728 = vrot.slane %v1717, %v1727
    %vm1729 = vcmask 130112
    %v1730 = vsel %vm1729, %v1728, %v1723
    %vm1732 = vcmask 122880
    %1733 = vst.msk [vmem:[#allocation8] sm:$0x1] %vm1732, %v1730
    // Predicated region
    $region46: #{tpu_custom_call.1} parent=1 // pred_check
      _
    $region47: #{tpu_custom_call.1} parent=1 // pred_check_branch
      %1735 = sbr.rel (0) target = $region49
    $region48: #{tpu_custom_call.1} parent=1 // pred_region
      %s1737 = ssub.s32 16, 16
      %1738 = vsyncadd [#allocation5], %s1737
      %s1740 = sshll.u32 [#allocation8], 4
      %s1741 = int_to_ptr.vmem [resolvable:$true] %s1740
      %1743 = dma.vmem_to_hbm [thread:$0]  %s1741, 16, %s9, [#allocation5]
    $region49: #{tpu_custom_call.1} parent=1 // pred_fallthru
      _
    // Predicated region
    $region50: #{tpu_custom_call.1} parent=1 // pred_check
      _
    $region51: #{tpu_custom_call.1} parent=1 // pred_check_branch
      %1745 = sbr.rel (0) target = $region53
    $region52: #{tpu_custom_call.1} parent=1 // pred_region
      %1746 = dma.done [#allocation5], 16
    $region53: #{tpu_custom_call.1} parent=1 // pred_fallthru
      _
    %1747 = vsyncpa [#allocation4], 1
    %1748 = vsyncpa [#allocation7], 1
    %1749 = vsyncpa [#allocation5], 1

// kernel: tpu_custom_call.1
$region0: #{tpu_custom_call.1}
  #allocation0 [shape = 'u32[]', space=smem, size = 0x4, offset = 0x4, fixed_abs, tag = 'smem constant byte address 0x4 - core index']
  #allocation1 [shape = 'u32[144,128]{1,0:T(1,128)}', space=vmem, size = 0x12000, scoped, tag = 'internal scratch']
  #allocation2 [shape = 'f32[1,1]{1,0:T(1,128)S(1)}', space=vmem, size = 0x200, scoped, tag = 'scoped memory for tpu_custom_call.1']
  %s0 = inlined_call_operand.hbm [shape: f32[16,2048], index: 0, kind: input, shape index: {}]
  %s1 = inlined_call_operand.hbm [shape: bf16[2048,128], index: 1, kind: input, shape index: {}]
  %s2 = inlined_call_operand.vmem [shape: f32[1,128], index: 2, kind: input, shape index: {}]
  %s3 = inlined_call_operand.vmem [shape: bf16[128,64], index: 3, kind: input, shape index: {}]
  %s4 = inlined_call_operand.vmem [shape: f32[1,64], index: 4, kind: input, shape index: {}]
  %s5 = inlined_call_operand.vmem [shape: bf16[64,32], index: 5, kind: input, shape index: {}]
  %s6 = inlined_call_operand.vmem [shape: f32[1,32], index: 6, kind: input, shape index: {}]
  %s7 = inlined_call_operand.vmem [shape: f32[1,32], index: 7, kind: input, shape index: {}]
  %s8 = inlined_call_operand.<no memory space> [shape: f32[1,1], index: 8, kind: input, shape index: {}]
  %s9 = inlined_call_operand.hbm [shape: f32[1,16], index: 9, kind: output, shape index: {}]
  %s10 = sld [smem:[#allocation0]]
  $region54: #{tpu_custom_call.1} parent=0
    _
  %s12 = ssub.s32 1, %s10
  %s13 = scalar_select 0, %s12, %s10
  %v14 = vstv %s8
  %15 = vst [vmem:[#allocation2] sm:$0x1] %v14
  $region1: #{tpu_custom_call.1} parent=0
    #allocation3 [shape = 'u8[131072]{0}', space=vmem, size = 0x20000, scoped, tag = 'input window, operand 0, single buffered']
    #allocation4 [shape = 's32[1]{0}', space=sflag, size = 0x4, scoped, tag = 'scoped memory for tpu_custom_call.1']
    #allocation5 [shape = 's32[1]{0}', space=sflag, size = 0x4, scoped, tag = 'scoped memory for tpu_custom_call.1']
    #allocation6 [shape = 'u8[524288]{0}', space=vmem, size = 0x80000, scoped, tag = 'input window, operand 1, single buffered']
    #allocation7 [shape = 's32[1]{0}', space=sflag, size = 0x4, scoped, tag = 'scoped memory for tpu_custom_call.1']
    #allocation8 [shape = 'u8[512]{0}', space=vmem, size = 0x400, scoped, tag = 'output window, operand 0, single buffered']
    %16 = vsyncpa [#allocation4], 0
    %17 = vsyncpa [#allocation7], 0
    %18 = vsyncpa [#allocation5], 0
    // Predicated region
    $region2: #{tpu_custom_call.1} parent=1 // pred_check
      _
    $region3: #{tpu_custom_call.1} parent=1 // pred_check_branch
      %20 = sbr.rel (0) target = $region5
    $region4: #{tpu_custom_call.1} parent=1 // pred_region
      %s22 = ssub.s32 4096, 4096
      %23 = vsyncadd [#allocation4], %s22
      %s24 = sshll.u32 [#allocation3], 4
      %s25 = int_to_ptr.vmem [resolvable:$true] %s24
      %30 = dma.hbm_to_vmem [thread:$0]  %s0, 4096, %s25, [#allocation4], 2048, 2048, 128
    $region5: #{tpu_custom_call.1} parent=1 // pred_fallthru
      _
    // Predicated region
    $region6: #{tpu_custom_call.1} parent=1 // pred_check
      _
    $region7: #{tpu_custom_call.1} parent=1 // pred_check_branch
      %32 = sbr.rel (0) target = $region9
    $region8: #{tpu_custom_call.1} parent=1 // pred_region
      %s34 = ssub.s32 16384, 16384
      %35 = vsyncadd [#allocation7], %s34
      %s36 = sshll.u32 [#allocation6], 4
      %s37 = int_to_ptr.vmem [resolvable:$true] %s36
      %42 = dma.hbm_to_vmem [thread:$0]  %s1, 16384, %s37, [#allocation7], 64, 64, 4
    $region9: #{tpu_custom_call.1} parent=1 // pred_fallthru
      _
    // Predicated region
    $region10: #{tpu_custom_call.1} parent=1 // pred_check
      _
    $region11: #{tpu_custom_call.1} parent=1 // pred_check_branch
      %44 = sbr.rel (0) target = $region13
    $region12: #{tpu_custom_call.1} parent=1 // pred_region
      _
    $region13: #{tpu_custom_call.1} parent=1 // pred_fallthru
      _
    // Predicated region
    $region14: #{tpu_custom_call.1} parent=1 // pred_check
      _
    $region15: #{tpu_custom_call.1} parent=1 // pred_check_branch
      %46 = sbr.rel (0) target = $region17
    $region16: #{tpu_custom_call.1} parent=1 // pred_region
      _
    $region17: #{tpu_custom_call.1} parent=1 // pred_fallthru
      _
    // Predicated region
    $region18: #{tpu_custom_call.1} parent=1 // pred_check
      _
    $region19: #{tpu_custom_call.1} parent=1 // pred_check_branch
      %48 = sbr.rel (0) target = $region21
    $region20: #{tpu_custom_call.1} parent=1 // pred_region
      _
    $region21: #{tpu_custom_call.1} parent=1 // pred_fallthru
      _
    // Predicated region
    $region22: #{tpu_custom_call.1} parent=1 // pred_check
      _
    $region23: #{tpu_custom_call.1} parent=1 // pred_check_branch
      %50 = sbr.rel (0) target = $region25
    $region24: #{tpu_custom_call.1} parent=1 // pred_region
      _
    $region25: #{tpu_custom_call.1} parent=1 // pred_fallthru
      _
    // Predicated region
    $region26: #{tpu_custom_call.1} parent=1 // pred_check
      _
    $region27: #{tpu_custom_call.1} parent=1 // pred_check_branch
      %52 = sbr.rel (0) target = $region29
    $region28: #{tpu_custom_call.1} parent=1 // pred_region
      _
    $region29: #{tpu_custom_call.1} parent=1 // pred_fallthru
      _
    // Predicated region
    $region30: #{tpu_custom_call.1} parent=1 // pred_check
      _
    $region31: #{tpu_custom_call.1} parent=1 // pred_check_branch
      %54 = sbr.rel (0) target = $region33
    $region32: #{tpu_custom_call.1} parent=1 // pred_region
      _
    $region33: #{tpu_custom_call.1} parent=1 // pred_fallthru
      _
    // Predicated region
    $region34: #{tpu_custom_call.1} parent=1 // pred_check
      _
    $region35: #{tpu_custom_call.1} parent=1 // pred_check_branch
      %56 = sbr.rel (0) target = $region37
    $region36: #{tpu_custom_call.1} parent=1 // pred_region
      _
    $region37: #{tpu_custom_call.1} parent=1 // pred_fallthru
      _
    // Predicated region
    $region38: #{tpu_custom_call.1} parent=1 // pred_check
      _
    $region39: #{tpu_custom_call.1} parent=1 // pred_check_branch
      %58 = sbr.rel (0) target = $region41
    $region40: #{tpu_custom_call.1} parent=1 // pred_region
      %59 = dma.done [#allocation4], 4096
    $region41: #{tpu_custom_call.1} parent=1 // pred_fallthru
      _
    // Predicated region
    $region42: #{tpu_custom_call.1} parent=1 // pred_check
      _
    $region43: #{tpu_custom_call.1} parent=1 // pred_check_branch
      %61 = sbr.rel (0) target = $region45
    $region44: #{tpu_custom_call.1} parent=1 // pred_region
      %62 = dma.done [#allocation7], 16384
    $region45: #{tpu_custom_call.1} parent=1 // pred_fallthru
      _
    %v64 = vld [vmem:[#allocation3] sm:$0xff]
    %v65 = vld [vmem:[#allocation3 + $0x8] sm:$0xff]
    %v66 = vld [vmem:[#allocation3 + $0x10] sm:$0xff]
    %v67 = vld [vmem:[#allocation3 + $0x18] sm:$0xff]
    %v68 = vld [vmem:[#allocation3 + $0x20] sm:$0xff]
    %v69 = vld [vmem:[#allocation3 + $0x28] sm:$0xff]
    %v70 = vld [vmem:[#allocation3 + $0x30] sm:$0xff]
    %v71 = vld [vmem:[#allocation3 + $0x38] sm:$0xff]
    %v72 = vld [vmem:[#allocation3 + $0x40] sm:$0xff]
    %v73 = vld [vmem:[#allocation3 + $0x48] sm:$0xff]
    %v74 = vld [vmem:[#allocation3 + $0x50] sm:$0xff]
    %v75 = vld [vmem:[#allocation3 + $0x58] sm:$0xff]
    %v76 = vld [vmem:[#allocation3 + $0x60] sm:$0xff]
    %v77 = vld [vmem:[#allocation3 + $0x68] sm:$0xff]
    %v78 = vld [vmem:[#allocation3 + $0x70] sm:$0xff]
    %v79 = vld [vmem:[#allocation3 + $0x78] sm:$0xff]
    %v80 = vld [vmem:[#allocation3 + $0x80] sm:$0xff]
    %v81 = vld [vmem:[#allocation3 + $0x88] sm:$0xff]
    %v82 = vld [vmem:[#allocation3 + $0x90] sm:$0xff]
    %v83 = vld [vmem:[#allocation3 + $0x98] sm:$0xff]
    %v84 = vld [vmem:[#allocation3 + $0xa0] sm:$0xff]
    %v85 = vld [vmem:[#allocation3 + $0xa8] sm:$0xff]
    %v86 = vld [vmem:[#allocation3 + $0xb0] sm:$0xff]
    %v87 = vld [vmem:[#allocation3 + $0xb8] sm:$0xff]
    %v88 = vld [vmem:[#allocation3 + $0xc0] sm:$0xff]
    %v89 = vld [vmem:[#allocation3 + $0xc8] sm:$0xff]
    %v90 = vld [vmem:[#allocation3 + $0xd0] sm:$0xff]
    %v91 = vld [vmem:[#allocation3 + $0xd8] sm:$0xff]
    %v92 = vld [vmem:[#allocation3 + $0xe0] sm:$0xff]
    %v93 = vld [vmem:[#allocation3 + $0xe8] sm:$0xff]
    %v94 = vld [vmem:[#allocation3 + $0xf0] sm:$0xff]
    %v95 = vld [vmem:[#allocation3 + $0xf8] sm:$0xff]
    %v96 = vpack.c.bf16 %v80, %v64
    %v97 = vpack.c.bf16 %v81, %v65
    %v98 = vpack.c.bf16 %v82, %v66
    %v99 = vpack.c.bf16 %v83, %v67
    %v100 = vpack.c.bf16 %v84, %v68
    %v101 = vpack.c.bf16 %v85, %v69
    %v102 = vpack.c.bf16 %v86, %v70
    %v103 = vpack.c.bf16 %v87, %v71
    %v104 = vpack.c.bf16 %v88, %v72
    %v105 = vpack.c.bf16 %v89, %v73
    %v106 = vpack.c.bf16 %v90, %v74
    %v107 = vpack.c.bf16 %v91, %v75
    %v108 = vpack.c.bf16 %v92, %v76
    %v109 = vpack.c.bf16 %v93, %v77
    %v110 = vpack.c.bf16 %v94, %v78
    %v111 = vpack.c.bf16 %v95, %v79
    %v112 = vld [vmem:[#allocation6] sm:$0xf]
    %v113 = vld [vmem:[#allocation6 + $0x4] sm:$0xf]
    %v114 = vld [vmem:[#allocation6 + $0x8] sm:$0xf]
    %v115 = vld [vmem:[#allocation6 + $0xc] sm:$0xf]
    %v116 = vld [vmem:[#allocation6 + $0x10] sm:$0xf]
    %v117 = vld [vmem:[#allocation6 + $0x14] sm:$0xf]
    %v118 = vld [vmem:[#allocation6 + $0x18] sm:$0xf]
    %v119 = vld [vmem:[#allocation6 + $0x1c] sm:$0xf]
    %v120 = vld [vmem:[#allocation6 + $0x20] sm:$0xf]
    %v121 = vld [vmem:[#allocation6 + $0x24] sm:$0xf]
    %v122 = vld [vmem:[#allocation6 + $0x28] sm:$0xf]
    %v123 = vld [vmem:[#allocation6 + $0x2c] sm:$0xf]
    %v124 = vld [vmem:[#allocation6 + $0x30] sm:$0xf]
    %v125 = vld [vmem:[#allocation6 + $0x34] sm:$0xf]
    %v126 = vld [vmem:[#allocation6 + $0x38] sm:$0xf]
    %v127 = vld [vmem:[#allocation6 + $0x3c] sm:$0xf]
    %v128 = vld [vmem:[#allocation6 + $0x40] sm:$0xf]
    %v129 = vld [vmem:[#allocation6 + $0x44] sm:$0xf]
    %v130 = vld [vmem:[#allocation6 + $0x48] sm:$0xf]
    %v131 = vld [vmem:[#allocation6 + $0x4c] sm:$0xf]
    %v132 = vld [vmem:[#allocation6 + $0x50] sm:$0xf]
    %v133 = vld [vmem:[#allocation6 + $0x54] sm:$0xf]
    %v134 = vld [vmem:[#allocation6 + $0x58] sm:$0xf]
    %v135 = vld [vmem:[#allocation6 + $0x5c] sm:$0xf]
    %v136 = vld [vmem:[#allocation6 + $0x60] sm:$0xf]
    %v137 = vld [vmem:[#allocation6 + $0x64] sm:$0xf]
    %v138 = vld [vmem:[#allocation6 + $0x68] sm:$0xf]
    %v139 = vld [vmem:[#allocation6 + $0x6c] sm:$0xf]
    %v140 = vld [vmem:[#allocation6 + $0x70] sm:$0xf]
    %v141 = vld [vmem:[#allocation6 + $0x74] sm:$0xf]
    %v142 = vld [vmem:[#allocation6 + $0x78] sm:$0xf]
    %v143 = vld [vmem:[#allocation6 + $0x7c] sm:$0xf]
    %v144 = vld [vmem:[#allocation6 + $0x80] sm:$0xf]
    %v145 = vld [vmem:[#allocation6 + $0x84] sm:$0xf]
    %v146 = vld [vmem:[#allocation6 + $0x88] sm:$0xf]
    %v147 = vld [vmem:[#allocation6 + $0x8c] sm:$0xf]
    %v148 = vld [vmem:[#allocation6 + $0x90] sm:$0xf]
    %v149 = vld [vmem:[#allocation6 + $0x94] sm:$0xf]
    %v150 = vld [vmem:[#allocation6 + $0x98] sm:$0xf]
    %v151 = vld [vmem:[#allocation6 + $0x9c] sm:$0xf]
    %v152 = vld [vmem:[#allocation6 + $0xa0] sm:$0xf]
    %v153 = vld [vmem:[#allocation6 + $0xa4] sm:$0xf]
    %v154 = vld [vmem:[#allocation6 + $0xa8] sm:$0xf]
    %v155 = vld [vmem:[#allocation6 + $0xac] sm:$0xf]
    %v156 = vld [vmem:[#allocation6 + $0xb0] sm:$0xf]
    %v157 = vld [vmem:[#allocation6 + $0xb4] sm:$0xf]
    %v158 = vld [vmem:[#allocation6 + $0xb8] sm:$0xf]
    %v159 = vld [vmem:[#allocation6 + $0xbc] sm:$0xf]
    %v160 = vld [vmem:[#allocation6 + $0xc0] sm:$0xf]
    %v161 = vld [vmem:[#allocation6 + $0xc4] sm:$0xf]
    %v162 = vld [vmem:[#allocation6 + $0xc8] sm:$0xf]
    %v163 = vld [vmem:[#allocation6 + $0xcc] sm:$0xf]
    %v164 = vld [vmem:[#allocation6 + $0xd0] sm:$0xf]
    %v165 = vld [vmem:[#allocation6 + $0xd4] sm:$0xf]
    %v166 = vld [vmem:[#allocation6 + $0xd8] sm:$0xf]
    %v167 = vld [vmem:[#allocation6 + $0xdc] sm:$0xf]
    %v168 = vld [vmem:[#allocation6 + $0xe0] sm:$0xf]
    %v169 = vld [vmem:[#allocation6 + $0xe4] sm:$0xf]
    %v170 = vld [vmem:[#allocation6 + $0xe8] sm:$0xf]
    %v171 = vld [vmem:[#allocation6 + $0xec] sm:$0xf]
    %v172 = vld [vmem:[#allocation6 + $0xf0] sm:$0xf]
    %v173 = vld [vmem:[#allocation6 + $0xf4] sm:$0xf]
    %v174 = vld [vmem:[#allocation6 + $0xf8] sm:$0xf]
    %v175 = vld [vmem:[#allocation6 + $0xfc] sm:$0xf]
    %v176 = vld [vmem:[#allocation6 + $0x100] sm:$0xf]
    %v177 = vld [vmem:[#allocation6 + $0x104] sm:$0xf]
    %v178 = vld [vmem:[#allocation6 + $0x108] sm:$0xf]
    %v179 = vld [vmem:[#allocation6 + $0x10c] sm:$0xf]
    %v180 = vld [vmem:[#allocation6 + $0x110] sm:$0xf]
    %v181 = vld [vmem:[#allocation6 + $0x114] sm:$0xf]
    %v182 = vld [vmem:[#allocation6 + $0x118] sm:$0xf]
    %v183 = vld [vmem:[#allocation6 + $0x11c] sm:$0xf]
    %v184 = vld [vmem:[#allocation6 + $0x120] sm:$0xf]
    %v185 = vld [vmem:[#allocation6 + $0x124] sm:$0xf]
    %v186 = vld [vmem:[#allocation6 + $0x128] sm:$0xf]
    %v187 = vld [vmem:[#allocation6 + $0x12c] sm:$0xf]
    %v188 = vld [vmem:[#allocation6 + $0x130] sm:$0xf]
    %v189 = vld [vmem:[#allocation6 + $0x134] sm:$0xf]
    %v190 = vld [vmem:[#allocation6 + $0x138] sm:$0xf]
    %v191 = vld [vmem:[#allocation6 + $0x13c] sm:$0xf]
    %v192 = vld [vmem:[#allocation6 + $0x140] sm:$0xf]
    %v193 = vld [vmem:[#allocation6 + $0x144] sm:$0xf]
    %v194 = vld [vmem:[#allocation6 + $0x148] sm:$0xf]
    %v195 = vld [vmem:[#allocation6 + $0x14c] sm:$0xf]
    %v196 = vld [vmem:[#allocation6 + $0x150] sm:$0xf]
    %v197 = vld [vmem:[#allocation6 + $0x154] sm:$0xf]
    %v198 = vld [vmem:[#allocation6 + $0x158] sm:$0xf]
    %v199 = vld [vmem:[#allocation6 + $0x15c] sm:$0xf]
    %v200 = vld [vmem:[#allocation6 + $0x160] sm:$0xf]
    %v201 = vld [vmem:[#allocation6 + $0x164] sm:$0xf]
    %v202 = vld [vmem:[#allocation6 + $0x168] sm:$0xf]
    %v203 = vld [vmem:[#allocation6 + $0x16c] sm:$0xf]
    %v204 = vld [vmem:[#allocation6 + $0x170] sm:$0xf]
    %v205 = vld [vmem:[#allocation6 + $0x174] sm:$0xf]
    %v206 = vld [vmem:[#allocation6 + $0x178] sm:$0xf]
    %v207 = vld [vmem:[#allocation6 + $0x17c] sm:$0xf]
    %v208 = vld [vmem:[#allocation6 + $0x180] sm:$0xf]
    %v209 = vld [vmem:[#allocation6 + $0x184] sm:$0xf]
    %v210 = vld [vmem:[#allocation6 + $0x188] sm:$0xf]
    %v211 = vld [vmem:[#allocation6 + $0x18c] sm:$0xf]
    %v212 = vld [vmem:[#allocation6 + $0x190] sm:$0xf]
    %v213 = vld [vmem:[#allocation6 + $0x194] sm:$0xf]
    %v214 = vld [vmem:[#allocation6 + $0x198] sm:$0xf]
    %v215 = vld [vmem:[#allocation6 + $0x19c] sm:$0xf]
    %v216 = vld [vmem:[#allocation6 + $0x1a0] sm:$0xf]
    %v217 = vld [vmem:[#allocation6 + $0x1a4] sm:$0xf]
    %v218 = vld [vmem:[#allocation6 + $0x1a8] sm:$0xf]
    %v219 = vld [vmem:[#allocation6 + $0x1ac] sm:$0xf]
    %v220 = vld [vmem:[#allocation6 + $0x1b0] sm:$0xf]
    %v221 = vld [vmem:[#allocation6 + $0x1b4] sm:$0xf]
    %v222 = vld [vmem:[#allocation6 + $0x1b8] sm:$0xf]
    %v223 = vld [vmem:[#allocation6 + $0x1bc] sm:$0xf]
    %v224 = vld [vmem:[#allocation6 + $0x1c0] sm:$0xf]
    %v225 = vld [vmem:[#allocation6 + $0x1c4] sm:$0xf]
    %v226 = vld [vmem:[#allocation6 + $0x1c8] sm:$0xf]
    %v227 = vld [vmem:[#allocation6 + $0x1cc] sm:$0xf]
    %v228 = vld [vmem:[#allocation6 + $0x1d0] sm:$0xf]
    %v229 = vld [vmem:[#allocation6 + $0x1d4] sm:$0xf]
    %v230 = vld [vmem:[#allocation6 + $0x1d8] sm:$0xf]
    %v231 = vld [vmem:[#allocation6 + $0x1dc] sm:$0xf]
    %v232 = vld [vmem:[#allocation6 + $0x1e0] sm:$0xf]
    %v233 = vld [vmem:[#allocation6 + $0x1e4] sm:$0xf]
    %v234 = vld [vmem:[#allocation6 + $0x1e8] sm:$0xf]
    %v235 = vld [vmem:[#allocation6 + $0x1ec] sm:$0xf]
    %v236 = vld [vmem:[#allocation6 + $0x1f0] sm:$0xf]
    %v237 = vld [vmem:[#allocation6 + $0x1f4] sm:$0xf]
    %v238 = vld [vmem:[#allocation6 + $0x1f8] sm:$0xf]
    %v239 = vld [vmem:[#allocation6 + $0x1fc] sm:$0xf]
    %v240 = vld [vmem:[#allocation6 + $0x200] sm:$0xf]
    %v241 = vld [vmem:[#allocation6 + $0x204] sm:$0xf]
    %v242 = vld [vmem:[#allocation6 + $0x208] sm:$0xf]
    %v243 = vld [vmem:[#allocation6 + $0x20c] sm:$0xf]
    %v244 = vld [vmem:[#allocation6 + $0x210] sm:$0xf]
    %v245 = vld [vmem:[#allocation6 + $0x214] sm:$0xf]
    %v246 = vld [vmem:[#allocation6 + $0x218] sm:$0xf]
    %v247 = vld [vmem:[#allocation6 + $0x21c] sm:$0xf]
    %v248 = vld [vmem:[#allocation6 + $0x220] sm:$0xf]
    %v249 = vld [vmem:[#allocation6 + $0x224] sm:$0xf]
    %v250 = vld [vmem:[#allocation6 + $0x228] sm:$0xf]
    %v251 = vld [vmem:[#allocation6 + $0x22c] sm:$0xf]
    %v252 = vld [vmem:[#allocation6 + $0x230] sm:$0xf]
    %v253 = vld [vmem:[#allocation6 + $0x234] sm:$0xf]
    %v254 = vld [vmem:[#allocation6 + $0x238] sm:$0xf]
    %v255 = vld [vmem:[#allocation6 + $0x23c] sm:$0xf]
    %v256 = vld [vmem:[#allocation6 + $0x240] sm:$0xf]
    %v257 = vld [vmem:[#allocation6 + $0x244] sm:$0xf]
    %v258 = vld [vmem:[#allocation6 + $0x248] sm:$0xf]
    %v259 = vld [vmem:[#allocation6 + $0x24c] sm:$0xf]
    %v260 = vld [vmem:[#allocation6 + $0x250] sm:$0xf]
    %v261 = vld [vmem:[#allocation6 + $0x254] sm:$0xf]
    %v262 = vld [vmem:[#allocation6 + $0x258] sm:$0xf]
    %v263 = vld [vmem:[#allocation6 + $0x25c] sm:$0xf]
    %v264 = vld [vmem:[#allocation6 + $0x260] sm:$0xf]
    %v265 = vld [vmem:[#allocation6 + $0x264] sm:$0xf]
    %v266 = vld [vmem:[#allocation6 + $0x268] sm:$0xf]
    %v267 = vld [vmem:[#allocation6 + $0x26c] sm:$0xf]
    %v268 = vld [vmem:[#allocation6 + $0x270] sm:$0xf]
    %v269 = vld [vmem:[#allocation6 + $0x274] sm:$0xf]
    %v270 = vld [vmem:[#allocation6 + $0x278] sm:$0xf]
    %v271 = vld [vmem:[#allocation6 + $0x27c] sm:$0xf]
    %v272 = vld [vmem:[#allocation6 + $0x280] sm:$0xf]
    %v273 = vld [vmem:[#allocation6 + $0x284] sm:$0xf]
    %v274 = vld [vmem:[#allocation6 + $0x288] sm:$0xf]
    %v275 = vld [vmem:[#allocation6 + $0x28c] sm:$0xf]
    %v276 = vld [vmem:[#allocation6 + $0x290] sm:$0xf]
    %v277 = vld [vmem:[#allocation6 + $0x294] sm:$0xf]
    %v278 = vld [vmem:[#allocation6 + $0x298] sm:$0xf]
    %v279 = vld [vmem:[#allocation6 + $0x29c] sm:$0xf]
    %v280 = vld [vmem:[#allocation6 + $0x2a0] sm:$0xf]
    %v281 = vld [vmem:[#allocation6 + $0x2a4] sm:$0xf]
    %v282 = vld [vmem:[#allocation6 + $0x2a8] sm:$0xf]
    %v283 = vld [vmem:[#allocation6 + $0x2ac] sm:$0xf]
    %v284 = vld [vmem:[#allocation6 + $0x2b0] sm:$0xf]
    %v285 = vld [vmem:[#allocation6 + $0x2b4] sm:$0xf]
    %v286 = vld [vmem:[#allocation6 + $0x2b8] sm:$0xf]
    %v287 = vld [vmem:[#allocation6 + $0x2bc] sm:$0xf]
    %v288 = vld [vmem:[#allocation6 + $0x2c0] sm:$0xf]
    %v289 = vld [vmem:[#allocation6 + $0x2c4] sm:$0xf]
    %v290 = vld [vmem:[#allocation6 + $0x2c8] sm:$0xf]
    %v291 = vld [vmem:[#allocation6 + $0x2cc] sm:$0xf]
    %v292 = vld [vmem:[#allocation6 + $0x2d0] sm:$0xf]
    %v293 = vld [vmem:[#allocation6 + $0x2d4] sm:$0xf]
    %v294 = vld [vmem:[#allocation6 + $0x2d8] sm:$0xf]
    %v295 = vld [vmem:[#allocation6 + $0x2dc] sm:$0xf]
    %v296 = vld [vmem:[#allocation6 + $0x2e0] sm:$0xf]
    %v297 = vld [vmem:[#allocation6 + $0x2e4] sm:$0xf]
    %v298 = vld [vmem:[#allocation6 + $0x2e8] sm:$0xf]
    %v299 = vld [vmem:[#allocation6 + $0x2ec] sm:$0xf]
    %v300 = vld [vmem:[#allocation6 + $0x2f0] sm:$0xf]
    %v301 = vld [vmem:[#allocation6 + $0x2f4] sm:$0xf]
    %v302 = vld [vmem:[#allocation6 + $0x2f8] sm:$0xf]
    %v303 = vld [vmem:[#allocation6 + $0x2fc] sm:$0xf]
    %v304 = vld [vmem:[#allocation6 + $0x300] sm:$0xf]
    %v305 = vld [vmem:[#allocation6 + $0x304] sm:$0xf]
    %v306 = vld [vmem:[#allocation6 + $0x308] sm:$0xf]
    %v307 = vld [vmem:[#allocation6 + $0x30c] sm:$0xf]
    %v308 = vld [vmem:[#allocation6 + $0x310] sm:$0xf]
    %v309 = vld [vmem:[#allocation6 + $0x314] sm:$0xf]
    %v310 = vld [vmem:[#allocation6 + $0x318] sm:$0xf]
    %v311 = vld [vmem:[#allocation6 + $0x31c] sm:$0xf]
    %v312 = vld [vmem:[#allocation6 + $0x320] sm:$0xf]
    %v313 = vld [vmem:[#allocation6 + $0x324] sm:$0xf]
    %v314 = vld [vmem:[#allocation6 + $0x328] sm:$0xf]
    %v315 = vld [vmem:[#allocation6 + $0x32c] sm:$0xf]
    %v316 = vld [vmem:[#allocation6 + $0x330] sm:$0xf]
    %v317 = vld [vmem:[#allocation6 + $0x334] sm:$0xf]
    %v318 = vld [vmem:[#allocation6 + $0x338] sm:$0xf]
    %v319 = vld [vmem:[#allocation6 + $0x33c] sm:$0xf]
    %v320 = vld [vmem:[#allocation6 + $0x340] sm:$0xf]
    %v321 = vld [vmem:[#allocation6 + $0x344] sm:$0xf]
    %v322 = vld [vmem:[#allocation6 + $0x348] sm:$0xf]
    %v323 = vld [vmem:[#allocation6 + $0x34c] sm:$0xf]
    %v324 = vld [vmem:[#allocation6 + $0x350] sm:$0xf]
    %v325 = vld [vmem:[#allocation6 + $0x354] sm:$0xf]
    %v326 = vld [vmem:[#allocation6 + $0x358] sm:$0xf]
    %v327 = vld [vmem:[#allocation6 + $0x35c] sm:$0xf]
    %v328 = vld [vmem:[#allocation6 + $0x360] sm:$0xf]
    %v329 = vld [vmem:[#allocation6 + $0x364] sm:$0xf]
    %v330 = vld [vmem:[#allocation6 + $0x368] sm:$0xf]
    %v331 = vld [vmem:[#allocation6 + $0x36c] sm:$0xf]
    %v332 = vld [vmem:[#allocation6 + $0x370] sm:$0xf]
    %v333 = vld [vmem:[#allocation6 + $0x374] sm:$0xf]
    %v334 = vld [vmem:[#allocation6 + $0x378] sm:$0xf]
    %v335 = vld [vmem:[#allocation6 + $0x37c] sm:$0xf]
    %v336 = vld [vmem:[#allocation6 + $0x380] sm:$0xf]
    %v337 = vld [vmem:[#allocation6 + $0x384] sm:$0xf]
    %v338 = vld [vmem:[#allocation6 + $0x388] sm:$0xf]
    %v339 = vld [vmem:[#allocation6 + $0x38c] sm:$0xf]
    %v340 = vld [vmem:[#allocation6 + $0x390] sm:$0xf]
    %v341 = vld [vmem:[#allocation6 + $0x394] sm:$0xf]
    %v342 = vld [vmem:[#allocation6 + $0x398] sm:$0xf]
    %v343 = vld [vmem:[#allocation6 + $0x39c] sm:$0xf]
    %v344 = vld [vmem:[#allocation6 + $0x3a0] sm:$0xf]
    %v345 = vld [vmem:[#allocation6 + $0x3a4] sm:$0xf]
    %v346 = vld [vmem:[#allocation6 + $0x3a8] sm:$0xf]
    %v347 = vld [vmem:[#allocation6 + $0x3ac] sm:$0xf]
    %v348 = vld [vmem:[#allocation6 + $0x3b0] sm:$0xf]
    %v349 = vld [vmem:[#allocation6 + $0x3b4] sm:$0xf]
    %v350 = vld [vmem:[#allocation6 + $0x3b8] sm:$0xf]
    %v351 = vld [vmem:[#allocation6 + $0x3bc] sm:$0xf]
    %v352 = vld [vmem:[#allocation6 + $0x3c0] sm:$0xf]
    %v353 = vld [vmem:[#allocation6 + $0x3c4] sm:$0xf]
    %v354 = vld [vmem:[#allocation6 + $0x3c8] sm:$0xf]
    %v355 = vld [vmem:[#allocation6 + $0x3cc] sm:$0xf]
    %v356 = vld [vmem:[#allocation6 + $0x3d0] sm:$0xf]
    %v357 = vld [vmem:[#allocation6 + $0x3d4] sm:$0xf]
    %v358 = vld [vmem:[#allocation6 + $0x3d8] sm:$0xf]
    %v359 = vld [vmem:[#allocation6 + $0x3dc] sm:$0xf]
    %v360 = vld [vmem:[#allocation6 + $0x3e0] sm:$0xf]
    %v361 = vld [vmem:[#allocation6 + $0x3e4] sm:$0xf]
    %v362 = vld [vmem:[#allocation6 + $0x3e8] sm:$0xf]
    %v363 = vld [vmem:[#allocation6 + $0x3ec] sm:$0xf]
    %v364 = vld [vmem:[#allocation6 + $0x3f0] sm:$0xf]
    %v365 = vld [vmem:[#allocation6 + $0x3f4] sm:$0xf]
    %v366 = vld [vmem:[#allocation6 + $0x3f8] sm:$0xf]
    %v367 = vld [vmem:[#allocation6 + $0x3fc] sm:$0xf]
    %v368 = vld [vmem:[%s2] sm:$0x1]
    %v370 = vlaneseq
    %v371 = vshrl.u32 %v370, 7
    %v372 = vsub.s32 0, %v371
    %v373 = vrot.slane %v368, %v372
    %v631 = vunpack.c.l.b16 %v112
    %v632 = vunpack.c.l.b16 %v113
    %v633 = vunpack.c.l.b16 %v114
    %v634 = vunpack.c.l.b16 %v115
    %v635 = vunpack.c.l.b16 %v116
    %v636 = vunpack.c.l.b16 %v117
    %v637 = vunpack.c.l.b16 %v118
    %v638 = vunpack.c.l.b16 %v119
    %v639 = vunpack.c.l.b16 %v120
    %v640 = vunpack.c.l.b16 %v121
    %v641 = vunpack.c.l.b16 %v122
    %v642 = vunpack.c.l.b16 %v123
    %v643 = vunpack.c.l.b16 %v124
    %v644 = vunpack.c.l.b16 %v125
    %v645 = vunpack.c.l.b16 %v126
    %v646 = vunpack.c.l.b16 %v127
    %v647 = vunpack.c.l.b16 %v128
    %v648 = vunpack.c.l.b16 %v129
    %v649 = vunpack.c.l.b16 %v130
    %v650 = vunpack.c.l.b16 %v131
    %v651 = vunpack.c.l.b16 %v132
    %v652 = vunpack.c.l.b16 %v133
    %v653 = vunpack.c.l.b16 %v134
    %v654 = vunpack.c.l.b16 %v135
    %v655 = vunpack.c.l.b16 %v136
    %v656 = vunpack.c.l.b16 %v137
    %v657 = vunpack.c.l.b16 %v138
    %v658 = vunpack.c.l.b16 %v139
    %v659 = vunpack.c.l.b16 %v140
    %v660 = vunpack.c.l.b16 %v141
    %v661 = vunpack.c.l.b16 %v142
    %v662 = vunpack.c.l.b16 %v143
    %v663 = vunpack.c.l.b16 %v144
    %v664 = vunpack.c.l.b16 %v145
    %v665 = vunpack.c.l.b16 %v146
    %v666 = vunpack.c.l.b16 %v147
    %v667 = vunpack.c.l.b16 %v148
    %v668 = vunpack.c.l.b16 %v149
    %v669 = vunpack.c.l.b16 %v150
    %v670 = vunpack.c.l.b16 %v151
    %v671 = vunpack.c.l.b16 %v152
    %v672 = vunpack.c.l.b16 %v153
    %v673 = vunpack.c.l.b16 %v154
    %v674 = vunpack.c.l.b16 %v155
    %v675 = vunpack.c.l.b16 %v156
    %v676 = vunpack.c.l.b16 %v157
    %v677 = vunpack.c.l.b16 %v158
    %v678 = vunpack.c.l.b16 %v159
    %v679 = vunpack.c.l.b16 %v160
    %v680 = vunpack.c.l.b16 %v161
    %v681 = vunpack.c.l.b16 %v162
    %v682 = vunpack.c.l.b16 %v163
    %v683 = vunpack.c.l.b16 %v164
    %v684 = vunpack.c.l.b16 %v165
    %v685 = vunpack.c.l.b16 %v166
    %v686 = vunpack.c.l.b16 %v167
    %v687 = vunpack.c.l.b16 %v168
    %v688 = vunpack.c.l.b16 %v169
    %v689 = vunpack.c.l.b16 %v170
    %v690 = vunpack.c.l.b16 %v171
    %v691 = vunpack.c.l.b16 %v172
    %v692 = vunpack.c.l.b16 %v173
    %v693 = vunpack.c.l.b16 %v174
    %v694 = vunpack.c.l.b16 %v175
    %v695 = vunpack.c.l.b16 %v176
    %v696 = vunpack.c.l.b16 %v177
    %v697 = vunpack.c.l.b16 %v178
    %v698 = vunpack.c.l.b16 %v179
    %v699 = vunpack.c.l.b16 %v180
    %v700 = vunpack.c.l.b16 %v181
    %v701 = vunpack.c.l.b16 %v182
    %v702 = vunpack.c.l.b16 %v183
    %v703 = vunpack.c.l.b16 %v184
    %v704 = vunpack.c.l.b16 %v185
    %v705 = vunpack.c.l.b16 %v186
    %v706 = vunpack.c.l.b16 %v187
    %v707 = vunpack.c.l.b16 %v188
    %v708 = vunpack.c.l.b16 %v189
    %v709 = vunpack.c.l.b16 %v190
    %v710 = vunpack.c.l.b16 %v191
    %v711 = vunpack.c.l.b16 %v192
    %v712 = vunpack.c.l.b16 %v193
    %v713 = vunpack.c.l.b16 %v194
    %v714 = vunpack.c.l.b16 %v195
    %v715 = vunpack.c.l.b16 %v196
    %v716 = vunpack.c.l.b16 %v197
    %v717 = vunpack.c.l.b16 %v198
    %v718 = vunpack.c.l.b16 %v199
    %v719 = vunpack.c.l.b16 %v200
    %v720 = vunpack.c.l.b16 %v201
    %v721 = vunpack.c.l.b16 %v202
    %v722 = vunpack.c.l.b16 %v203
    %v723 = vunpack.c.l.b16 %v204
    %v724 = vunpack.c.l.b16 %v205
    %v725 = vunpack.c.l.b16 %v206
    %v726 = vunpack.c.l.b16 %v207
    %v727 = vunpack.c.l.b16 %v208
    %v728 = vunpack.c.l.b16 %v209
    %v729 = vunpack.c.l.b16 %v210
    %v730 = vunpack.c.l.b16 %v211
    %v731 = vunpack.c.l.b16 %v212
    %v732 = vunpack.c.l.b16 %v213
    %v733 = vunpack.c.l.b16 %v214
    %v734 = vunpack.c.l.b16 %v215
    %v735 = vunpack.c.l.b16 %v216
    %v736 = vunpack.c.l.b16 %v217
    %v737 = vunpack.c.l.b16 %v218
    %v738 = vunpack.c.l.b16 %v219
    %v739 = vunpack.c.l.b16 %v220
    %v740 = vunpack.c.l.b16 %v221
    %v741 = vunpack.c.l.b16 %v222
    %v742 = vunpack.c.l.b16 %v223
    %v743 = vunpack.c.l.b16 %v224
    %v744 = vunpack.c.l.b16 %v225
    %v745 = vunpack.c.l.b16 %v226
    %v746 = vunpack.c.l.b16 %v227
    %v747 = vunpack.c.l.b16 %v228
    %v748 = vunpack.c.l.b16 %v229
    %v749 = vunpack.c.l.b16 %v230
    %v750 = vunpack.c.l.b16 %v231
    %v751 = vunpack.c.l.b16 %v232
    %v752 = vunpack.c.l.b16 %v233
    %v753 = vunpack.c.l.b16 %v234
    %v754 = vunpack.c.l.b16 %v235
    %v755 = vunpack.c.l.b16 %v236
    %v756 = vunpack.c.l.b16 %v237
    %v757 = vunpack.c.l.b16 %v238
    %v758 = vunpack.c.l.b16 %v239
    %v759 = vunpack.c.l.b16 %v240
    %v760 = vunpack.c.l.b16 %v241
    %v761 = vunpack.c.l.b16 %v242
    %v762 = vunpack.c.l.b16 %v243
    %v763 = vunpack.c.l.b16 %v244
    %v764 = vunpack.c.l.b16 %v245
    %v765 = vunpack.c.l.b16 %v246
    %v766 = vunpack.c.l.b16 %v247
    %v767 = vunpack.c.l.b16 %v248
    %v768 = vunpack.c.l.b16 %v249
    %v769 = vunpack.c.l.b16 %v250
    %v770 = vunpack.c.l.b16 %v251
    %v771 = vunpack.c.l.b16 %v252
    %v772 = vunpack.c.l.b16 %v253
    %v773 = vunpack.c.l.b16 %v254
    %v774 = vunpack.c.l.b16 %v255
    %v775 = vunpack.c.l.b16 %v256
    %v776 = vunpack.c.l.b16 %v257
    %v777 = vunpack.c.l.b16 %v258
    %v778 = vunpack.c.l.b16 %v259
    %v779 = vunpack.c.l.b16 %v260
    %v780 = vunpack.c.l.b16 %v261
    %v781 = vunpack.c.l.b16 %v262
    %v782 = vunpack.c.l.b16 %v263
    %v783 = vunpack.c.l.b16 %v264
    %v784 = vunpack.c.l.b16 %v265
    %v785 = vunpack.c.l.b16 %v266
    %v786 = vunpack.c.l.b16 %v267
    %v787 = vunpack.c.l.b16 %v268
    %v788 = vunpack.c.l.b16 %v269
    %v789 = vunpack.c.l.b16 %v270
    %v790 = vunpack.c.l.b16 %v271
    %v791 = vunpack.c.l.b16 %v272
    %v792 = vunpack.c.l.b16 %v273
    %v793 = vunpack.c.l.b16 %v274
    %v794 = vunpack.c.l.b16 %v275
    %v795 = vunpack.c.l.b16 %v276
    %v796 = vunpack.c.l.b16 %v277
    %v797 = vunpack.c.l.b16 %v278
    %v798 = vunpack.c.l.b16 %v279
    %v799 = vunpack.c.l.b16 %v280
    %v800 = vunpack.c.l.b16 %v281
    %v801 = vunpack.c.l.b16 %v282
    %v802 = vunpack.c.l.b16 %v283
    %v803 = vunpack.c.l.b16 %v284
    %v804 = vunpack.c.l.b16 %v285
    %v805 = vunpack.c.l.b16 %v286
    %v806 = vunpack.c.l.b16 %v287
    %v807 = vunpack.c.l.b16 %v288
    %v808 = vunpack.c.l.b16 %v289
    %v809 = vunpack.c.l.b16 %v290
    %v810 = vunpack.c.l.b16 %v291
    %v811 = vunpack.c.l.b16 %v292
    %v812 = vunpack.c.l.b16 %v293
    %v813 = vunpack.c.l.b16 %v294
    %v814 = vunpack.c.l.b16 %v295
    %v815 = vunpack.c.l.b16 %v296
    %v816 = vunpack.c.l.b16 %v297
    %v817 = vunpack.c.l.b16 %v298
    %v818 = vunpack.c.l.b16 %v299
    %v819 = vunpack.c.l.b16 %v300
    %v820 = vunpack.c.l.b16 %v301
    %v821 = vunpack.c.l.b16 %v302
    %v822 = vunpack.c.l.b16 %v303
    %v823 = vunpack.c.l.b16 %v304
    %v824 = vunpack.c.l.b16 %v305
    %v825 = vunpack.c.l.b16 %v306
    %v826 = vunpack.c.l.b16 %v307
    %v827 = vunpack.c.l.b16 %v308
    %v828 = vunpack.c.l.b16 %v309
    %v829 = vunpack.c.l.b16 %v310
    %v830 = vunpack.c.l.b16 %v311
    %v831 = vunpack.c.l.b16 %v312
    %v832 = vunpack.c.l.b16 %v313
    %v833 = vunpack.c.l.b16 %v314
    %v834 = vunpack.c.l.b16 %v315
    %v835 = vunpack.c.l.b16 %v316
    %v836 = vunpack.c.l.b16 %v317
    %v837 = vunpack.c.l.b16 %v318
    %v838 = vunpack.c.l.b16 %v319
    %v839 = vunpack.c.l.b16 %v320
    %v840 = vunpack.c.l.b16 %v321
    %v841 = vunpack.c.l.b16 %v322
    %v842 = vunpack.c.l.b16 %v323
    %v843 = vunpack.c.l.b16 %v324
    %v844 = vunpack.c.l.b16 %v325
    %v845 = vunpack.c.l.b16 %v326
    %v846 = vunpack.c.l.b16 %v327
    %v847 = vunpack.c.l.b16 %v328
    %v848 = vunpack.c.l.b16 %v329
    %v849 = vunpack.c.l.b16 %v330
    %v850 = vunpack.c.l.b16 %v331
    %v851 = vunpack.c.l.b16 %v332
    %v852 = vunpack.c.l.b16 %v333
    %v853 = vunpack.c.l.b16 %v334
    %v854 = vunpack.c.l.b16 %v335
    %v855 = vunpack.c.l.b16 %v336
    %v856 = vunpack.c.l.b16 %v337
    %v857 = vunpack.c.l.b16 %v338
    %v858 = vunpack.c.l.b16 %v339
    %v859 = vunpack.c.l.b16 %v340
    %v860 = vunpack.c.l.b16 %v341
    %v861 = vunpack.c.l.b16 %v342
    %v862 = vunpack.c.l.b16 %v343
    %v863 = vunpack.c.l.b16 %v344
    %v864 = vunpack.c.l.b16 %v345
    %v865 = vunpack.c.l.b16 %v346
    %v866 = vunpack.c.l.b16 %v347
    %v867 = vunpack.c.l.b16 %v348
    %v868 = vunpack.c.l.b16 %v349
    %v869 = vunpack.c.l.b16 %v350
    %v870 = vunpack.c.l.b16 %v351
    %v871 = vunpack.c.l.b16 %v352
    %v872 = vunpack.c.l.b16 %v353
    %v873 = vunpack.c.l.b16 %v354
    %v874 = vunpack.c.l.b16 %v355
    %v875 = vunpack.c.l.b16 %v356
    %v876 = vunpack.c.l.b16 %v357
    %v877 = vunpack.c.l.b16 %v358
    %v878 = vunpack.c.l.b16 %v359
    %v879 = vunpack.c.l.b16 %v360
    %v880 = vunpack.c.l.b16 %v361
    %v881 = vunpack.c.l.b16 %v362
    %v882 = vunpack.c.l.b16 %v363
    %v883 = vunpack.c.l.b16 %v364
    %v884 = vunpack.c.l.b16 %v365
    %v885 = vunpack.c.l.b16 %v366
    %v886 = vunpack.c.l.b16 %v367
    %v887 = vpack.c.b16 %v632, %v631
    %v888 = vpack.c.b16 %v634, %v633
    %v889 = vpack.c.b16 %v636, %v635
    %v890 = vpack.c.b16 %v638, %v637
    %v891 = vpack.c.b16 %v640, %v639
    %v892 = vpack.c.b16 %v642, %v641
    %v893 = vpack.c.b16 %v644, %v643
    %v894 = vpack.c.b16 %v646, %v645
    %v895 = vpack.c.b16 %v648, %v647
    %v896 = vpack.c.b16 %v650, %v649
    %v897 = vpack.c.b16 %v652, %v651
    %v898 = vpack.c.b16 %v654, %v653
    %v899 = vpack.c.b16 %v656, %v655
    %v900 = vpack.c.b16 %v658, %v657
    %v901 = vpack.c.b16 %v660, %v659
    %v902 = vpack.c.b16 %v662, %v661
    %v903 = vpack.c.b16 %v664, %v663
    %v904 = vpack.c.b16 %v666, %v665
    %v905 = vpack.c.b16 %v668, %v667
    %v906 = vpack.c.b16 %v670, %v669
    %v907 = vpack.c.b16 %v672, %v671
    %v908 = vpack.c.b16 %v674, %v673
    %v909 = vpack.c.b16 %v676, %v675
    %v910 = vpack.c.b16 %v678, %v677
    %v911 = vpack.c.b16 %v680, %v679
    %v912 = vpack.c.b16 %v682, %v681
    %v913 = vpack.c.b16 %v684, %v683
    %v914 = vpack.c.b16 %v686, %v685
    %v915 = vpack.c.b16 %v688, %v687
    %v916 = vpack.c.b16 %v690, %v689
    %v917 = vpack.c.b16 %v692, %v691
    %v918 = vpack.c.b16 %v694, %v693
    %v919 = vpack.c.b16 %v696, %v695
    %v920 = vpack.c.b16 %v698, %v697
    %v921 = vpack.c.b16 %v700, %v699
    %v922 = vpack.c.b16 %v702, %v701
    %v923 = vpack.c.b16 %v704, %v703
    %v924 = vpack.c.b16 %v706, %v705
    %v925 = vpack.c.b16 %v708, %v707
    %v926 = vpack.c.b16 %v710, %v709
    %v927 = vpack.c.b16 %v712, %v711
    %v928 = vpack.c.b16 %v714, %v713
    %v929 = vpack.c.b16 %v716, %v715
    %v930 = vpack.c.b16 %v718, %v717
    %v931 = vpack.c.b16 %v720, %v719
    %v932 = vpack.c.b16 %v722, %v721
    %v933 = vpack.c.b16 %v724, %v723
    %v934 = vpack.c.b16 %v726, %v725
    %v935 = vpack.c.b16 %v728, %v727
    %v936 = vpack.c.b16 %v730, %v729
    %v937 = vpack.c.b16 %v732, %v731
    %v938 = vpack.c.b16 %v734, %v733
    %v939 = vpack.c.b16 %v736, %v735
    %v940 = vpack.c.b16 %v738, %v737
    %v941 = vpack.c.b16 %v740, %v739
    %v942 = vpack.c.b16 %v742, %v741
    %v943 = vpack.c.b16 %v744, %v743
    %v944 = vpack.c.b16 %v746, %v745
    %v945 = vpack.c.b16 %v748, %v747
    %v946 = vpack.c.b16 %v750, %v749
    %v947 = vpack.c.b16 %v752, %v751
    %v948 = vpack.c.b16 %v754, %v753
    %v949 = vpack.c.b16 %v756, %v755
    %v950 = vpack.c.b16 %v758, %v757
    %v951 = vpack.c.b16 %v760, %v759
    %v952 = vpack.c.b16 %v762, %v761
    %v953 = vpack.c.b16 %v764, %v763
    %v954 = vpack.c.b16 %v766, %v765
    %v955 = vpack.c.b16 %v768, %v767
    %v956 = vpack.c.b16 %v770, %v769
    %v957 = vpack.c.b16 %v772, %v771
    %v958 = vpack.c.b16 %v774, %v773
    %v959 = vpack.c.b16 %v776, %v775
    %v960 = vpack.c.b16 %v778, %v777
    %v961 = vpack.c.b16 %v780, %v779
    %v962 = vpack.c.b16 %v782, %v781
    %v963 = vpack.c.b16 %v784, %v783
    %v964 = vpack.c.b16 %v786, %v785
    %v965 = vpack.c.b16 %v788, %v787
    %v966 = vpack.c.b16 %v790, %v789
    %v967 = vpack.c.b16 %v792, %v791
    %v968 = vpack.c.b16 %v794, %v793
    %v969 = vpack.c.b16 %v796, %v795
    %v970 = vpack.c.b16 %v798, %v797
    %v971 = vpack.c.b16 %v800, %v799
    %v972 = vpack.c.b16 %v802, %v801
    %v973 = vpack.c.b16 %v804, %v803
    %v974 = vpack.c.b16 %v806, %v805
    %v975 = vpack.c.b16 %v808, %v807
    %v976 = vpack.c.b16 %v810, %v809
    %v977 = vpack.c.b16 %v812, %v811
    %v978 = vpack.c.b16 %v814, %v813
    %v979 = vpack.c.b16 %v816, %v815
    %v980 = vpack.c.b16 %v818, %v817
    %v981 = vpack.c.b16 %v820, %v819
    %v982 = vpack.c.b16 %v822, %v821
    %v983 = vpack.c.b16 %v824, %v823
    %v984 = vpack.c.b16 %v826, %v825
    %v985 = vpack.c.b16 %v828, %v827
    %v986 = vpack.c.b16 %v830, %v829
    %v987 = vpack.c.b16 %v832, %v831
    %v988 = vpack.c.b16 %v834, %v833
    %v989 = vpack.c.b16 %v836, %v835
    %v990 = vpack.c.b16 %v838, %v837
    %v991 = vpack.c.b16 %v840, %v839
    %v992 = vpack.c.b16 %v842, %v841
    %v993 = vpack.c.b16 %v844, %v843
    %v994 = vpack.c.b16 %v846, %v845
    %v995 = vpack.c.b16 %v848, %v847
    %v996 = vpack.c.b16 %v850, %v849
    %v997 = vpack.c.b16 %v852, %v851
    %v998 = vpack.c.b16 %v854, %v853
    %v999 = vpack.c.b16 %v856, %v855
    %v1000 = vpack.c.b16 %v858, %v857
    %v1001 = vpack.c.b16 %v860, %v859
    %v1002 = vpack.c.b16 %v862, %v861
    %v1003 = vpack.c.b16 %v864, %v863
    %v1004 = vpack.c.b16 %v866, %v865
    %v1005 = vpack.c.b16 %v868, %v867
    %v1006 = vpack.c.b16 %v870, %v869
    %v1007 = vpack.c.b16 %v872, %v871
    %v1008 = vpack.c.b16 %v874, %v873
    %v1009 = vpack.c.b16 %v876, %v875
    %v1010 = vpack.c.b16 %v878, %v877
    %v1011 = vpack.c.b16 %v880, %v879
    %v1012 = vpack.c.b16 %v882, %v881
    %v1013 = vpack.c.b16 %v884, %v883
    %v1014 = vpack.c.b16 %v886, %v885
    %1143 = vmatprep.subr.bf16.mxu0 0
    %1144 = vmatpush1.bf16.msra.mxu0 %v894
    %1145 = vmatprep.subr.bf16.mxu0 0
    %1146 = vmatpush1.bf16.msra.mxu0 %v893
    %1147 = vmatprep.subr.bf16.mxu0 0
    %1148 = vmatpush1.bf16.msra.mxu0 %v892
    %1149 = vmatprep.subr.bf16.mxu0 0
    %1150 = vmatpush1.bf16.msra.mxu0 %v891
    %1151 = vmatprep.subr.bf16.mxu0 0
    %1152 = vmatpush1.bf16.msra.mxu0 %v890
    %1153 = vmatprep.subr.bf16.mxu0 0
    %1154 = vmatpush1.bf16.msra.mxu0 %v889
    %1155 = vmatprep.subr.bf16.mxu0 0
    %1156 = vmatpush1.bf16.msra.mxu0 %v888
    %1157 = vmatprep.subr.bf16.mxu0 0
    %1158 = vmatpush1.bf16.msra.mxu0 %v887
    %1159 = vmatprep.subr.bf16.mxu0 0
    %1160 = vmatpush2.bf16.msra.mxu0 %v902
    %1161 = vmatprep.subr.bf16.mxu0 0
    %1162 = vmatpush2.bf16.msra.mxu0 %v901
    %1163 = vmatprep.subr.bf16.mxu0 0
    %1164 = vmatpush2.bf16.msra.mxu0 %v900
    %1165 = vmatprep.subr.bf16.mxu0 0
    %1166 = vmatpush2.bf16.msra.mxu0 %v899
    %1167 = vmatprep.subr.bf16.mxu0 0
    %1168 = vmatpush2.bf16.msra.mxu0 %v898
    %1169 = vmatprep.subr.bf16.mxu0 0
    %1170 = vmatpush2.bf16.msra.mxu0 %v897
    %1171 = vmatprep.subr.bf16.mxu0 0
    %1172 = vmatpush2.bf16.msra.mxu0 %v896
    %1173 = vmatprep.subr.bf16.mxu0 0
    %1174 = vmatpush2.bf16.msra.mxu0 %v895
    %1175 = vmatprep.mubr.bf16.mxu0 %v97
    %1176 = vmatmul.mubr.bf16.gmra.mxu0 %v96
    %v1177 = vpop.f32.mrf.mxu0
    %v1178 = vadd.f32 %v373, %v1177
    %v1179 = vpop.f32.mrf.mxu0
    %v1180 = vpop.f32.mrf.mxu0
    %v1181 = vadd.f32 %v373, %v1180
    %v1182 = vpop.f32.mrf.mxu0
    %1183 = vdwg.mxu0
    %1184 = vmatprep.subr.bf16.mxu0 0
    %1185 = vmatpush1.bf16.msra.mxu0 %v910
    %1186 = vmatprep.subr.bf16.mxu0 0
    %1187 = vmatpush1.bf16.msra.mxu0 %v909
    %1188 = vmatprep.subr.bf16.mxu0 0
    %1189 = vmatpush1.bf16.msra.mxu0 %v908
    %1190 = vmatprep.subr.bf16.mxu0 0
    %1191 = vmatpush1.bf16.msra.mxu0 %v907
    %1192 = vmatprep.subr.bf16.mxu0 0
    %1193 = vmatpush1.bf16.msra.mxu0 %v906
    %1194 = vmatprep.subr.bf16.mxu0 0
    %1195 = vmatpush1.bf16.msra.mxu0 %v905
    %1196 = vmatprep.subr.bf16.mxu0 0
    %1197 = vmatpush1.bf16.msra.mxu0 %v904
    %1198 = vmatprep.subr.bf16.mxu0 0
    %1199 = vmatpush1.bf16.msra.mxu0 %v903
    %1200 = vmatprep.subr.bf16.mxu0 0
    %1201 = vmatpush2.bf16.msra.mxu0 %v918
    %1202 = vmatprep.subr.bf16.mxu0 0
    %1203 = vmatpush2.bf16.msra.mxu0 %v917
    %1204 = vmatprep.subr.bf16.mxu0 0
    %1205 = vmatpush2.bf16.msra.mxu0 %v916
    %1206 = vmatprep.subr.bf16.mxu0 0
    %1207 = vmatpush2.bf16.msra.mxu0 %v915
    %1208 = vmatprep.subr.bf16.mxu0 0
    %1209 = vmatpush2.bf16.msra.mxu0 %v914
    %1210 = vmatprep.subr.bf16.mxu0 0
    %1211 = vmatpush2.bf16.msra.mxu0 %v913
    %1212 = vmatprep.subr.bf16.mxu0 0
    %1213 = vmatpush2.bf16.msra.mxu0 %v912
    %1214 = vmatprep.subr.bf16.mxu0 0
    %1215 = vmatpush2.bf16.msra.mxu0 %v911
    %1216 = vmatprep.mubr.bf16.mxu0 %v99
    %1217 = vmatmul.mubr.bf16.gmra.mxu0 %v98
    %v1218 = vpop.f32.mrf.mxu0
    %v1219 = vadd.f32 %v1178, %v1218
    %v1220 = vpop.f32.mrf.mxu0
    %v1221 = vpop.f32.mrf.mxu0
    %v1222 = vadd.f32 %v1181, %v1221
    %v1223 = vpop.f32.mrf.mxu0
    %1224 = vdwg.mxu0
    %1225 = vmatprep.subr.bf16.mxu0 0
    %1226 = vmatpush1.bf16.msra.mxu0 %v926
    %1227 = vmatprep.subr.bf16.mxu0 0
    %1228 = vmatpush1.bf16.msra.mxu0 %v925
    %1229 = vmatprep.subr.bf16.mxu0 0
    %1230 = vmatpush1.bf16.msra.mxu0 %v924
    %1231 = vmatprep.subr.bf16.mxu0 0
    %1232 = vmatpush1.bf16.msra.mxu0 %v923
    %1233 = vmatprep.subr.bf16.mxu0 0
    %1234 = vmatpush1.bf16.msra.mxu0 %v922
    %1235 = vmatprep.subr.bf16.mxu0 0
    %1236 = vmatpush1.bf16.msra.mxu0 %v921
    %1237 = vmatprep.subr.bf16.mxu0 0
    %1238 = vmatpush1.bf16.msra.mxu0 %v920
    %1239 = vmatprep.subr.bf16.mxu0 0
    %1240 = vmatpush1.bf16.msra.mxu0 %v919
    %1241 = vmatprep.subr.bf16.mxu0 0
    %1242 = vmatpush2.bf16.msra.mxu0 %v934
    %1243 = vmatprep.subr.bf16.mxu0 0
    %1244 = vmatpush2.bf16.msra.mxu0 %v933
    %1245 = vmatprep.subr.bf16.mxu0 0
    %1246 = vmatpush2.bf16.msra.mxu0 %v932
    %1247 = vmatprep.subr.bf16.mxu0 0
    %1248 = vmatpush2.bf16.msra.mxu0 %v931
    %1249 = vmatprep.subr.bf16.mxu0 0
    %1250 = vmatpush2.bf16.msra.mxu0 %v930
    %1251 = vmatprep.subr.bf16.mxu0 0
    %1252 = vmatpush2.bf16.msra.mxu0 %v929
    %1253 = vmatprep.subr.bf16.mxu0 0
    %1254 = vmatpush2.bf16.msra.mxu0 %v928
    %1255 = vmatprep.subr.bf16.mxu0 0
    %1256 = vmatpush2.bf16.msra.mxu0 %v927
    %1257 = vmatprep.mubr.bf16.mxu0 %v101
    %1258 = vmatmul.mubr.bf16.gmra.mxu0 %v100
    %v1259 = vpop.f32.mrf.mxu0
    %v1260 = vadd.f32 %v1219, %v1259
    %v1261 = vpop.f32.mrf.mxu0
    %v1262 = vpop.f32.mrf.mxu0
    %v1263 = vadd.f32 %v1222, %v1262
    %v1264 = vpop.f32.mrf.mxu0
    %1265 = vdwg.mxu0
    %1266 = vmatprep.subr.bf16.mxu0 0
    %1267 = vmatpush1.bf16.msra.mxu0 %v942
    %1268 = vmatprep.subr.bf16.mxu0 0
    %1269 = vmatpush1.bf16.msra.mxu0 %v941
    %1270 = vmatprep.subr.bf16.mxu0 0
    %1271 = vmatpush1.bf16.msra.mxu0 %v940
    %1272 = vmatprep.subr.bf16.mxu0 0
    %1273 = vmatpush1.bf16.msra.mxu0 %v939
    %1274 = vmatprep.subr.bf16.mxu0 0
    %1275 = vmatpush1.bf16.msra.mxu0 %v938
    %1276 = vmatprep.subr.bf16.mxu0 0
    %1277 = vmatpush1.bf16.msra.mxu0 %v937
    %1278 = vmatprep.subr.bf16.mxu0 0
    %1279 = vmatpush1.bf16.msra.mxu0 %v936
    %1280 = vmatprep.subr.bf16.mxu0 0
    %1281 = vmatpush1.bf16.msra.mxu0 %v935
    %1282 = vmatprep.subr.bf16.mxu0 0
    %1283 = vmatpush2.bf16.msra.mxu0 %v950
    %1284 = vmatprep.subr.bf16.mxu0 0
    %1285 = vmatpush2.bf16.msra.mxu0 %v949
    %1286 = vmatprep.subr.bf16.mxu0 0
    %1287 = vmatpush2.bf16.msra.mxu0 %v948
    %1288 = vmatprep.subr.bf16.mxu0 0
    %1289 = vmatpush2.bf16.msra.mxu0 %v947
    %1290 = vmatprep.subr.bf16.mxu0 0
    %1291 = vmatpush2.bf16.msra.mxu0 %v946
    %1292 = vmatprep.subr.bf16.mxu0 0
    %1293 = vmatpush2.bf16.msra.mxu0 %v945
    %1294 = vmatprep.subr.bf16.mxu0 0
    %1295 = vmatpush2.bf16.msra.mxu0 %v944
    %1296 = vmatprep.subr.bf16.mxu0 0
    %1297 = vmatpush2.bf16.msra.mxu0 %v943
    %1298 = vmatprep.mubr.bf16.mxu0 %v103
    %1299 = vmatmul.mubr.bf16.gmra.mxu0 %v102
    %v1300 = vpop.f32.mrf.mxu0
    %v1301 = vadd.f32 %v1260, %v1300
    %v1302 = vpop.f32.mrf.mxu0
    %v1303 = vpop.f32.mrf.mxu0
    %v1304 = vadd.f32 %v1263, %v1303
    %v1305 = vpop.f32.mrf.mxu0
    %1306 = vdwg.mxu0
    %1307 = vmatprep.subr.bf16.mxu0 0
    %1308 = vmatpush1.bf16.msra.mxu0 %v958
    %1309 = vmatprep.subr.bf16.mxu0 0
    %1310 = vmatpush1.bf16.msra.mxu0 %v957
    %1311 = vmatprep.subr.bf16.mxu0 0
    %1312 = vmatpush1.bf16.msra.mxu0 %v956
    %1313 = vmatprep.subr.bf16.mxu0 0
    %1314 = vmatpush1.bf16.msra.mxu0 %v955
    %1315 = vmatprep.subr.bf16.mxu0 0
    %1316 = vmatpush1.bf16.msra.mxu0 %v954
    %1317 = vmatprep.subr.bf16.mxu0 0
    %1318 = vmatpush1.bf16.msra.mxu0 %v953
    %1319 = vmatprep.subr.bf16.mxu0 0
    %1320 = vmatpush1.bf16.msra.mxu0 %v952
    %1321 = vmatprep.subr.bf16.mxu0 0
    %1322 = vmatpush1.bf16.msra.mxu0 %v951
    %1323 = vmatprep.subr.bf16.mxu0 0
    %1324 = vmatpush2.bf16.msra.mxu0 %v966
    %1325 = vmatprep.subr.bf16.mxu0 0
    %1326 = vmatpush2.bf16.msra.mxu0 %v965
    %1327 = vmatprep.subr.bf16.mxu0 0
    %1328 = vmatpush2.bf16.msra.mxu0 %v964
    %1329 = vmatprep.subr.bf16.mxu0 0
    %1330 = vmatpush2.bf16.msra.mxu0 %v963
    %1331 = vmatprep.subr.bf16.mxu0 0
    %1332 = vmatpush2.bf16.msra.mxu0 %v962
    %1333 = vmatprep.subr.bf16.mxu0 0
    %1334 = vmatpush2.bf16.msra.mxu0 %v961
    %1335 = vmatprep.subr.bf16.mxu0 0
    %1336 = vmatpush2.bf16.msra.mxu0 %v960
    %1337 = vmatprep.subr.bf16.mxu0 0
    %1338 = vmatpush2.bf16.msra.mxu0 %v959
    %1339 = vmatprep.mubr.bf16.mxu0 %v105
    %1340 = vmatmul.mubr.bf16.gmra.mxu0 %v104
    %v1341 = vpop.f32.mrf.mxu0
    %v1342 = vadd.f32 %v1301, %v1341
    %v1343 = vpop.f32.mrf.mxu0
    %v1344 = vpop.f32.mrf.mxu0
    %v1345 = vadd.f32 %v1304, %v1344
    %v1346 = vpop.f32.mrf.mxu0
    %1347 = vdwg.mxu0
    %1348 = vmatprep.subr.bf16.mxu0 0
    %1349 = vmatpush1.bf16.msra.mxu0 %v974
    %1350 = vmatprep.subr.bf16.mxu0 0
    %1351 = vmatpush1.bf16.msra.mxu0 %v973
    %1352 = vmatprep.subr.bf16.mxu0 0
    %1353 = vmatpush1.bf16.msra.mxu0 %v972
    %1354 = vmatprep.subr.bf16.mxu0 0
    %1355 = vmatpush1.bf16.msra.mxu0 %v971
    %1356 = vmatprep.subr.bf16.mxu0 0
    %1357 = vmatpush1.bf16.msra.mxu0 %v970
    %1358 = vmatprep.subr.bf16.mxu0 0
    %1359 = vmatpush1.bf16.msra.mxu0 %v969
    %1360 = vmatprep.subr.bf16.mxu0 0
    %1361 = vmatpush1.bf16.msra.mxu0 %v968
    %1362 = vmatprep.subr.bf16.mxu0 0
    %1363 = vmatpush1.bf16.msra.mxu0 %v967
    %1364 = vmatprep.subr.bf16.mxu0 0
    %1365 = vmatpush2.bf16.msra.mxu0 %v982
    %1366 = vmatprep.subr.bf16.mxu0 0
    %1367 = vmatpush2.bf16.msra.mxu0 %v981
    %1368 = vmatprep.subr.bf16.mxu0 0
    %1369 = vmatpush2.bf16.msra.mxu0 %v980
    %1370 = vmatprep.subr.bf16.mxu0 0
    %1371 = vmatpush2.bf16.msra.mxu0 %v979
    %1372 = vmatprep.subr.bf16.mxu0 0
    %1373 = vmatpush2.bf16.msra.mxu0 %v978
    %1374 = vmatprep.subr.bf16.mxu0 0
    %1375 = vmatpush2.bf16.msra.mxu0 %v977
    %1376 = vmatprep.subr.bf16.mxu0 0
    %1377 = vmatpush2.bf16.msra.mxu0 %v976
    %1378 = vmatprep.subr.bf16.mxu0 0
    %1379 = vmatpush2.bf16.msra.mxu0 %v975
    %1380 = vmatprep.mubr.bf16.mxu0 %v107
    %1381 = vmatmul.mubr.bf16.gmra.mxu0 %v106
    %v1382 = vpop.f32.mrf.mxu0
    %v1383 = vadd.f32 %v1342, %v1382
    %v1384 = vpop.f32.mrf.mxu0
    %v1385 = vpop.f32.mrf.mxu0
    %v1386 = vadd.f32 %v1345, %v1385
    %v1387 = vpop.f32.mrf.mxu0
    %1388 = vdwg.mxu0
    %1389 = vmatprep.subr.bf16.mxu0 0
    %1390 = vmatpush1.bf16.msra.mxu0 %v990
    %1391 = vmatprep.subr.bf16.mxu0 0
    %1392 = vmatpush1.bf16.msra.mxu0 %v989
    %1393 = vmatprep.subr.bf16.mxu0 0
    %1394 = vmatpush1.bf16.msra.mxu0 %v988
    %1395 = vmatprep.subr.bf16.mxu0 0
    %1396 = vmatpush1.bf16.msra.mxu0 %v987
    %1397 = vmatprep.subr.bf16.mxu0 0
    %1398 = vmatpush1.bf16.msra.mxu0 %v986
    %1399 = vmatprep.subr.bf16.mxu0 0
    %1400 = vmatpush1.bf16.msra.mxu0 %v985
    %1401 = vmatprep.subr.bf16.mxu0 0
    %1402 = vmatpush1.bf16.msra.mxu0 %v984
    %1403 = vmatprep.subr.bf16.mxu0 0
    %1404 = vmatpush1.bf16.msra.mxu0 %v983
    %1405 = vmatprep.subr.bf16.mxu0 0
    %1406 = vmatpush2.bf16.msra.mxu0 %v998
    %1407 = vmatprep.subr.bf16.mxu0 0
    %1408 = vmatpush2.bf16.msra.mxu0 %v997
    %1409 = vmatprep.subr.bf16.mxu0 0
    %1410 = vmatpush2.bf16.msra.mxu0 %v996
    %1411 = vmatprep.subr.bf16.mxu0 0
    %1412 = vmatpush2.bf16.msra.mxu0 %v995
    %1413 = vmatprep.subr.bf16.mxu0 0
    %1414 = vmatpush2.bf16.msra.mxu0 %v994
    %1415 = vmatprep.subr.bf16.mxu0 0
    %1416 = vmatpush2.bf16.msra.mxu0 %v993
    %1417 = vmatprep.subr.bf16.mxu0 0
    %1418 = vmatpush2.bf16.msra.mxu0 %v992
    %1419 = vmatprep.subr.bf16.mxu0 0
    %1420 = vmatpush2.bf16.msra.mxu0 %v991
    %1421 = vmatprep.mubr.bf16.mxu0 %v109
    %1422 = vmatmul.mubr.bf16.gmra.mxu0 %v108
    %v1423 = vpop.f32.mrf.mxu0
    %v1424 = vadd.f32 %v1383, %v1423
    %v1425 = vpop.f32.mrf.mxu0
    %v1426 = vpop.f32.mrf.mxu0
    %v1427 = vadd.f32 %v1386, %v1426
    %v1428 = vpop.f32.mrf.mxu0
    %1429 = vdwg.mxu0
    %1430 = vmatprep.subr.bf16.mxu0 0
    %1431 = vmatpush1.bf16.msra.mxu0 %v1006
    %1432 = vmatprep.subr.bf16.mxu0 0
    %1433 = vmatpush1.bf16.msra.mxu0 %v1005
    %1434 = vmatprep.subr.bf16.mxu0 0
    %1435 = vmatpush1.bf16.msra.mxu0 %v1004
    %1436 = vmatprep.subr.bf16.mxu0 0
    %1437 = vmatpush1.bf16.msra.mxu0 %v1003
    %1438 = vmatprep.subr.bf16.mxu0 0
    %1439 = vmatpush1.bf16.msra.mxu0 %v1002
    %1440 = vmatprep.subr.bf16.mxu0 0
    %1441 = vmatpush1.bf16.msra.mxu0 %v1001
    %1442 = vmatprep.subr.bf16.mxu0 0
    %1443 = vmatpush1.bf16.msra.mxu0 %v1000
    %1444 = vmatprep.subr.bf16.mxu0 0
    %1445 = vmatpush1.bf16.msra.mxu0 %v999
    %1446 = vmatprep.subr.bf16.mxu0 0
    %1447 = vmatpush2.bf16.msra.mxu0 %v1014
    %1448 = vmatprep.subr.bf16.mxu0 0
    %1449 = vmatpush2.bf16.msra.mxu0 %v1013
    %1450 = vmatprep.subr.bf16.mxu0 0
    %1451 = vmatpush2.bf16.msra.mxu0 %v1012
    %1452 = vmatprep.subr.bf16.mxu0 0
    %1453 = vmatpush2.bf16.msra.mxu0 %v1011
    %1454 = vmatprep.subr.bf16.mxu0 0
    %1455 = vmatpush2.bf16.msra.mxu0 %v1010
    %1456 = vmatprep.subr.bf16.mxu0 0
    %1457 = vmatpush2.bf16.msra.mxu0 %v1009
    %1458 = vmatprep.subr.bf16.mxu0 0
    %1459 = vmatpush2.bf16.msra.mxu0 %v1008
    %1460 = vmatprep.subr.bf16.mxu0 0
    %1461 = vmatpush2.bf16.msra.mxu0 %v1007
    %1462 = vmatprep.mubr.bf16.mxu0 %v111
    %1463 = vmatmul.mubr.bf16.gmra.mxu0 %v110
    %v1464 = vpop.f32.mrf.mxu0
    %v1465 = vadd.f32 %v1424, %v1464
    %v1466 = vpop.f32.mrf.mxu0
    %v1467 = vpop.f32.mrf.mxu0
    %v1468 = vadd.f32 %v1427, %v1467
    %v1469 = vpop.f32.mrf.mxu0
    %1470 = vdwg.mxu0
    %v1471 = vmax.f32 %v1465, 0.0
    %v1472 = vmax.f32 %v1468, 0.0
    %v1473 = vpack.c.bf16 %v1472, %v1471
    %v1474 = vld [vmem:[%s3] sm:$0xf]
    %v1475 = vld [vmem:[%s3 + $0x4] sm:$0xf]
    %v1476 = vld [vmem:[%s3 + $0x8] sm:$0xf]
    %v1477 = vld [vmem:[%s3 + $0xc] sm:$0xf]
    %v1478 = vld [vmem:[%s3 + $0x10] sm:$0xf]
    %v1479 = vld [vmem:[%s3 + $0x14] sm:$0xf]
    %v1480 = vld [vmem:[%s3 + $0x18] sm:$0xf]
    %v1481 = vld [vmem:[%s3 + $0x1c] sm:$0xf]
    %v1482 = vld [vmem:[%s3 + $0x20] sm:$0xf]
    %v1483 = vld [vmem:[%s3 + $0x24] sm:$0xf]
    %v1484 = vld [vmem:[%s3 + $0x28] sm:$0xf]
    %v1485 = vld [vmem:[%s3 + $0x2c] sm:$0xf]
    %v1486 = vld [vmem:[%s3 + $0x30] sm:$0xf]
    %v1487 = vld [vmem:[%s3 + $0x34] sm:$0xf]
    %v1488 = vld [vmem:[%s3 + $0x38] sm:$0xf]
    %v1489 = vld [vmem:[%s3 + $0x3c] sm:$0xf]
    %v1490 = vld [vmem:[%s4] sm:$0x1]
    %v1492 = vlaneseq
    %v1493 = vshrl.u32 %v1492, 7
    %v1494 = vsub.s32 0, %v1493
    %v1495 = vrot.slane %v1490, %v1494
    %v1513 = vunpack.c.l.b16 %v1474
    %v1514 = vunpack.c.l.b16 %v1475
    %v1515 = vunpack.c.l.b16 %v1476
    %v1516 = vunpack.c.l.b16 %v1477
    %v1517 = vunpack.c.l.b16 %v1478
    %v1518 = vunpack.c.l.b16 %v1479
    %v1519 = vunpack.c.l.b16 %v1480
    %v1520 = vunpack.c.l.b16 %v1481
    %v1521 = vunpack.c.l.b16 %v1482
    %v1522 = vunpack.c.l.b16 %v1483
    %v1523 = vunpack.c.l.b16 %v1484
    %v1524 = vunpack.c.l.b16 %v1485
    %v1525 = vunpack.c.l.b16 %v1486
    %v1526 = vunpack.c.l.b16 %v1487
    %v1527 = vunpack.c.l.b16 %v1488
    %v1528 = vunpack.c.l.b16 %v1489
    %v1529 = vpack.c.b16 %v1514, %v1513
    %v1530 = vpack.c.b16 %v1516, %v1515
    %v1531 = vpack.c.b16 %v1518, %v1517
    %v1532 = vpack.c.b16 %v1520, %v1519
    %v1533 = vpack.c.b16 %v1522, %v1521
    %v1534 = vpack.c.b16 %v1524, %v1523
    %v1535 = vpack.c.b16 %v1526, %v1525
    %v1536 = vpack.c.b16 %v1528, %v1527
    %1545 = vmatprep.subr.bf16.mxu0 0
    %1546 = vmatpush1.bf16.msra.mxu0 %v1536
    %1547 = vmatprep.subr.bf16.mxu0 0
    %1548 = vmatpush1.bf16.msra.mxu0 %v1535
    %1549 = vmatprep.subr.bf16.mxu0 0
    %1550 = vmatpush1.bf16.msra.mxu0 %v1534
    %1551 = vmatprep.subr.bf16.mxu0 0
    %1552 = vmatpush1.bf16.msra.mxu0 %v1533
    %1553 = vmatprep.subr.bf16.mxu0 0
    %1554 = vmatpush1.bf16.msra.mxu0 %v1532
    %1555 = vmatprep.subr.bf16.mxu0 0
    %1556 = vmatpush1.bf16.msra.mxu0 %v1531
    %1557 = vmatprep.subr.bf16.mxu0 0
    %1558 = vmatpush1.bf16.msra.mxu0 %v1530
    %1559 = vmatprep.subr.bf16.mxu0 0
    %1560 = vmatpush1.bf16.msra.mxu0 %v1529
    %1561 = vmatprep.subr.bf16.mxu0 0
    %1562 = vmatpush2.bf16.msra.mxu0 0
    %1563 = vmatprep.subr.bf16.mxu0 0
    %1564 = vmatpush2.bf16.msra.mxu0 0
    %1565 = vmatprep.subr.bf16.mxu0 0
    %1566 = vmatpush2.bf16.msra.mxu0 0
    %1567 = vmatprep.subr.bf16.mxu0 0
    %1568 = vmatpush2.bf16.msra.mxu0 0
    %1569 = vmatprep.subr.bf16.mxu0 0
    %1570 = vmatpush2.bf16.msra.mxu0 0
    %1571 = vmatprep.subr.bf16.mxu0 0
    %1572 = vmatpush2.bf16.msra.mxu0 0
    %1573 = vmatprep.subr.bf16.mxu0 0
    %1574 = vmatpush2.bf16.msra.mxu0 0
    %1575 = vmatprep.subr.bf16.mxu0 0
    %1576 = vmatpush2.bf16.msra.mxu0 0
    %1577 = vmatprep.mubr.bf16.mxu0 0
    %1578 = vmatmul.mubr.bf16.gmra.mxu0 %v1473
    %v1579 = vpop.f32.mrf.mxu0
    %v1580 = vadd.f32 %v1495, %v1579
    %v1581 = vpop.f32.mrf.mxu0
    %v1582 = vpop.f32.mrf.mxu0
    %v1583 = vadd.f32 %v1495, %v1582
    %v1584 = vpop.f32.mrf.mxu0
    %1585 = vdwg.mxu0
    %v1586 = vmax.f32 %v1580, 0.0
    %v1587 = vmax.f32 %v1583, 0.0
    %v1588 = vpack.c.bf16 %v1587, %v1586
    %v1589 = vld [vmem:[%s5] sm:$0xf]
    %v1590 = vld [vmem:[%s5 + $0x4] sm:$0xf]
    %v1591 = vld [vmem:[%s5 + $0x8] sm:$0xf]
    %v1592 = vld [vmem:[%s5 + $0xc] sm:$0xf]
    %v1593 = vld [vmem:[%s5 + $0x10] sm:$0xf]
    %v1594 = vld [vmem:[%s5 + $0x14] sm:$0xf]
    %v1595 = vld [vmem:[%s5 + $0x18] sm:$0xf]
    %v1596 = vld [vmem:[%s5 + $0x1c] sm:$0xf]
    %v1597 = vld [vmem:[%s6] sm:$0x1]
    %v1599 = vlaneseq
    %v1600 = vshrl.u32 %v1599, 7
    %v1601 = vsub.s32 0, %v1600
    %v1602 = vrot.slane %v1597, %v1601
    %v1612 = vunpack.c.l.b16 %v1589
    %v1613 = vunpack.c.l.b16 %v1590
    %v1614 = vunpack.c.l.b16 %v1591
    %v1615 = vunpack.c.l.b16 %v1592
    %v1616 = vunpack.c.l.b16 %v1593
    %v1617 = vunpack.c.l.b16 %v1594
    %v1618 = vunpack.c.l.b16 %v1595
    %v1619 = vunpack.c.l.b16 %v1596
    %v1620 = vpack.c.b16 %v1613, %v1612
    %v1621 = vpack.c.b16 %v1615, %v1614
    %v1622 = vpack.c.b16 %v1617, %v1616
    %v1623 = vpack.c.b16 %v1619, %v1618
    %vm1628 = vcmask 523264
    %v1630 = vsel %vm1628, %v1588, 0
    %1632 = vmatprep.subr.bf16.mxu0 0
    %1633 = vmatpush1.bf16.msra.mxu0 0
    %1634 = vmatprep.subr.bf16.mxu0 0
    %1635 = vmatpush1.bf16.msra.mxu0 0
    %1636 = vmatprep.subr.bf16.mxu0 0
    %1637 = vmatpush1.bf16.msra.mxu0 0
    %1638 = vmatprep.subr.bf16.mxu0 0
    %1639 = vmatpush1.bf16.msra.mxu0 0
    %1640 = vmatprep.subr.bf16.mxu0 0
    %1641 = vmatpush1.bf16.msra.mxu0 %v1623
    %1642 = vmatprep.subr.bf16.mxu0 0
    %1643 = vmatpush1.bf16.msra.mxu0 %v1622
    %1644 = vmatprep.subr.bf16.mxu0 0
    %1645 = vmatpush1.bf16.msra.mxu0 %v1621
    %1646 = vmatprep.subr.bf16.mxu0 0
    %1647 = vmatpush1.bf16.msra.mxu0 %v1620
    %1648 = vmatprep.subr.bf16.mxu0 0
    %1649 = vmatpush2.bf16.msra.mxu0 0
    %1650 = vmatprep.subr.bf16.mxu0 0
    %1651 = vmatpush2.bf16.msra.mxu0 0
    %1652 = vmatprep.subr.bf16.mxu0 0
    %1653 = vmatpush2.bf16.msra.mxu0 0
    %1654 = vmatprep.subr.bf16.mxu0 0
    %1655 = vmatpush2.bf16.msra.mxu0 0
    %1656 = vmatprep.subr.bf16.mxu0 0
    %1657 = vmatpush2.bf16.msra.mxu0 0
    %1658 = vmatprep.subr.bf16.mxu0 0
    %1659 = vmatpush2.bf16.msra.mxu0 0
    %1660 = vmatprep.subr.bf16.mxu0 0
    %1661 = vmatpush2.bf16.msra.mxu0 0
    %1662 = vmatprep.subr.bf16.mxu0 0
    %1663 = vmatpush2.bf16.msra.mxu0 0
    %1664 = vmatprep.mubr.bf16.mxu0 0
    %1665 = vmatmul.mubr.bf16.gmra.mxu0 %v1630
    %v1666 = vpop.f32.mrf.mxu0
    %v1667 = vadd.f32 %v1602, %v1666
    %v1668 = vpop.f32.mrf.mxu0
    %v1669 = vpop.f32.mrf.mxu0
    %v1670 = vadd.f32 %v1602, %v1669
    %v1671 = vpop.f32.mrf.mxu0
    %1672 = vdwg.mxu0
    %v1673 = vmax.f32 %v1667, 0.0
    %v1674 = vmax.f32 %v1670, 0.0
    %v1675 = vld [vmem:[%s7] sm:$0x1]
    %v1677 = vlaneseq
    %v1678 = vshrl.u32 %v1677, 7
    %v1679 = vsub.s32 0, %v1678
    %v1680 = vrot.slane %v1675, %v1679
    %v1682 = vmul.f32 %v1673, %v1680
    %v1683 = vmul.f32 %v1674, %v1680
    %vm1684 = vcmask 261120
    %v1685 = vsel %vm1684, %v1682, 0.0
    %1686 = vadd.xlane.f32.xlu0 %v1685
    %v1687 = vpop.xlane.xlu0 %1686
    %v1688 = vsel %vm1684, %v1683, 0.0
    %1689 = vadd.xlane.f32.xlu0 %v1688
    %v1690 = vpop.xlane.xlu0 %1689
    %v1691 = vld [vmem:[#allocation2] sm:$0x1]
    %v1693 = vlaneseq
    %v1694 = vshrl.u32 %v1693, 7
    %v1695 = vsub.s32 0, %v1694
    %v1696 = vrot.slane %v1691, %v1695
    %v1698 = vadd.f32 %v1687, %v1696
    %v1699 = vadd.f32 %v1690, %v1696
    %v1700 = vsub.f32 0.0, %v1698
    %v1701 = vsub.f32 0.0, %v1699
    %v1702 = vmul.f32 %v1700, 1.442695
    %v1703 = vpow.pop %v1702
    %v1704 = vmul.f32 %v1701, 1.442695
    %v1705 = vpow.pop %v1704
    %v1706 = vadd.f32 %v1703, 1.0
    %v1707 = vadd.f32 %v1705, 1.0
    %v1708 = vrcp.pop %v1706
    %v1709 = vrcp.pop %v1707
    %1712 = vset.pattern.permute.xlu0 0
    %1713 = vperm.xlu0 %1712, %v1708
    %v1714 = vpop.permute.xlu0 %1713
    %1715 = vset.pattern.permute.xlu0 0
    %1716 = vperm.xlu0 %1715, %v1709
    %v1717 = vpop.permute.xlu0 %1716
    %v1718 = vlaneseq
    %v1719 = vand.u32 %v1718, 127
    %v1720 = vlaneseq
    %v1721 = vshrl.u32 %v1720, 7
    %v1722 = vsub.s32 %v1719, %v1721
    %v1723 = vrot.slane %v1714, %v1722
    %v1724 = vadd.s32 %v1719, 4294967288
    %v1725 = vlaneseq
    %v1726 = vshrl.u32 %v1725, 7
    %v1727 = vsub.s32 %v1724, %v1726
    %v1728 = vrot.slane %v1717, %v1727
    %vm1729 = vcmask 130112
    %v1730 = vsel %vm1729, %v1728, %v1723
    %vm1732 = vcmask 122880
    %1733 = vst.msk [vmem:[#allocation8] sm:$0x1] %vm1732, %v1730
    // Predicated region
    $region46: #{tpu_custom_call.1} parent=1 // pred_check
      _
    $region47: #{tpu_custom_call.1} parent=1 // pred_check_branch
      %1735 = sbr.rel (0) target = $region49
    $region48: #{tpu_custom_call.1} parent=1 // pred_region
      %s1737 = ssub.s32 16, 16
      %1738 = vsyncadd [#allocation5], %s1737
      %s1740 = sshll.u32 [#allocation8], 4
      %s1741 = int_to_ptr.vmem [resolvable:$true] %s1740
      %1743 = dma.vmem_to_hbm [thread:$0]  %s1741, 16, %s9, [#allocation5]
    $region49: #{tpu_custom_call.1} parent=1 // pred_fallthru
      _
    // Predicated region
    $region50: #{tpu_custom_call.1} parent=1 // pred_check
      _
    $region51: #{tpu_custom_call.1} parent=1 // pred_check_branch
      %1745 = sbr.rel (0) target = $region53
    $region52: #{tpu_custom_call.1} parent=1 // pred_region
      %1746 = dma.done [#allocation5], 16
    $region53: #{tpu_custom_call.1} parent=1 // pred_fallthru
      _
    %1747 = vsyncpa [#allocation4], 1
    %1748 = vsyncpa [#allocation7], 1
    %1749 = vsyncpa [#allocation5], 1

</llo_original>
